<compile_context>
chip_gen: v7x
topology: tpu7x:2x2x1
jax: 0.10.0
libtpu: 0.0.40
codegen_flags: <defaults>
</compile_context>

<pallas_src>
import functools

import jax
import jax.numpy as jnp
from jax.experimental import pallas as pl
from jax.experimental.pallas import tpu as pltpu

CPAD = 128       # padded channel / conv-contraction width
FC1_N = 512
FC2_NPAD = 384   # 360 -> 384 (3 * 128)
FC3_NPAD = 256   # 250 -> 256 (2 * 128)


def _round_up(v, m):
    return ((v + m - 1) // m) * m


# --------------------------------------------------------------------------
# Fused whole-network Pallas kernel (one grid step == one batch block of bb)
# --------------------------------------------------------------------------
def _fused_cnn_kernel(p_ref, w1_ref, b1_ref, w2_ref, b2_ref,
                      wf1_ref, bf1_ref, wf2_ref, bf2_ref, wf3_ref, bf3_ref,
                      out_ref, *, bb, ow1, oh2, ow2):
    f32, bf16 = jnp.float32, jnp.bfloat16
    s2 = oh2 * ow2

    # ---- conv1 + ReLU -------------------------------------------------
    # Rows are ordered (spatial-major, batch-minor): row = s1 * bb + b.
    p = p_ref[0]                                           # (s1*bb, 128) bf16
    a1 = jnp.dot(p, w1_ref[...], preferred_element_type=f32)
    a1 = jnp.maximum(a1 + b1_ref[...], 0.0)                # (s1*bb, 128) f32
    a1 = a1.astype(bf16)                                   # cast once (hoisted)

    # ---- conv2 + ReLU: in-kernel im2col, single K = 9*128 matmul -------
    # Tap (ki, kj) needs rows for spatial (ki+i2, kj+j2); for fixed i2 the
    # j2 range is a contiguous, bb-aligned row block of a1.
    taps = []
    for ki in range(3):
        for kj in range(3):
            rows = []
            for i2 in range(oh2):
                r0 = ((ki + i2) * ow1 + kj) * bb
                rows.append(a1[r0:r0 + ow2 * bb, :])       # (ow2*bb, 128)
            taps.append(jnp.concatenate(rows, axis=0))     # (s2*bb, 128)
    x2 = jnp.concatenate(taps, axis=-1)                    # (s2*bb, 1152) bf16
    a2 = jnp.dot(x2, w2_ref[...], preferred_element_type=f32)
    a2 = jnp.maximum(a2 + b2_ref[...], 0.0)                # (s2*bb, 128) f32
    a2 = a2.astype(bf16)                                   # cast once (hoisted)

    # ---- fc1 + ReLU: single K = s2*128 matmul ---------------------------
    # Gather each sample's features along lanes: lane index = s*128 + c,
    # matching the pre-flattened wf1 row order.
    xf = jnp.concatenate([a2[s * bb:(s + 1) * bb, :] for s in range(s2)],
                         axis=-1)                          # (bb, s2*128) bf16
    h = jnp.dot(xf, wf1_ref[...], preferred_element_type=f32)
    h = jnp.maximum(h + bf1_ref[...], 0.0)                 # (bb, 512) f32
    # nn.Dropout(0.2): identity at inference (eval mode).

    # ---- fc2 + ReLU -----------------------------------------------------
    h = jnp.dot(h.astype(bf16), wf2_ref[...], preferred_element_type=f32)
    h = jnp.maximum(h + bf2_ref[...], 0.0)                 # (bb, 384) f32

    # ---- fc3 (no activation) --------------------------------------------
    h = jnp.dot(h.astype(bf16), wf3_ref[...], preferred_element_type=f32)
    out_ref[...] = h + bf3_ref[...]                        # (bb, 256) f32


# --------------------------------------------------------------------------
# XLA prologue: conv1 im2col (stride-2 5x5 window gather on the raw input)
# --------------------------------------------------------------------------
def _conv1_patches(x, oh1, ow1, bb, n_pad):
    """(N,1,H,W) f32 -> (n_pad//bb, oh1*ow1*bb, CPAD) bf16, K-padded 25->128,
    rows ordered (spatial-major, batch-minor) inside each block."""
    n = x.shape[0]
    s1 = oh1 * ow1
    xs = x[:, 0]                                           # (N, H, W)
    cols = [xs[:, ki:ki + 2 * (oh1 - 1) + 1:2, kj:kj + 2 * (ow1 - 1) + 1:2]
            for ki in range(5) for kj in range(5)]
    p = jnp.stack(cols, axis=-1).astype(jnp.bfloat16)      # (N, oh1, ow1, 25)
    p = p.reshape(n, s1, 25)
    p = jnp.pad(p, ((0, n_pad - n), (0, 0), (0, CPAD - 25)))
    p = p.reshape(n_pad // bb, bb, s1, CPAD)
    p = jnp.transpose(p, (0, 2, 1, 3))                     # (blocks, s1, bb, C)
    return p.reshape(n_pad // bb, s1 * bb, CPAD)


# --------------------------------------------------------------------------
# Forward pass (single fused pallas_call)
# --------------------------------------------------------------------------
def cnn_forward(prep, x, *, batch_block=128):
    n, _, h_in, w_in = x.shape
    oh1, ow1 = (h_in - 5) // 2 + 1, (w_in - 5) // 2 + 1
    oh2, ow2 = oh1 - 2, ow1 - 2
    s1, s2 = oh1 * ow1, oh2 * ow2

    bb = min(batch_block, _round_up(n, 8))                 # batch block, mult of 8
    n_blocks = pl.cdiv(n, bb)
    n_pad = n_blocks * bb

    patches = _conv1_patches(x, oh1, ow1, bb, n_pad)

    kernel = functools.partial(_fused_cnn_kernel,
                               bb=bb, ow1=ow1, oh2=oh2, ow2=ow2)
    grid_spec = pltpu.PrefetchScalarGridSpec(
        num_scalar_prefetch=0,
        grid=(n_blocks,),
        in_specs=[
            pl.BlockSpec((1, s1 * bb, CPAD), lambda i: (i, 0, 0)),   # patches
            pl.BlockSpec((CPAD, CPAD), lambda i: (0, 0)),            # w1
            pl.BlockSpec((1, CPAD), lambda i: (0, 0)),               # b1
            pl.BlockSpec((9 * CPAD, CPAD), lambda i: (0, 0)),        # w2
            pl.BlockSpec((1, CPAD), lambda i: (0, 0)),               # b2
            pl.BlockSpec((s2 * CPAD, FC1_N), lambda i: (0, 0)),      # wf1
            pl.BlockSpec((1, FC1_N), lambda i: (0, 0)),              # bf1
            pl.BlockSpec((FC1_N, FC2_NPAD), lambda i: (0, 0)),       # wf2
            pl.BlockSpec((1, FC2_NPAD), lambda i: (0, 0)),           # bf2
            pl.BlockSpec((FC2_NPAD, FC3_NPAD), lambda i: (0, 0)),    # wf3
            pl.BlockSpec((1, FC3_NPAD), lambda i: (0, 0)),           # bf3
        ],
        out_specs=pl.BlockSpec((bb, FC3_NPAD), lambda i: (i, 0)),
    )
    out = pl.pallas_call(
        kernel,
        out_shape=jax.ShapeDtypeStruct((n_pad, FC3_NPAD), jnp.float32),
        grid_spec=grid_spec,
        compiler_params=pltpu.CompilerParams(
            dimension_semantics=("parallel",),       # batch-block parallel
            vmem_limit_bytes=40 * 1024 * 1024),      # headroom for bb=128 blocks
    )(patches, prep["w1"], prep["b1"], prep["w2"], prep["b2"],
      prep["wf1"], prep["bf1"], prep["wf2"], prep["bf2"],
      prep["wf3"], prep["bf3"])
    return out[:n, :250]


# --------------------------------------------------------------------------
# Parameters: torch-style init + one-time layout preparation
# --------------------------------------------------------------------------
def conv_out_sizes(width, height):
    size_1 = ((width - 5) // 2 + 1, (height - 5) // 2 + 1)
    size_2 = ((size_1[0] - 3) // 1 + 1, (size_1[1] - 3) // 1 + 1)
    return size_1, size_2


def init_params(width, height, key):
    """PyTorch-default-style init in torch-native shapes/layouts."""
    _, size_2 = conv_out_sizes(width, height)
    fc_input = size_2[0] * size_2[1] * 64

    def uniform(k, shape, fan_in):
        bound = 1.0 / jnp.sqrt(jnp.float32(fan_in))
        return jax.random.uniform(k, shape, jnp.float32, -bound, bound)

    ks = jax.random.split(key, 10)
    return {
        "conv1_w": uniform(ks[0], (32, 1, 5, 5), 1 * 5 * 5),
        "conv1_b": uniform(ks[1], (32,), 1 * 5 * 5),
        "conv2_w": uniform(ks[2], (64, 32, 3, 3), 32 * 3 * 3),
        "conv2_b": uniform(ks[3], (64,), 32 * 3 * 3),
        "fc1_w": uniform(ks[4], (512, fc_input), fc_input),   # torch (out, in)
        "fc1_b": uniform(ks[5], (512,), fc_input),
        "fc2_w": uniform(ks[6], (360, 512), 512),
        "fc2_b": uniform(ks[7], (360,), 512),
        "fc3_w": uniform(ks[8], (250, 360), 360),
        "fc3_b": uniform(ks[9], (250,), 360),
    }


def prepare_params(params, width, height):
    """One-time layout prep: permute / zero-pad / bf16-cast torch-layout
    weights into the lane-dense layouts the fused kernel consumes."""
    _, (oh2, ow2) = conv_out_sizes(width, height)
    nsp = oh2 * ow2
    f32, bf16 = jnp.float32, jnp.bfloat16

    # conv1: (32,1,5,5) -> (K=25, OC=32) padded to (128, 128)
    w1 = params["conv1_w"].reshape(32, 25).T
    w1p = jnp.pad(w1, ((0, CPAD - 25), (0, CPAD - 32))).astype(bf16)
    b1p = jnp.pad(params["conv1_b"], (0, CPAD - 32)).reshape(1, CPAD).astype(f32)

    # conv2: (64,32,3,3) -> (tap=kh*3+kw, IC, OC) padded then flattened to
    # (9*128, 128); row index = tap*128 + ic (matches in-kernel lane concat).
    w2 = jnp.transpose(params["conv2_w"], (2, 3, 1, 0)).reshape(9, 32, 64)
    w2p = jnp.pad(w2, ((0, 0), (0, CPAD - 32), (0, CPAD - 64)))
    w2p = w2p.reshape(9 * CPAD, CPAD).astype(bf16)
    b2p = jnp.pad(params["conv2_b"], (0, CPAD - 64)).reshape(1, CPAD).astype(f32)

    # fc1: (512, 64*oh2*ow2), torch (C,H,W) flatten order ->
    #      (s = h*ow2 + w, c padded to 128, 512) -> flattened (s*128+c, 512).
    wf1 = params["fc1_w"].reshape(FC1_N, 64, oh2, ow2)
    wf1 = jnp.transpose(wf1, (2, 3, 1, 0)).reshape(nsp, 64, FC1_N)
    wf1 = jnp.pad(wf1, ((0, 0), (0, CPAD - 64), (0, 0)))
    wf1p = wf1.reshape(nsp * CPAD, FC1_N).astype(bf16)
    bf1p = params["fc1_b"].reshape(1, FC1_N).astype(f32)

    # fc2: (360, 512) -> (512, 384 padded)
    wf2p = jnp.pad(params["fc2_w"].T, ((0, 0), (0, FC2_NPAD - 360))).astype(bf16)
    bf2p = jnp.pad(params["fc2_b"], (0, FC2_NPAD - 360)).reshape(1, FC2_NPAD).astype(f32)

    # fc3: (250, 360) -> (384 padded K, 256 padded N)
    wf3p = jnp.pad(params["fc3_w"].T,
                   ((0, FC2_NPAD - 360), (0, FC3_NPAD - 250))).astype(bf16)
    bf3p = jnp.pad(params["fc3_b"], (0, FC3_NPAD - 250)).reshape(1, FC3_NPAD).astype(f32)

    return {"w1": w1p, "b1": b1p, "w2": w2p, "b2": b2p,
            "wf1": wf1p, "bf1": bf1p, "wf2": wf2p, "bf2": bf2p,
            "wf3": wf3p, "bf3": bf3p}


# --------------------------------------------------------------------------
# Pure-JAX fp32 reference (PyTorch semantics) for validation
# --------------------------------------------------------------------------
def reference_forward(params, x):
    dn = ("NCHW", "OIHW", "NCHW")
    y = jax.lax.conv_general_dilated(x, params["conv1_w"], (2, 2), "VALID",
                                     dimension_numbers=dn)
    y = jax.nn.relu(y + params["conv1_b"][None, :, None, None])
    y = jax.lax.conv_general_dilated(y, params["conv2_w"], (1, 1), "VALID",
                                     dimension_numbers=dn)
    y = jax.nn.relu(y + params["conv2_b"][None, :, None, None])
    y = y.reshape(y.shape[0], -1)
    y = jax.nn.relu(y @ params["fc1_w"].T + params["fc1_b"])
    y = jax.nn.relu(y @ params["fc2_w"].T + params["fc2_b"])
    return y @ params["fc3_w"].T + params["fc3_b"]


if __name__ == "__main__":
    width, height = 16, 16
    batch = 2

    key = jax.random.PRNGKey(0)
    k_params, k_x = jax.random.split(key)
    params = init_params(width, height, k_params)
    prep = prepare_params(params, width, height)          # one-time layout prep
    x = jax.random.normal(k_x, (batch, 1, width, height), jnp.float32)

    fwd = jax.jit(cnn_forward)
    out = jax.block_until_ready(fwd(prep, x))
    assert out.shape == (batch, 250), out.shape

    # Validate against the fp32 reference (bf16 MXU inputs, fp32 accumulation).
    ref = reference_forward(params, x)
    max_err = float(jnp.max(jnp.abs(out - ref)))
    assert max_err < 3e-2, max_err

    print("KERNEL_OK")
</pallas_src>

<mosaic_0001>
module attributes {stable_mosaic.version = 11 : i64} {
  func.func @_fused_cnn_kernel(%arg0: i32, %arg1: memref<1x288x128xbf16, #tpu.memory_space<vmem>>, %arg2: memref<128x128xbf16, #tpu.memory_space<vmem>>, %arg3: memref<1x128xf32, #tpu.memory_space<vmem>>, %arg4: memref<1152x128xbf16, #tpu.memory_space<vmem>>, %arg5: memref<1x128xf32, #tpu.memory_space<vmem>>, %arg6: memref<2048x512xbf16, #tpu.memory_space<vmem>>, %arg7: memref<1x512xf32, #tpu.memory_space<vmem>>, %arg8: memref<512x384xbf16, #tpu.memory_space<vmem>>, %arg9: memref<1x384xf32, #tpu.memory_space<vmem>>, %arg10: memref<384x256xbf16, #tpu.memory_space<vmem>>, %arg11: memref<1x256xf32, #tpu.memory_space<vmem>>, %arg12: memref<8x256xf32, #tpu.memory_space<vmem>>) attributes {dimension_semantics = [#tpu.dimension_semantics<parallel>], iteration_bounds = array<i64: 1>, scalar_prefetch = 0 : i64, scratch_operands = 0 : i64, tpu.core_type = #tpu.core_type<tc>, window_params = [{transform_indices = @transform_0, window_bounds = array<i64: 1, 288, 128>}, {pipeline_mode = #tpu.pipeline_mode<synchronous>, transform_indices = @transform_1, window_bounds = array<i64: 128, 128>}, {pipeline_mode = #tpu.pipeline_mode<synchronous>, transform_indices = @transform_2, window_bounds = array<i64: 1, 128>}, {pipeline_mode = #tpu.pipeline_mode<synchronous>, transform_indices = @transform_3, window_bounds = array<i64: 1152, 128>}, {pipeline_mode = #tpu.pipeline_mode<synchronous>, transform_indices = @transform_4, window_bounds = array<i64: 1, 128>}, {pipeline_mode = #tpu.pipeline_mode<synchronous>, transform_indices = @transform_5, window_bounds = array<i64: 2048, 512>}, {pipeline_mode = #tpu.pipeline_mode<synchronous>, transform_indices = @transform_6, window_bounds = array<i64: 1, 512>}, {pipeline_mode = #tpu.pipeline_mode<synchronous>, transform_indices = @transform_7, window_bounds = array<i64: 512, 384>}, {pipeline_mode = #tpu.pipeline_mode<synchronous>, transform_indices = @transform_8, window_bounds = array<i64: 1, 384>}, {pipeline_mode = #tpu.pipeline_mode<synchronous>, transform_indices = @transform_9, window_bounds = array<i64: 384, 256>}, {pipeline_mode = #tpu.pipeline_mode<synchronous>, transform_indices = @transform_10, window_bounds = array<i64: 1, 256>}, {transform_indices = @transform_11, window_bounds = array<i64: 8, 256>}]} {
    %c0 = arith.constant 0 : index
    %c0_0 = arith.constant 0 : index
    %c0_1 = arith.constant 0 : index
    %0 = vector.load %arg1[%c0, %c0_0, %c0_1] : memref<1x288x128xbf16, #tpu.memory_space<vmem>>, vector<1x288x128xbf16>
    %1 = vector.shape_cast %0 : vector<1x288x128xbf16> to vector<288x128xbf16>
    %c0_2 = arith.constant 0 : index
    %c0_3 = arith.constant 0 : index
    %2 = vector.load %arg2[%c0_2, %c0_3] : memref<128x128xbf16, #tpu.memory_space<vmem>>, vector<128x128xbf16>
    %cst = arith.constant dense<0.000000e+00> : vector<288x128xf32>
    %3 = tpu.matmul %1, %2, %cst {dimension_numbers = #tpu.dot_dimension_numbers<[1], [0], [0], [1], [0, 0, 1, 1], [], []>} : vector<288x128xbf16>, vector<128x128xbf16>, vector<288x128xf32> -> vector<288x128xf32>
    %c0_4 = arith.constant 0 : index
    %c0_5 = arith.constant 0 : index
    %4 = vector.load %arg3[%c0_4, %c0_5] : memref<1x128xf32, #tpu.memory_space<vmem>>, vector<1x128xf32>
    %5 = vector.broadcast %4 : vector<1x128xf32> to vector<288x128xf32>
    %6 = arith.addf %3, %5 : vector<288x128xf32>
    %cst_6 = arith.constant 0.000000e+00 : f32
    %7 = vector.broadcast %cst_6 : f32 to vector<288x128xf32>
    %8 = arith.maximumf %6, %7 : vector<288x128xf32>
    %9 = arith.truncf %8 : vector<288x128xf32> to vector<288x128xbf16>
    %10 = vector.extract_strided_slice %9 {offsets = [0, 0], sizes = [32, 128], strides = [1, 1]} : vector<288x128xbf16> to vector<32x128xbf16>
    %11 = vector.extract_strided_slice %9 {offsets = [48, 0], sizes = [32, 128], strides = [1, 1]} : vector<288x128xbf16> to vector<32x128xbf16>
    %12 = vector.extract_strided_slice %9 {offsets = [96, 0], sizes = [32, 128], strides = [1, 1]} : vector<288x128xbf16> to vector<32x128xbf16>
    %13 = vector.extract_strided_slice %9 {offsets = [144, 0], sizes = [32, 128], strides = [1, 1]} : vector<288x128xbf16> to vector<32x128xbf16>
    %14 = tpu.concatenate %10, %11, %12, %13 in 0 : vector<32x128xbf16>, vector<32x128xbf16>, vector<32x128xbf16>, vector<32x128xbf16> -> vector<128x128xbf16>
    %15 = vector.extract_strided_slice %9 {offsets = [8, 0], sizes = [32, 128], strides = [1, 1]} : vector<288x128xbf16> to vector<32x128xbf16>
    %16 = vector.extract_strided_slice %9 {offsets = [56, 0], sizes = [32, 128], strides = [1, 1]} : vector<288x128xbf16> to vector<32x128xbf16>
    %17 = vector.extract_strided_slice %9 {offsets = [104, 0], sizes = [32, 128], strides = [1, 1]} : vector<288x128xbf16> to vector<32x128xbf16>
    %18 = vector.extract_strided_slice %9 {offsets = [152, 0], sizes = [32, 128], strides = [1, 1]} : vector<288x128xbf16> to vector<32x128xbf16>
    %19 = tpu.concatenate %15, %16, %17, %18 in 0 : vector<32x128xbf16>, vector<32x128xbf16>, vector<32x128xbf16>, vector<32x128xbf16> -> vector<128x128xbf16>
    %20 = vector.extract_strided_slice %9 {offsets = [16, 0], sizes = [32, 128], strides = [1, 1]} : vector<288x128xbf16> to vector<32x128xbf16>
    %21 = vector.extract_strided_slice %9 {offsets = [64, 0], sizes = [32, 128], strides = [1, 1]} : vector<288x128xbf16> to vector<32x128xbf16>
    %22 = vector.extract_strided_slice %9 {offsets = [112, 0], sizes = [32, 128], strides = [1, 1]} : vector<288x128xbf16> to vector<32x128xbf16>
    %23 = vector.extract_strided_slice %9 {offsets = [160, 0], sizes = [32, 128], strides = [1, 1]} : vector<288x128xbf16> to vector<32x128xbf16>
    %24 = tpu.concatenate %20, %21, %22, %23 in 0 : vector<32x128xbf16>, vector<32x128xbf16>, vector<32x128xbf16>, vector<32x128xbf16> -> vector<128x128xbf16>
    %25 = vector.extract_strided_slice %9 {offsets = [48, 0], sizes = [32, 128], strides = [1, 1]} : vector<288x128xbf16> to vector<32x128xbf16>
    %26 = vector.extract_strided_slice %9 {offsets = [96, 0], sizes = [32, 128], strides = [1, 1]} : vector<288x128xbf16> to vector<32x128xbf16>
    %27 = vector.extract_strided_slice %9 {offsets = [144, 0], sizes = [32, 128], strides = [1, 1]} : vector<288x128xbf16> to vector<32x128xbf16>
    %28 = vector.extract_strided_slice %9 {offsets = [192, 0], sizes = [32, 128], strides = [1, 1]} : vector<288x128xbf16> to vector<32x128xbf16>
    %29 = tpu.concatenate %25, %26, %27, %28 in 0 : vector<32x128xbf16>, vector<32x128xbf16>, vector<32x128xbf16>, vector<32x128xbf16> -> vector<128x128xbf16>
    %30 = vector.extract_strided_slice %9 {offsets = [56, 0], sizes = [32, 128], strides = [1, 1]} : vector<288x128xbf16> to vector<32x128xbf16>
    %31 = vector.extract_strided_slice %9 {offsets = [104, 0], sizes = [32, 128], strides = [1, 1]} : vector<288x128xbf16> to vector<32x128xbf16>
    %32 = vector.extract_strided_slice %9 {offsets = [152, 0], sizes = [32, 128], strides = [1, 1]} : vector<288x128xbf16> to vector<32x128xbf16>
    %33 = vector.extract_strided_slice %9 {offsets = [200, 0], sizes = [32, 128], strides = [1, 1]} : vector<288x128xbf16> to vector<32x128xbf16>
    %34 = tpu.concatenate %30, %31, %32, %33 in 0 : vector<32x128xbf16>, vector<32x128xbf16>, vector<32x128xbf16>, vector<32x128xbf16> -> vector<128x128xbf16>
    %35 = vector.extract_strided_slice %9 {offsets = [64, 0], sizes = [32, 128], strides = [1, 1]} : vector<288x128xbf16> to vector<32x128xbf16>
    %36 = vector.extract_strided_slice %9 {offsets = [112, 0], sizes = [32, 128], strides = [1, 1]} : vector<288x128xbf16> to vector<32x128xbf16>
    %37 = vector.extract_strided_slice %9 {offsets = [160, 0], sizes = [32, 128], strides = [1, 1]} : vector<288x128xbf16> to vector<32x128xbf16>
    %38 = vector.extract_strided_slice %9 {offsets = [208, 0], sizes = [32, 128], strides = [1, 1]} : vector<288x128xbf16> to vector<32x128xbf16>
    %39 = tpu.concatenate %35, %36, %37, %38 in 0 : vector<32x128xbf16>, vector<32x128xbf16>, vector<32x128xbf16>, vector<32x128xbf16> -> vector<128x128xbf16>
    %40 = vector.extract_strided_slice %9 {offsets = [96, 0], sizes = [32, 128], strides = [1, 1]} : vector<288x128xbf16> to vector<32x128xbf16>
    %41 = vector.extract_strided_slice %9 {offsets = [144, 0], sizes = [32, 128], strides = [1, 1]} : vector<288x128xbf16> to vector<32x128xbf16>
    %42 = vector.extract_strided_slice %9 {offsets = [192, 0], sizes = [32, 128], strides = [1, 1]} : vector<288x128xbf16> to vector<32x128xbf16>
    %43 = vector.extract_strided_slice %9 {offsets = [240, 0], sizes = [32, 128], strides = [1, 1]} : vector<288x128xbf16> to vector<32x128xbf16>
    %44 = tpu.concatenate %40, %41, %42, %43 in 0 : vector<32x128xbf16>, vector<32x128xbf16>, vector<32x128xbf16>, vector<32x128xbf16> -> vector<128x128xbf16>
    %45 = vector.extract_strided_slice %9 {offsets = [104, 0], sizes = [32, 128], strides = [1, 1]} : vector<288x128xbf16> to vector<32x128xbf16>
    %46 = vector.extract_strided_slice %9 {offsets = [152, 0], sizes = [32, 128], strides = [1, 1]} : vector<288x128xbf16> to vector<32x128xbf16>
    %47 = vector.extract_strided_slice %9 {offsets = [200, 0], sizes = [32, 128], strides = [1, 1]} : vector<288x128xbf16> to vector<32x128xbf16>
    %48 = vector.extract_strided_slice %9 {offsets = [248, 0], sizes = [32, 128], strides = [1, 1]} : vector<288x128xbf16> to vector<32x128xbf16>
    %49 = tpu.concatenate %45, %46, %47, %48 in 0 : vector<32x128xbf16>, vector<32x128xbf16>, vector<32x128xbf16>, vector<32x128xbf16> -> vector<128x128xbf16>
    %50 = vector.extract_strided_slice %9 {offsets = [112, 0], sizes = [32, 128], strides = [1, 1]} : vector<288x128xbf16> to vector<32x128xbf16>
    %51 = vector.extract_strided_slice %9 {offsets = [160, 0], sizes = [32, 128], strides = [1, 1]} : vector<288x128xbf16> to vector<32x128xbf16>
    %52 = vector.extract_strided_slice %9 {offsets = [208, 0], sizes = [32, 128], strides = [1, 1]} : vector<288x128xbf16> to vector<32x128xbf16>
    %53 = vector.extract_strided_slice %9 {offsets = [256, 0], sizes = [32, 128], strides = [1, 1]} : vector<288x128xbf16> to vector<32x128xbf16>
    %54 = tpu.concatenate %50, %51, %52, %53 in 0 : vector<32x128xbf16>, vector<32x128xbf16>, vector<32x128xbf16>, vector<32x128xbf16> -> vector<128x128xbf16>
    %55 = tpu.concatenate %14, %19, %24, %29, %34, %39, %44, %49, %54 in 1 : vector<128x128xbf16>, vector<128x128xbf16>, vector<128x128xbf16>, vector<128x128xbf16>, vector<128x128xbf16>, vector<128x128xbf16>, vector<128x128xbf16>, vector<128x128xbf16>, vector<128x128xbf16> -> vector<128x1152xbf16>
    %c0_7 = arith.constant 0 : index
    %c0_8 = arith.constant 0 : index
    %56 = vector.load %arg4[%c0_7, %c0_8] : memref<1152x128xbf16, #tpu.memory_space<vmem>>, vector<1152x128xbf16>
    %cst_9 = arith.constant dense<0.000000e+00> : vector<128x128xf32>
    %57 = tpu.matmul %55, %56, %cst_9 {dimension_numbers = #tpu.dot_dimension_numbers<[1], [0], [0], [1], [0, 0, 1, 1], [], []>} : vector<128x1152xbf16>, vector<1152x128xbf16>, vector<128x128xf32> -> vector<128x128xf32>
    %c0_10 = arith.constant 0 : index
    %c0_11 = arith.constant 0 : index
    %58 = vector.load %arg5[%c0_10, %c0_11] : memref<1x128xf32, #tpu.memory_space<vmem>>, vector<1x128xf32>
    %59 = vector.broadcast %58 : vector<1x128xf32> to vector<128x128xf32>
    %60 = arith.addf %57, %59 : vector<128x128xf32>
    %cst_12 = arith.constant 0.000000e+00 : f32
    %61 = vector.broadcast %cst_12 : f32 to vector<128x128xf32>
    %62 = arith.maximumf %60, %61 : vector<128x128xf32>
    %63 = arith.truncf %62 : vector<128x128xf32> to vector<128x128xbf16>
    %64 = vector.extract_strided_slice %63 {offsets = [0, 0], sizes = [8, 128], strides = [1, 1]} : vector<128x128xbf16> to vector<8x128xbf16>
    %65 = vector.extract_strided_slice %63 {offsets = [8, 0], sizes = [8, 128], strides = [1, 1]} : vector<128x128xbf16> to vector<8x128xbf16>
    %66 = vector.extract_strided_slice %63 {offsets = [16, 0], sizes = [8, 128], strides = [1, 1]} : vector<128x128xbf16> to vector<8x128xbf16>
    %67 = vector.extract_strided_slice %63 {offsets = [24, 0], sizes = [8, 128], strides = [1, 1]} : vector<128x128xbf16> to vector<8x128xbf16>
    %68 = vector.extract_strided_slice %63 {offsets = [32, 0], sizes = [8, 128], strides = [1, 1]} : vector<128x128xbf16> to vector<8x128xbf16>
    %69 = vector.extract_strided_slice %63 {offsets = [40, 0], sizes = [8, 128], strides = [1, 1]} : vector<128x128xbf16> to vector<8x128xbf16>
    %70 = vector.extract_strided_slice %63 {offsets = [48, 0], sizes = [8, 128], strides = [1, 1]} : vector<128x128xbf16> to vector<8x128xbf16>
    %71 = vector.extract_strided_slice %63 {offsets = [56, 0], sizes = [8, 128], strides = [1, 1]} : vector<128x128xbf16> to vector<8x128xbf16>
    %72 = vector.extract_strided_slice %63 {offsets = [64, 0], sizes = [8, 128], strides = [1, 1]} : vector<128x128xbf16> to vector<8x128xbf16>
    %73 = vector.extract_strided_slice %63 {offsets = [72, 0], sizes = [8, 128], strides = [1, 1]} : vector<128x128xbf16> to vector<8x128xbf16>
    %74 = vector.extract_strided_slice %63 {offsets = [80, 0], sizes = [8, 128], strides = [1, 1]} : vector<128x128xbf16> to vector<8x128xbf16>
    %75 = vector.extract_strided_slice %63 {offsets = [88, 0], sizes = [8, 128], strides = [1, 1]} : vector<128x128xbf16> to vector<8x128xbf16>
    %76 = vector.extract_strided_slice %63 {offsets = [96, 0], sizes = [8, 128], strides = [1, 1]} : vector<128x128xbf16> to vector<8x128xbf16>
    %77 = vector.extract_strided_slice %63 {offsets = [104, 0], sizes = [8, 128], strides = [1, 1]} : vector<128x128xbf16> to vector<8x128xbf16>
    %78 = vector.extract_strided_slice %63 {offsets = [112, 0], sizes = [8, 128], strides = [1, 1]} : vector<128x128xbf16> to vector<8x128xbf16>
    %79 = vector.extract_strided_slice %63 {offsets = [120, 0], sizes = [8, 128], strides = [1, 1]} : vector<128x128xbf16> to vector<8x128xbf16>
    %80 = tpu.concatenate %64, %65, %66, %67, %68, %69, %70, %71, %72, %73, %74, %75, %76, %77, %78, %79 in 1 : vector<8x128xbf16>, vector<8x128xbf16>, vector<8x128xbf16>, vector<8x128xbf16>, vector<8x128xbf16>, vector<8x128xbf16>, vector<8x128xbf16>, vector<8x128xbf16>, vector<8x128xbf16>, vector<8x128xbf16>, vector<8x128xbf16>, vector<8x128xbf16>, vector<8x128xbf16>, vector<8x128xbf16>, vector<8x128xbf16>, vector<8x128xbf16> -> vector<8x2048xbf16>
    %c0_13 = arith.constant 0 : index
    %c0_14 = arith.constant 0 : index
    %81 = vector.load %arg6[%c0_13, %c0_14] : memref<2048x512xbf16, #tpu.memory_space<vmem>>, vector<2048x512xbf16>
    %cst_15 = arith.constant dense<0.000000e+00> : vector<8x512xf32>
    %82 = tpu.matmul %80, %81, %cst_15 {dimension_numbers = #tpu.dot_dimension_numbers<[1], [0], [0], [1], [0, 0, 1, 1], [], []>} : vector<8x2048xbf16>, vector<2048x512xbf16>, vector<8x512xf32> -> vector<8x512xf32>
    %c0_16 = arith.constant 0 : index
    %c0_17 = arith.constant 0 : index
    %83 = vector.load %arg7[%c0_16, %c0_17] : memref<1x512xf32, #tpu.memory_space<vmem>>, vector<1x512xf32>
    %84 = vector.broadcast %83 : vector<1x512xf32> to vector<8x512xf32>
    %85 = arith.addf %82, %84 : vector<8x512xf32>
    %cst_18 = arith.constant 0.000000e+00 : f32
    %86 = vector.broadcast %cst_18 : f32 to vector<8x512xf32>
    %87 = arith.maximumf %85, %86 : vector<8x512xf32>
    %88 = arith.truncf %87 : vector<8x512xf32> to vector<8x512xbf16>
    %c0_19 = arith.constant 0 : index
    %c0_20 = arith.constant 0 : index
    %89 = vector.load %arg8[%c0_19, %c0_20] : memref<512x384xbf16, #tpu.memory_space<vmem>>, vector<512x384xbf16>
    %cst_21 = arith.constant dense<0.000000e+00> : vector<8x384xf32>
    %90 = tpu.matmul %88, %89, %cst_21 {dimension_numbers = #tpu.dot_dimension_numbers<[1], [0], [0], [1], [0, 0, 1, 1], [], []>} : vector<8x512xbf16>, vector<512x384xbf16>, vector<8x384xf32> -> vector<8x384xf32>
    %c0_22 = arith.constant 0 : index
    %c0_23 = arith.constant 0 : index
    %91 = vector.load %arg9[%c0_22, %c0_23] : memref<1x384xf32, #tpu.memory_space<vmem>>, vector<1x384xf32>
    %92 = vector.broadcast %91 : vector<1x384xf32> to vector<8x384xf32>
    %93 = arith.addf %90, %92 : vector<8x384xf32>
    %cst_24 = arith.constant 0.000000e+00 : f32
    %94 = vector.broadcast %cst_24 : f32 to vector<8x384xf32>
    %95 = arith.maximumf %93, %94 : vector<8x384xf32>
    %96 = arith.truncf %95 : vector<8x384xf32> to vector<8x384xbf16>
    %c0_25 = arith.constant 0 : index
    %c0_26 = arith.constant 0 : index
    %97 = vector.load %arg10[%c0_25, %c0_26] : memref<384x256xbf16, #tpu.memory_space<vmem>>, vector<384x256xbf16>
    %cst_27 = arith.constant dense<0.000000e+00> : vector<8x256xf32>
    %98 = tpu.matmul %96, %97, %cst_27 {dimension_numbers = #tpu.dot_dimension_numbers<[1], [0], [0], [1], [0, 0, 1, 1], [], []>} : vector<8x384xbf16>, vector<384x256xbf16>, vector<8x256xf32> -> vector<8x256xf32>
    %c0_28 = arith.constant 0 : index
    %c0_29 = arith.constant 0 : index
    %99 = vector.load %arg11[%c0_28, %c0_29] : memref<1x256xf32, #tpu.memory_space<vmem>>, vector<1x256xf32>
    %100 = vector.broadcast %99 : vector<1x256xf32> to vector<8x256xf32>
    %101 = arith.addf %98, %100 : vector<8x256xf32>
    %c0_30 = arith.constant 0 : index
    %c0_31 = arith.constant 0 : index
    %102 = vector.load %arg12[%c0_30, %c0_31] : memref<8x256xf32, #tpu.memory_space<vmem>>, vector<8x256xf32>
    tpu.vector_store %arg12[%c0_30, %c0_31], %101 {strides = array<i32>} : memref<8x256xf32, #tpu.memory_space<vmem>>, vector<8x256xf32>,
    return
  }
  func.func @transform_0(%arg0: i32) -> (i32, i32, i32) {
    %c0_i32 = arith.constant 0 : i32
    %c0_i32_0 = arith.constant 0 : i32
    %c0_i32_1 = arith.constant 0 : i32
    return %arg0, %c0_i32, %c0_i32_0 : i32, i32, i32
  }
  func.func @transform_1(%arg0: i32) -> (i32, i32) {
    %c0_i32 = arith.constant 0 : i32
    %c0_i32_0 = arith.constant 0 : i32
    %c0_i32_1 = arith.constant 0 : i32
    return %c0_i32, %c0_i32_0 : i32, i32
  }
  func.func @transform_2(%arg0: i32) -> (i32, i32) {
    %c0_i32 = arith.constant 0 : i32
    %c0_i32_0 = arith.constant 0 : i32
    %c0_i32_1 = arith.constant 0 : i32
    return %c0_i32, %c0_i32_0 : i32, i32
  }
  func.func @transform_3(%arg0: i32) -> (i32, i32) {
    %c0_i32 = arith.constant 0 : i32
    %c0_i32_0 = arith.constant 0 : i32
    %c0_i32_1 = arith.constant 0 : i32
    return %c0_i32, %c0_i32_0 : i32, i32
  }
  func.func @transform_4(%arg0: i32) -> (i32, i32) {
    %c0_i32 = arith.constant 0 : i32
    %c0_i32_0 = arith.constant 0 : i32
    %c0_i32_1 = arith.constant 0 : i32
    return %c0_i32, %c0_i32_0 : i32, i32
  }
  func.func @transform_5(%arg0: i32) -> (i32, i32) {
    %c0_i32 = arith.constant 0 : i32
    %c0_i32_0 = arith.constant 0 : i32
    %c0_i32_1 = arith.constant 0 : i32
    return %c0_i32, %c0_i32_0 : i32, i32
  }
  func.func @transform_6(%arg0: i32) -> (i32, i32) {
    %c0_i32 = arith.constant 0 : i32
    %c0_i32_0 = arith.constant 0 : i32
    %c0_i32_1 = arith.constant 0 : i32
    return %c0_i32, %c0_i32_0 : i32, i32
  }
  func.func @transform_7(%arg0: i32) -> (i32, i32) {
    %c0_i32 = arith.constant 0 : i32
    %c0_i32_0 = arith.constant 0 : i32
    %c0_i32_1 = arith.constant 0 : i32
    return %c0_i32, %c0_i32_0 : i32, i32
  }
  func.func @transform_8(%arg0: i32) -> (i32, i32) {
    %c0_i32 = arith.constant 0 : i32
    %c0_i32_0 = arith.constant 0 : i32
    %c0_i32_1 = arith.constant 0 : i32
    return %c0_i32, %c0_i32_0 : i32, i32
  }
  func.func @transform_9(%arg0: i32) -> (i32, i32) {
    %c0_i32 = arith.constant 0 : i32
    %c0_i32_0 = arith.constant 0 : i32
    %c0_i32_1 = arith.constant 0 : i32
    return %c0_i32, %c0_i32_0 : i32, i32
  }
  func.func @transform_10(%arg0: i32) -> (i32, i32) {
    %c0_i32 = arith.constant 0 : i32
    %c0_i32_0 = arith.constant 0 : i32
    %c0_i32_1 = arith.constant 0 : i32
    return %c0_i32, %c0_i32_0 : i32, i32
  }
  func.func @transform_11(%arg0: i32) -> (i32, i32) {
    %c0_i32 = arith.constant 0 : i32
    %c0_i32_0 = arith.constant 0 : i32
    return %arg0, %c0_i32 : i32, i32
  }
}

</mosaic_0001>

<llo_original>
// kernel: cnn_forward.1
$region0: #{cnn_forward.1}
  #allocation0 [shape = 'u32[]', space=smem, size = 0x4, offset = 0x4, fixed_abs, tag = 'smem constant byte address 0x4 - core index']
  #allocation1 [shape = 'u32[144,128]{1,0:T(1,128)}', space=vmem, size = 0x12000, scoped, tag = 'internal scratch']
  %s0 = inlined_call_operand.vmem [shape: bf16[1,288,128], index: 0, kind: input, shape index: {}]
  %s1 = inlined_call_operand.hbm [shape: bf16[128,128], index: 1, kind: input, shape index: {}]
  %s2 = inlined_call_operand.hbm [shape: f32[1,128], index: 2, kind: input, shape index: {}]
  %s3 = inlined_call_operand.hbm [shape: bf16[1152,128], index: 3, kind: input, shape index: {}]
  %s4 = inlined_call_operand.hbm [shape: f32[1,128], index: 4, kind: input, shape index: {}]
  %s5 = inlined_call_operand.hbm [shape: bf16[2048,512], index: 5, kind: input, shape index: {}]
  %s6 = inlined_call_operand.hbm [shape: f32[1,512], index: 6, kind: input, shape index: {}]
  %s7 = inlined_call_operand.hbm [shape: bf16[512,384], index: 7, kind: input, shape index: {}]
  %s8 = inlined_call_operand.hbm [shape: f32[1,384], index: 8, kind: input, shape index: {}]
  %s9 = inlined_call_operand.hbm [shape: bf16[384,256], index: 9, kind: input, shape index: {}]
  %s10 = inlined_call_operand.hbm [shape: f32[1,256], index: 10, kind: input, shape index: {}]
  %s11 = inlined_call_operand.vmem [shape: f32[8,256], index: 11, kind: output, shape index: {}]
  %s12 = sld [smem:[#allocation0]]
  $region94: #{cnn_forward.1} parent=0
    _
  %s14 = ssub.s32 1, %s12
  %s15 = scalar_select 0, %s14, %s12
  $region1: #{cnn_forward.1} parent=0
    #allocation2 [shape = 'u8[32768]{0}', space=vmem, size = 0x8000, scoped, tag = 'input window, operand 1, single buffered']
    #allocation3 [shape = 's32[1]{0}', space=sflag, size = 0x4, scoped, tag = 'scoped memory for cnn_forward.1']
    #allocation4 [shape = 'u8[512]{0}', space=vmem, size = 0x400, scoped, tag = 'input window, operand 2, single buffered']
    #allocation5 [shape = 's32[1]{0}', space=sflag, size = 0x4, scoped, tag = 'scoped memory for cnn_forward.1']
    #allocation6 [shape = 'u8[294912]{0}', space=vmem, size = 0x48000, scoped, tag = 'input window, operand 3, single buffered']
    #allocation7 [shape = 'u8[512]{0}', space=vmem, size = 0x400, scoped, tag = 'input window, operand 4, single buffered']
    #allocation8 [shape = 's32[1]{0}', space=sflag, size = 0x4, scoped, tag = 'scoped memory for cnn_forward.1']
    #allocation9 [shape = 'u8[2097152]{0}', space=vmem, size = 0x200000, scoped, tag = 'input window, operand 5, single buffered']
    #allocation10 [shape = 'u8[2048]{0}', space=vmem, size = 0x800, scoped, tag = 'input window, operand 6, single buffered']
    #allocation11 [shape = 's32[1]{0}', space=sflag, size = 0x4, scoped, tag = 'scoped memory for cnn_forward.1']
    #allocation12 [shape = 'u8[393216]{0}', space=vmem, size = 0x60000, scoped, tag = 'input window, operand 7, single buffered']
    #allocation13 [shape = 'u8[1536]{0}', space=vmem, size = 0x800, scoped, tag = 'input window, operand 8, single buffered']
    #allocation14 [shape = 's32[1]{0}', space=sflag, size = 0x4, scoped, tag = 'scoped memory for cnn_forward.1']
    #allocation15 [shape = 'u8[196608]{0}', space=vmem, size = 0x30000, scoped, tag = 'input window, operand 9, single buffered']
    #allocation16 [shape = 'u8[1024]{0}', space=vmem, size = 0x400, scoped, tag = 'input window, operand 10, single buffered']
    #allocation17 [shape = 's32[1]{0}', space=sflag, size = 0x4, scoped, tag = 'scoped memory for cnn_forward.1']
    %16 = vsyncpa [#allocation3], 0
    %17 = vsyncpa [#allocation5], 0
    %18 = vsyncpa [#allocation8], 0
    %19 = vsyncpa [#allocation11], 0
    %20 = vsyncpa [#allocation14], 0
    %21 = vsyncpa [#allocation17], 0
    // Predicated region
    $region2: #{cnn_forward.1} parent=1 // pred_check
      _
    $region3: #{cnn_forward.1} parent=1 // pred_check_branch
      %23 = sbr.rel (0) target = $region5
    $region4: #{cnn_forward.1} parent=1 // pred_region
      _
    $region5: #{cnn_forward.1} parent=1 // pred_fallthru
      _
    // Predicated region
    $region6: #{cnn_forward.1} parent=1 // pred_check
      _
    $region7: #{cnn_forward.1} parent=1 // pred_check_branch
      %25 = sbr.rel (0) target = $region9
    $region8: #{cnn_forward.1} parent=1 // pred_region
      %s27 = ssub.s32 1024, 1024
      %28 = vsyncadd [#allocation3], %s27
      %s29 = sshll.u32 [#allocation2], 4
      %s30 = int_to_ptr.vmem [resolvable:$true] %s29
      %35 = dma.hbm_to_vmem [thread:$0]  %s1, 1024, %s30, [#allocation3], 64, 64, 4
    $region9: #{cnn_forward.1} parent=1 // pred_fallthru
      _
    // Predicated region
    $region10: #{cnn_forward.1} parent=1 // pred_check
      _
    $region11: #{cnn_forward.1} parent=1 // pred_check_branch
      %37 = sbr.rel (0) target = $region13
    $region12: #{cnn_forward.1} parent=1 // pred_region
      %s39 = ssub.s32 16, 16
      %40 = vsyncadd [#allocation5], %s39
      %s42 = sshll.u32 [#allocation4], 4
      %s43 = int_to_ptr.vmem [resolvable:$true] %s42
      %45 = dma.hbm_to_vmem [thread:$0]  %s2, 16, %s43, [#allocation5]
    $region13: #{cnn_forward.1} parent=1 // pred_fallthru
      _
    // Predicated region
    $region14: #{cnn_forward.1} parent=1 // pred_check
      _
    $region15: #{cnn_forward.1} parent=1 // pred_check_branch
      %47 = sbr.rel (0) target = $region17
    $region16: #{cnn_forward.1} parent=1 // pred_region
      %s49 = ssub.s32 9216, 9216
      %50 = vsyncadd [#allocation5], %s49
      %s51 = sshll.u32 [#allocation6], 4
      %s52 = int_to_ptr.vmem [resolvable:$true] %s51
      %57 = dma.hbm_to_vmem [thread:$0]  %s3, 9216, %s52, [#allocation5], 64, 64, 4
    $region17: #{cnn_forward.1} parent=1 // pred_fallthru
      _
    // Predicated region
    $region18: #{cnn_forward.1} parent=1 // pred_check
      _
    $region19: #{cnn_forward.1} parent=1 // pred_check_branch
      %59 = sbr.rel (0) target = $region21
    $region20: #{cnn_forward.1} parent=1 // pred_region
      %s61 = ssub.s32 16, 16
      %62 = vsyncadd [#allocation8], %s61
      %s64 = sshll.u32 [#allocation7], 4
      %s65 = int_to_ptr.vmem [resolvable:$true] %s64
      %67 = dma.hbm_to_vmem [thread:$0]  %s4, 16, %s65, [#allocation8]
    $region21: #{cnn_forward.1} parent=1 // pred_fallthru
      _
    // Predicated region
    $region22: #{cnn_forward.1} parent=1 // pred_check
      _
    $region23: #{cnn_forward.1} parent=1 // pred_check_branch
      %69 = sbr.rel (0) target = $region25
    $region24: #{cnn_forward.1} parent=1 // pred_region
      %s71 = ssub.s32 65536, 65536
      %72 = vsyncadd [#allocation8], %s71
      %s73 = sshll.u32 [#allocation9], 4
      %s74 = int_to_ptr.vmem [resolvable:$true] %s73
      %79 = dma.hbm_to_vmem [thread:$0]  %s5, 65536, %s74, [#allocation8], 256, 256, 16
    $region25: #{cnn_forward.1} parent=1 // pred_fallthru
      _
    // Predicated region
    $region26: #{cnn_forward.1} parent=1 // pred_check
      _
    $region27: #{cnn_forward.1} parent=1 // pred_check_branch
      %81 = sbr.rel (0) target = $region29
    $region28: #{cnn_forward.1} parent=1 // pred_region
      %s83 = ssub.s32 64, 64
      %84 = vsyncadd [#allocation11], %s83
      %s86 = sshll.u32 [#allocation10], 4
      %s87 = int_to_ptr.vmem [resolvable:$true] %s86
      %89 = dma.hbm_to_vmem [thread:$0]  %s6, 64, %s87, [#allocation11]
    $region29: #{cnn_forward.1} parent=1 // pred_fallthru
      _
    // Predicated region
    $region30: #{cnn_forward.1} parent=1 // pred_check
      _
    $region31: #{cnn_forward.1} parent=1 // pred_check_branch
      %91 = sbr.rel (0) target = $region33
    $region32: #{cnn_forward.1} parent=1 // pred_region
      %s93 = ssub.s32 12288, 12288
      %94 = vsyncadd [#allocation11], %s93
      %s95 = sshll.u32 [#allocation12], 4
      %s96 = int_to_ptr.vmem [resolvable:$true] %s95
      %101 = dma.hbm_to_vmem [thread:$0]  %s7, 12288, %s96, [#allocation11], 192, 192, 12
    $region33: #{cnn_forward.1} parent=1 // pred_fallthru
      _
    // Predicated region
    $region34: #{cnn_forward.1} parent=1 // pred_check
      _
    $region35: #{cnn_forward.1} parent=1 // pred_check_branch
      %103 = sbr.rel (0) target = $region37
    $region36: #{cnn_forward.1} parent=1 // pred_region
      %s105 = ssub.s32 48, 48
      %106 = vsyncadd [#allocation14], %s105
      %s108 = sshll.u32 [#allocation13], 4
      %s109 = int_to_ptr.vmem [resolvable:$true] %s108
      %111 = dma.hbm_to_vmem [thread:$0]  %s8, 48, %s109, [#allocation14]
    $region37: #{cnn_forward.1} parent=1 // pred_fallthru
      _
    // Predicated region
    $region38: #{cnn_forward.1} parent=1 // pred_check
      _
    $region39: #{cnn_forward.1} parent=1 // pred_check_branch
      %113 = sbr.rel (0) target = $region41
    $region40: #{cnn_forward.1} parent=1 // pred_region
      %s115 = ssub.s32 6144, 6144
      %116 = vsyncadd [#allocation14], %s115
      %s117 = sshll.u32 [#allocation15], 4
      %s118 = int_to_ptr.vmem [resolvable:$true] %s117
      %123 = dma.hbm_to_vmem [thread:$0]  %s9, 6144, %s118, [#allocation14], 128, 128, 8
    $region41: #{cnn_forward.1} parent=1 // pred_fallthru
      _
    // Predicated region
    $region42: #{cnn_forward.1} parent=1 // pred_check
      _
    $region43: #{cnn_forward.1} parent=1 // pred_check_branch
      %125 = sbr.rel (0) target = $region45
    $region44: #{cnn_forward.1} parent=1 // pred_region
      %s127 = ssub.s32 32, 32
      %128 = vsyncadd [#allocation17], %s127
      %s130 = sshll.u32 [#allocation16], 4
      %s131 = int_to_ptr.vmem [resolvable:$true] %s130
      %133 = dma.hbm_to_vmem [thread:$0]  %s10, 32, %s131, [#allocation17]
    $region45: #{cnn_forward.1} parent=1 // pred_fallthru
      _
    // Predicated region
    $region46: #{cnn_forward.1} parent=1 // pred_check
      _
    $region47: #{cnn_forward.1} parent=1 // pred_check_branch
      %135 = sbr.rel (0) target = $region49
    $region48: #{cnn_forward.1} parent=1 // pred_region
      %136 = dma.done [#allocation3], 1024
    $region49: #{cnn_forward.1} parent=1 // pred_fallthru
      _
    // Predicated region
    $region50: #{cnn_forward.1} parent=1 // pred_check
      _
    $region51: #{cnn_forward.1} parent=1 // pred_check_branch
      %138 = sbr.rel (0) target = $region53
    $region52: #{cnn_forward.1} parent=1 // pred_region
      %139 = dma.done [#allocation5], 16
    $region53: #{cnn_forward.1} parent=1 // pred_fallthru
      _
    // Predicated region
    $region54: #{cnn_forward.1} parent=1 // pred_check
      _
    $region55: #{cnn_forward.1} parent=1 // pred_check_branch
      %141 = sbr.rel (0) target = $region57
    $region56: #{cnn_forward.1} parent=1 // pred_region
      %142 = dma.done [#allocation5], 9216
    $region57: #{cnn_forward.1} parent=1 // pred_fallthru
      _
    // Predicated region
    $region58: #{cnn_forward.1} parent=1 // pred_check
      _
    $region59: #{cnn_forward.1} parent=1 // pred_check_branch
      %144 = sbr.rel (0) target = $region61
    $region60: #{cnn_forward.1} parent=1 // pred_region
      %145 = dma.done [#allocation8], 16
    $region61: #{cnn_forward.1} parent=1 // pred_fallthru
      _
    // Predicated region
    $region62: #{cnn_forward.1} parent=1 // pred_check
      _
    $region63: #{cnn_forward.1} parent=1 // pred_check_branch
      %147 = sbr.rel (0) target = $region65
    $region64: #{cnn_forward.1} parent=1 // pred_region
      %148 = dma.done [#allocation8], 65536
    $region65: #{cnn_forward.1} parent=1 // pred_fallthru
      _
    // Predicated region
    $region66: #{cnn_forward.1} parent=1 // pred_check
      _
    $region67: #{cnn_forward.1} parent=1 // pred_check_branch
      %150 = sbr.rel (0) target = $region69
    $region68: #{cnn_forward.1} parent=1 // pred_region
      %151 = dma.done [#allocation11], 64
    $region69: #{cnn_forward.1} parent=1 // pred_fallthru
      _
    // Predicated region
    $region70: #{cnn_forward.1} parent=1 // pred_check
      _
    $region71: #{cnn_forward.1} parent=1 // pred_check_branch
      %153 = sbr.rel (0) target = $region73
    $region72: #{cnn_forward.1} parent=1 // pred_region
      %154 = dma.done [#allocation11], 12288
    $region73: #{cnn_forward.1} parent=1 // pred_fallthru
      _
    // Predicated region
    $region74: #{cnn_forward.1} parent=1 // pred_check
      _
    $region75: #{cnn_forward.1} parent=1 // pred_check_branch
      %156 = sbr.rel (0) target = $region77
    $region76: #{cnn_forward.1} parent=1 // pred_region
      %157 = dma.done [#allocation14], 48
    $region77: #{cnn_forward.1} parent=1 // pred_fallthru
      _
    // Predicated region
    $region78: #{cnn_forward.1} parent=1 // pred_check
      _
    $region79: #{cnn_forward.1} parent=1 // pred_check_branch
      %159 = sbr.rel (0) target = $region81
    $region80: #{cnn_forward.1} parent=1 // pred_region
      %160 = dma.done [#allocation14], 6144
    $region81: #{cnn_forward.1} parent=1 // pred_fallthru
      _
    // Predicated region
    $region82: #{cnn_forward.1} parent=1 // pred_check
      _
    $region83: #{cnn_forward.1} parent=1 // pred_check_branch
      %162 = sbr.rel (0) target = $region85
    $region84: #{cnn_forward.1} parent=1 // pred_region
      %163 = dma.done [#allocation17], 32
    $region85: #{cnn_forward.1} parent=1 // pred_fallthru
      _
    %v165 = vld [vmem:[%s0] sm:$0xf]
    %v166 = vld [vmem:[%s0 + $0x4] sm:$0xf]
    %v167 = vld [vmem:[%s0 + $0x8] sm:$0xf]
    %v168 = vld [vmem:[%s0 + $0xc] sm:$0xf]
    %v169 = vld [vmem:[%s0 + $0x10] sm:$0xf]
    %v170 = vld [vmem:[%s0 + $0x14] sm:$0xf]
    %v171 = vld [vmem:[%s0 + $0x18] sm:$0xf]
    %v172 = vld [vmem:[%s0 + $0x1c] sm:$0xf]
    %v173 = vld [vmem:[%s0 + $0x20] sm:$0xf]
    %v174 = vld [vmem:[%s0 + $0x24] sm:$0xf]
    %v175 = vld [vmem:[%s0 + $0x28] sm:$0xf]
    %v176 = vld [vmem:[%s0 + $0x2c] sm:$0xf]
    %v177 = vld [vmem:[%s0 + $0x30] sm:$0xf]
    %v178 = vld [vmem:[%s0 + $0x34] sm:$0xf]
    %v179 = vld [vmem:[%s0 + $0x38] sm:$0xf]
    %v180 = vld [vmem:[%s0 + $0x3c] sm:$0xf]
    %v181 = vld [vmem:[%s0 + $0x40] sm:$0xf]
    %v182 = vld [vmem:[%s0 + $0x44] sm:$0xf]
    %v183 = vld [vmem:[%s0 + $0x48] sm:$0xf]
    %v184 = vld [vmem:[%s0 + $0x4c] sm:$0xf]
    %v185 = vld [vmem:[%s0 + $0x50] sm:$0xf]
    %v186 = vld [vmem:[%s0 + $0x54] sm:$0xf]
    %v187 = vld [vmem:[%s0 + $0x58] sm:$0xf]
    %v188 = vld [vmem:[%s0 + $0x5c] sm:$0xf]
    %v189 = vld [vmem:[%s0 + $0x60] sm:$0xf]
    %v190 = vld [vmem:[%s0 + $0x64] sm:$0xf]
    %v191 = vld [vmem:[%s0 + $0x68] sm:$0xf]
    %v192 = vld [vmem:[%s0 + $0x6c] sm:$0xf]
    %v193 = vld [vmem:[%s0 + $0x70] sm:$0xf]
    %v194 = vld [vmem:[%s0 + $0x74] sm:$0xf]
    %v195 = vld [vmem:[%s0 + $0x78] sm:$0xf]
    %v196 = vld [vmem:[%s0 + $0x7c] sm:$0xf]
    %v197 = vld [vmem:[%s0 + $0x80] sm:$0xf]
    %v198 = vld [vmem:[%s0 + $0x84] sm:$0xf]
    %v199 = vld [vmem:[%s0 + $0x88] sm:$0xf]
    %v200 = vld [vmem:[%s0 + $0x8c] sm:$0xf]
    %v201 = vld [vmem:[#allocation2] sm:$0xf]
    %v202 = vld [vmem:[#allocation2 + $0x4] sm:$0xf]
    %v203 = vld [vmem:[#allocation2 + $0x8] sm:$0xf]
    %v204 = vld [vmem:[#allocation2 + $0xc] sm:$0xf]
    %v205 = vld [vmem:[#allocation2 + $0x10] sm:$0xf]
    %v206 = vld [vmem:[#allocation2 + $0x14] sm:$0xf]
    %v207 = vld [vmem:[#allocation2 + $0x18] sm:$0xf]
    %v208 = vld [vmem:[#allocation2 + $0x1c] sm:$0xf]
    %v209 = vld [vmem:[#allocation2 + $0x20] sm:$0xf]
    %v210 = vld [vmem:[#allocation2 + $0x24] sm:$0xf]
    %v211 = vld [vmem:[#allocation2 + $0x28] sm:$0xf]
    %v212 = vld [vmem:[#allocation2 + $0x2c] sm:$0xf]
    %v213 = vld [vmem:[#allocation2 + $0x30] sm:$0xf]
    %v214 = vld [vmem:[#allocation2 + $0x34] sm:$0xf]
    %v215 = vld [vmem:[#allocation2 + $0x38] sm:$0xf]
    %v216 = vld [vmem:[#allocation2 + $0x3c] sm:$0xf]
    %v217 = vld [vmem:[#allocation4] sm:$0x1]
    %v219 = vlaneseq
    %v220 = vshrl.u32 %v219, 7
    %v221 = vsub.s32 0, %v220
    %v222 = vrot.slane %v217, %v221
    %v260 = vunpack.c.l.b16 %v165
    %v261 = vunpack.c.l.b16 %v166
    %v262 = vunpack.c.l.b16 %v167
    %v263 = vunpack.c.l.b16 %v168
    %v264 = vunpack.c.l.b16 %v169
    %v265 = vunpack.c.l.b16 %v170
    %v266 = vunpack.c.l.b16 %v171
    %v267 = vunpack.c.l.b16 %v172
    %v268 = vunpack.c.l.b16 %v173
    %v269 = vunpack.c.l.b16 %v174
    %v270 = vunpack.c.l.b16 %v175
    %v271 = vunpack.c.l.b16 %v176
    %v272 = vunpack.c.l.b16 %v177
    %v273 = vunpack.c.l.b16 %v178
    %v274 = vunpack.c.l.b16 %v179
    %v275 = vunpack.c.l.b16 %v180
    %v276 = vunpack.c.l.b16 %v181
    %v277 = vunpack.c.l.b16 %v182
    %v278 = vunpack.c.l.b16 %v183
    %v279 = vunpack.c.l.b16 %v184
    %v280 = vunpack.c.l.b16 %v185
    %v281 = vunpack.c.l.b16 %v186
    %v282 = vunpack.c.l.b16 %v187
    %v283 = vunpack.c.l.b16 %v188
    %v284 = vunpack.c.l.b16 %v189
    %v285 = vunpack.c.l.b16 %v190
    %v286 = vunpack.c.l.b16 %v191
    %v287 = vunpack.c.l.b16 %v192
    %v288 = vunpack.c.l.b16 %v193
    %v289 = vunpack.c.l.b16 %v194
    %v290 = vunpack.c.l.b16 %v195
    %v291 = vunpack.c.l.b16 %v196
    %v292 = vunpack.c.l.b16 %v197
    %v293 = vunpack.c.l.b16 %v198
    %v294 = vunpack.c.l.b16 %v199
    %v295 = vunpack.c.l.b16 %v200
    %v296 = vpack.c.b16 %v261, %v260
    %v297 = vpack.c.b16 %v263, %v262
    %v298 = vpack.c.b16 %v265, %v264
    %v299 = vpack.c.b16 %v267, %v266
    %v300 = vpack.c.b16 %v269, %v268
    %v301 = vpack.c.b16 %v271, %v270
    %v302 = vpack.c.b16 %v273, %v272
    %v303 = vpack.c.b16 %v275, %v274
    %v304 = vpack.c.b16 %v277, %v276
    %v305 = vpack.c.b16 %v279, %v278
    %v306 = vpack.c.b16 %v281, %v280
    %v307 = vpack.c.b16 %v283, %v282
    %v308 = vpack.c.b16 %v285, %v284
    %v309 = vpack.c.b16 %v287, %v286
    %v310 = vpack.c.b16 %v289, %v288
    %v311 = vpack.c.b16 %v291, %v290
    %v312 = vpack.c.b16 %v293, %v292
    %v313 = vpack.c.b16 %v295, %v294
    %v348 = vunpack.c.l.b16 %v201
    %v349 = vunpack.c.l.b16 %v202
    %v350 = vunpack.c.l.b16 %v203
    %v351 = vunpack.c.l.b16 %v204
    %v352 = vunpack.c.l.b16 %v205
    %v353 = vunpack.c.l.b16 %v206
    %v354 = vunpack.c.l.b16 %v207
    %v355 = vunpack.c.l.b16 %v208
    %v356 = vunpack.c.l.b16 %v209
    %v357 = vunpack.c.l.b16 %v210
    %v358 = vunpack.c.l.b16 %v211
    %v359 = vunpack.c.l.b16 %v212
    %v360 = vunpack.c.l.b16 %v213
    %v361 = vunpack.c.l.b16 %v214
    %v362 = vunpack.c.l.b16 %v215
    %v363 = vunpack.c.l.b16 %v216
    %v364 = vpack.c.b16 %v349, %v348
    %v365 = vpack.c.b16 %v351, %v350
    %v366 = vpack.c.b16 %v353, %v352
    %v367 = vpack.c.b16 %v355, %v354
    %v368 = vpack.c.b16 %v357, %v356
    %v369 = vpack.c.b16 %v359, %v358
    %v370 = vpack.c.b16 %v361, %v360
    %v371 = vpack.c.b16 %v363, %v362
    %380 = vmatprep.subr.bf16.mxu0 0
    %381 = vmatpush1.bf16.msra.mxu0 %v364
    %382 = vmatprep.subr.bf16.mxu0 0
    %383 = vmatpush1.bf16.msra.mxu0 %v365
    %384 = vmatprep.subr.bf16.mxu0 0
    %385 = vmatpush1.bf16.msra.mxu0 %v366
    %386 = vmatprep.subr.bf16.mxu0 0
    %387 = vmatpush1.bf16.msra.mxu0 %v367
    %388 = vmatprep.subr.bf16.mxu0 0
    %389 = vmatpush1.bf16.msra.mxu0 %v368
    %390 = vmatprep.subr.bf16.mxu0 0
    %391 = vmatpush1.bf16.msra.mxu0 %v369
    %392 = vmatprep.subr.bf16.mxu0 0
    %393 = vmatpush1.bf16.msra.mxu0 %v370
    %394 = vmatprep.subr.bf16.mxu0 0
    %395 = vmatpush1.bf16.msra.mxu0 %v371
    %396 = vmatprep.subr.bf16.mxu0 0
    %397 = vmatpush1.bf16.msra.mxu0 0
    %398 = vmatprep.subr.bf16.mxu0 0
    %399 = vmatpush1.bf16.msra.mxu0 0
    %400 = vmatprep.subr.bf16.mxu0 0
    %401 = vmatpush1.bf16.msra.mxu0 0
    %402 = vmatprep.subr.bf16.mxu0 0
    %403 = vmatpush1.bf16.msra.mxu0 0
    %404 = vmatprep.subr.bf16.mxu0 0
    %405 = vmatpush1.bf16.msra.mxu0 0
    %406 = vmatprep.subr.bf16.mxu0 0
    %407 = vmatpush1.bf16.msra.mxu0 0
    %408 = vmatprep.subr.bf16.mxu0 0
    %409 = vmatpush1.bf16.msra.mxu0 0
    %410 = vmatprep.subr.bf16.mxu0 0
    %411 = vmatpush1.bf16.msra.mxu0 0
    %412 = vmatprep.mubr.bf16.mxu0 0
    %413 = vmatmul.mubr.bf16.gmra.mrb[0].mxu0 %v296
    %v414 = vpop.f32.mrb[0].mxu0
    %v415 = vadd.f32 %v222, %v414
    %v416 = vpop.f32.mrb[0].mxu0
    %v417 = vpop.f32.mrb[0].mxu0
    %v418 = vadd.f32 %v222, %v417
    %v419 = vpop.f32.mrb[0].mxu0
    %420 = vmatprep.mubr.bf16.mxu0 0
    %421 = vmatmul.mubr.bf16.gmra.mrb[0].mxu0 %v297
    %v422 = vpop.f32.mrb[0].mxu0
    %v423 = vadd.f32 %v222, %v422
    %v424 = vpop.f32.mrb[0].mxu0
    %v425 = vpop.f32.mrb[0].mxu0
    %v426 = vadd.f32 %v222, %v425
    %v427 = vpop.f32.mrb[0].mxu0
    %428 = vmatprep.mubr.bf16.mxu0 0
    %429 = vmatmul.mubr.bf16.gmra.mrb[0].mxu0 %v298
    %v430 = vpop.f32.mrb[0].mxu0
    %v431 = vadd.f32 %v222, %v430
    %v432 = vpop.f32.mrb[0].mxu0
    %v433 = vpop.f32.mrb[0].mxu0
    %v434 = vadd.f32 %v222, %v433
    %v435 = vpop.f32.mrb[0].mxu0
    %436 = vmatprep.mubr.bf16.mxu0 0
    %437 = vmatmul.mubr.bf16.gmra.mrb[0].mxu0 %v299
    %v438 = vpop.f32.mrb[0].mxu0
    %v439 = vadd.f32 %v222, %v438
    %v440 = vpop.f32.mrb[0].mxu0
    %v441 = vpop.f32.mrb[0].mxu0
    %v442 = vadd.f32 %v222, %v441
    %v443 = vpop.f32.mrb[0].mxu0
    %444 = vmatprep.mubr.bf16.mxu0 0
    %445 = vmatmul.mubr.bf16.gmra.mrb[0].mxu0 %v300
    %v446 = vpop.f32.mrb[0].mxu0
    %v447 = vadd.f32 %v222, %v446
    %v448 = vpop.f32.mrb[0].mxu0
    %v449 = vpop.f32.mrb[0].mxu0
    %v450 = vadd.f32 %v222, %v449
    %v451 = vpop.f32.mrb[0].mxu0
    %452 = vmatprep.mubr.bf16.mxu0 0
    %453 = vmatmul.mubr.bf16.gmra.mrb[0].mxu0 %v301
    %v454 = vpop.f32.mrb[0].mxu0
    %v455 = vadd.f32 %v222, %v454
    %v456 = vpop.f32.mrb[0].mxu0
    %v457 = vpop.f32.mrb[0].mxu0
    %v458 = vadd.f32 %v222, %v457
    %v459 = vpop.f32.mrb[0].mxu0
    %460 = vmatprep.mubr.bf16.mxu0 0
    %461 = vmatmul.mubr.bf16.gmra.mrb[0].mxu0 %v302
    %v462 = vpop.f32.mrb[0].mxu0
    %v463 = vadd.f32 %v222, %v462
    %v464 = vpop.f32.mrb[0].mxu0
    %v465 = vpop.f32.mrb[0].mxu0
    %v466 = vadd.f32 %v222, %v465
    %v467 = vpop.f32.mrb[0].mxu0
    %468 = vmatprep.mubr.bf16.mxu0 0
    %469 = vmatmul.mubr.bf16.gmra.mrb[0].mxu0 %v303
    %v470 = vpop.f32.mrb[0].mxu0
    %v471 = vadd.f32 %v222, %v470
    %v472 = vpop.f32.mrb[0].mxu0
    %v473 = vpop.f32.mrb[0].mxu0
    %v474 = vadd.f32 %v222, %v473
    %v475 = vpop.f32.mrb[0].mxu0
    %476 = vmatprep.mubr.bf16.mxu0 0
    %477 = vmatmul.mubr.bf16.gmra.mrb[0].mxu0 %v304
    %v478 = vpop.f32.mrb[0].mxu0
    %v479 = vadd.f32 %v222, %v478
    %v480 = vpop.f32.mrb[0].mxu0
    %v481 = vpop.f32.mrb[0].mxu0
    %v482 = vadd.f32 %v222, %v481
    %v483 = vpop.f32.mrb[0].mxu0
    %484 = vmatprep.mubr.bf16.mxu0 0
    %485 = vmatmul.mubr.bf16.gmra.mrb[0].mxu0 %v305
    %v486 = vpop.f32.mrb[0].mxu0
    %v487 = vadd.f32 %v222, %v486
    %v488 = vpop.f32.mrb[0].mxu0
    %v489 = vpop.f32.mrb[0].mxu0
    %v490 = vadd.f32 %v222, %v489
    %v491 = vpop.f32.mrb[0].mxu0
    %492 = vmatprep.mubr.bf16.mxu0 0
    %493 = vmatmul.mubr.bf16.gmra.mrb[0].mxu0 %v306
    %v494 = vpop.f32.mrb[0].mxu0
    %v495 = vadd.f32 %v222, %v494
    %v496 = vpop.f32.mrb[0].mxu0
    %v497 = vpop.f32.mrb[0].mxu0
    %v498 = vadd.f32 %v222, %v497
    %v499 = vpop.f32.mrb[0].mxu0
    %500 = vmatprep.mubr.bf16.mxu0 0
    %501 = vmatmul.mubr.bf16.gmra.mrb[0].mxu0 %v307
    %v502 = vpop.f32.mrb[0].mxu0
    %v503 = vadd.f32 %v222, %v502
    %v504 = vpop.f32.mrb[0].mxu0
    %v505 = vpop.f32.mrb[0].mxu0
    %v506 = vadd.f32 %v222, %v505
    %v507 = vpop.f32.mrb[0].mxu0
    %508 = vmatprep.mubr.bf16.mxu0 0
    %509 = vmatmul.mubr.bf16.gmra.mrb[0].mxu0 %v308
    %v510 = vpop.f32.mrb[0].mxu0
    %v511 = vadd.f32 %v222, %v510
    %v512 = vpop.f32.mrb[0].mxu0
    %v513 = vpop.f32.mrb[0].mxu0
    %v514 = vadd.f32 %v222, %v513
    %v515 = vpop.f32.mrb[0].mxu0
    %516 = vmatprep.mubr.bf16.mxu0 0
    %517 = vmatmul.mubr.bf16.gmra.mrb[0].mxu0 %v309
    %v518 = vpop.f32.mrb[0].mxu0
    %v519 = vadd.f32 %v222, %v518
    %v520 = vpop.f32.mrb[0].mxu0
    %v521 = vpop.f32.mrb[0].mxu0
    %v522 = vadd.f32 %v222, %v521
    %v523 = vpop.f32.mrb[0].mxu0
    %524 = vmatprep.mubr.bf16.mxu0 0
    %525 = vmatmul.mubr.bf16.gmra.mrb[0].mxu0 %v310
    %v526 = vpop.f32.mrb[0].mxu0
    %v527 = vadd.f32 %v222, %v526
    %v528 = vpop.f32.mrb[0].mxu0
    %v529 = vpop.f32.mrb[0].mxu0
    %v530 = vadd.f32 %v222, %v529
    %v531 = vpop.f32.mrb[0].mxu0
    %532 = vmatprep.mubr.bf16.mxu0 0
    %533 = vmatmul.mubr.bf16.gmra.mrb[0].mxu0 %v311
    %v534 = vpop.f32.mrb[0].mxu0
    %v535 = vadd.f32 %v222, %v534
    %v536 = vpop.f32.mrb[0].mxu0
    %v537 = vpop.f32.mrb[0].mxu0
    %v538 = vadd.f32 %v222, %v537
    %v539 = vpop.f32.mrb[0].mxu0
    %540 = vmatprep.mubr.bf16.mxu0 0
    %541 = vmatmul.mubr.bf16.gmra.mrb[0].mxu0 %v312
    %v542 = vpop.f32.mrb[0].mxu0
    %v543 = vadd.f32 %v222, %v542
    %v544 = vpop.f32.mrb[0].mxu0
    %v545 = vpop.f32.mrb[0].mxu0
    %v546 = vadd.f32 %v222, %v545
    %v547 = vpop.f32.mrb[0].mxu0
    %548 = vmatprep.mubr.bf16.mxu0 0
    %549 = vmatmul.mubr.bf16.gmra.mrb[0].mxu0 %v313
    %v550 = vpop.f32.mrb[0].mxu0
    %v551 = vadd.f32 %v222, %v550
    %v552 = vpop.f32.mrb[0].mxu0
    %v553 = vpop.f32.mrb[0].mxu0
    %v554 = vadd.f32 %v222, %v553
    %v555 = vpop.f32.mrb[0].mxu0
    %556 = vdwg.mxu0
    %v557 = vmax.f32 %v415, 0.0
    %v558 = vmax.f32 %v418, 0.0
    %v559 = vmax.f32 %v423, 0.0
    %v560 = vmax.f32 %v426, 0.0
    %v561 = vmax.f32 %v431, 0.0
    %v562 = vmax.f32 %v434, 0.0
    %v563 = vmax.f32 %v439, 0.0
    %v564 = vmax.f32 %v442, 0.0
    %v565 = vmax.f32 %v447, 0.0
    %v566 = vmax.f32 %v450, 0.0
    %v567 = vmax.f32 %v455, 0.0
    %v568 = vmax.f32 %v458, 0.0
    %v569 = vmax.f32 %v463, 0.0
    %v570 = vmax.f32 %v466, 0.0
    %v571 = vmax.f32 %v471, 0.0
    %v572 = vmax.f32 %v474, 0.0
    %v573 = vmax.f32 %v479, 0.0
    %v574 = vmax.f32 %v482, 0.0
    %v575 = vmax.f32 %v487, 0.0
    %v576 = vmax.f32 %v490, 0.0
    %v577 = vmax.f32 %v495, 0.0
    %v578 = vmax.f32 %v498, 0.0
    %v579 = vmax.f32 %v503, 0.0
    %v580 = vmax.f32 %v506, 0.0
    %v581 = vmax.f32 %v511, 0.0
    %v582 = vmax.f32 %v514, 0.0
    %v583 = vmax.f32 %v519, 0.0
    %v584 = vmax.f32 %v522, 0.0
    %v585 = vmax.f32 %v527, 0.0
    %v586 = vmax.f32 %v530, 0.0
    %v587 = vmax.f32 %v535, 0.0
    %v588 = vmax.f32 %v538, 0.0
    %v589 = vmax.f32 %v543, 0.0
    %v590 = vmax.f32 %v546, 0.0
    %v591 = vmax.f32 %v551, 0.0
    %v592 = vmax.f32 %v554, 0.0
    %v593 = vpack.c.bf16 %v558, %v557
    %v594 = vpack.c.bf16 %v560, %v559
    %v595 = vpack.c.bf16 %v562, %v561
    %v596 = vpack.c.bf16 %v564, %v563
    %v597 = vpack.c.bf16 %v566, %v565
    %v598 = vpack.c.bf16 %v568, %v567
    %v599 = vpack.c.bf16 %v570, %v569
    %v600 = vpack.c.bf16 %v572, %v571
    %v601 = vpack.c.bf16 %v574, %v573
    %v602 = vpack.c.bf16 %v576, %v575
    %v603 = vpack.c.bf16 %v578, %v577
    %v604 = vpack.c.bf16 %v580, %v579
    %v605 = vpack.c.bf16 %v582, %v581
    %v606 = vpack.c.bf16 %v584, %v583
    %v607 = vpack.c.bf16 %v586, %v585
    %v608 = vpack.c.bf16 %v588, %v587
    %v609 = vpack.c.bf16 %v590, %v589
    %v610 = vpack.c.bf16 %v592, %v591
    %vm614 = vcmask 1043456
    %v615 = vrot.slane %v593, 4
    %v616 = vrot.slane %v594, 4
    %v617 = vsel %vm614, %v615, %v616
    %v618 = vrot.slane %v595, 4
    %v619 = vsel %vm614, %v616, %v618
    %v625 = vrot.slane %v596, 4
    %v626 = vrot.slane %v597, 4
    %v627 = vsel %vm614, %v625, %v626
    %v628 = vrot.slane %v598, 4
    %v629 = vsel %vm614, %v626, %v628
    %v635 = vrot.slane %v599, 4
    %v636 = vrot.slane %v600, 4
    %v637 = vsel %vm614, %v635, %v636
    %v638 = vrot.slane %v601, 4
    %v639 = vsel %vm614, %v636, %v638
    %v645 = vrot.slane %v602, 4
    %v646 = vrot.slane %v603, 4
    %v647 = vsel %vm614, %v645, %v646
    %v648 = vrot.slane %v604, 4
    %v649 = vsel %vm614, %v646, %v648
    %v655 = vrot.slane %v605, 4
    %v656 = vrot.slane %v606, 4
    %v657 = vsel %vm614, %v655, %v656
    %v658 = vrot.slane %v607, 4
    %v659 = vsel %vm614, %v656, %v658
    %v665 = vrot.slane %v608, 4
    %v666 = vrot.slane %v609, 4
    %v667 = vsel %vm614, %v665, %v666
    %v668 = vrot.slane %v610, 4
    %v669 = vsel %vm614, %v666, %v668
    %v672 = vld [vmem:[#allocation6] sm:$0xf]
    %v673 = vld [vmem:[#allocation6 + $0x4] sm:$0xf]
    %v674 = vld [vmem:[#allocation6 + $0x8] sm:$0xf]
    %v675 = vld [vmem:[#allocation6 + $0xc] sm:$0xf]
    %v676 = vld [vmem:[#allocation6 + $0x10] sm:$0xf]
    %v677 = vld [vmem:[#allocation6 + $0x14] sm:$0xf]
    %v678 = vld [vmem:[#allocation6 + $0x18] sm:$0xf]
    %v679 = vld [vmem:[#allocation6 + $0x1c] sm:$0xf]
    %v680 = vld [vmem:[#allocation6 + $0x20] sm:$0xf]
    %v681 = vld [vmem:[#allocation6 + $0x24] sm:$0xf]
    %v682 = vld [vmem:[#allocation6 + $0x28] sm:$0xf]
    %v683 = vld [vmem:[#allocation6 + $0x2c] sm:$0xf]
    %v684 = vld [vmem:[#allocation6 + $0x30] sm:$0xf]
    %v685 = vld [vmem:[#allocation6 + $0x34] sm:$0xf]
    %v686 = vld [vmem:[#allocation6 + $0x38] sm:$0xf]
    %v687 = vld [vmem:[#allocation6 + $0x3c] sm:$0xf]
    %v688 = vld [vmem:[#allocation6 + $0x40] sm:$0xf]
    %v689 = vld [vmem:[#allocation6 + $0x44] sm:$0xf]
    %v690 = vld [vmem:[#allocation6 + $0x48] sm:$0xf]
    %v691 = vld [vmem:[#allocation6 + $0x4c] sm:$0xf]
    %v692 = vld [vmem:[#allocation6 + $0x50] sm:$0xf]
    %v693 = vld [vmem:[#allocation6 + $0x54] sm:$0xf]
    %v694 = vld [vmem:[#allocation6 + $0x58] sm:$0xf]
    %v695 = vld [vmem:[#allocation6 + $0x5c] sm:$0xf]
    %v696 = vld [vmem:[#allocation6 + $0x60] sm:$0xf]
    %v697 = vld [vmem:[#allocation6 + $0x64] sm:$0xf]
    %v698 = vld [vmem:[#allocation6 + $0x68] sm:$0xf]
    %v699 = vld [vmem:[#allocation6 + $0x6c] sm:$0xf]
    %v700 = vld [vmem:[#allocation6 + $0x70] sm:$0xf]
    %v701 = vld [vmem:[#allocation6 + $0x74] sm:$0xf]
    %v702 = vld [vmem:[#allocation6 + $0x78] sm:$0xf]
    %v703 = vld [vmem:[#allocation6 + $0x7c] sm:$0xf]
    %v704 = vld [vmem:[#allocation6 + $0x80] sm:$0xf]
    %v705 = vld [vmem:[#allocation6 + $0x84] sm:$0xf]
    %v706 = vld [vmem:[#allocation6 + $0x88] sm:$0xf]
    %v707 = vld [vmem:[#allocation6 + $0x8c] sm:$0xf]
    %v708 = vld [vmem:[#allocation6 + $0x90] sm:$0xf]
    %v709 = vld [vmem:[#allocation6 + $0x94] sm:$0xf]
    %v710 = vld [vmem:[#allocation6 + $0x98] sm:$0xf]
    %v711 = vld [vmem:[#allocation6 + $0x9c] sm:$0xf]
    %v712 = vld [vmem:[#allocation6 + $0xa0] sm:$0xf]
    %v713 = vld [vmem:[#allocation6 + $0xa4] sm:$0xf]
    %v714 = vld [vmem:[#allocation6 + $0xa8] sm:$0xf]
    %v715 = vld [vmem:[#allocation6 + $0xac] sm:$0xf]
    %v716 = vld [vmem:[#allocation6 + $0xb0] sm:$0xf]
    %v717 = vld [vmem:[#allocation6 + $0xb4] sm:$0xf]
    %v718 = vld [vmem:[#allocation6 + $0xb8] sm:$0xf]
    %v719 = vld [vmem:[#allocation6 + $0xbc] sm:$0xf]
    %v720 = vld [vmem:[#allocation6 + $0xc0] sm:$0xf]
    %v721 = vld [vmem:[#allocation6 + $0xc4] sm:$0xf]
    %v722 = vld [vmem:[#allocation6 + $0xc8] sm:$0xf]
    %v723 = vld [vmem:[#allocation6 + $0xcc] sm:$0xf]
    %v724 = vld [vmem:[#allocation6 + $0xd0] sm:$0xf]
    %v725 = vld [vmem:[#allocation6 + $0xd4] sm:$0xf]
    %v726 = vld [vmem:[#allocation6 + $0xd8] sm:$0xf]
    %v727 = vld [vmem:[#allocation6 + $0xdc] sm:$0xf]
    %v728 = vld [vmem:[#allocation6 + $0xe0] sm:$0xf]
    %v729 = vld [vmem:[#allocation6 + $0xe4] sm:$0xf]
    %v730 = vld [vmem:[#allocation6 + $0xe8] sm:$0xf]
    %v731 = vld [vmem:[#allocation6 + $0xec] sm:$0xf]
    %v732 = vld [vmem:[#allocation6 + $0xf0] sm:$0xf]
    %v733 = vld [vmem:[#allocation6 + $0xf4] sm:$0xf]
    %v734 = vld [vmem:[#allocation6 + $0xf8] sm:$0xf]
    %v735 = vld [vmem:[#allocation6 + $0xfc] sm:$0xf]
    %v736 = vld [vmem:[#allocation6 + $0x100] sm:$0xf]
    %v737 = vld [vmem:[#allocation6 + $0x104] sm:$0xf]
    %v738 = vld [vmem:[#allocation6 + $0x108] sm:$0xf]
    %v739 = vld [vmem:[#allocation6 + $0x10c] sm:$0xf]
    %v740 = vld [vmem:[#allocation6 + $0x110] sm:$0xf]
    %v741 = vld [vmem:[#allocation6 + $0x114] sm:$0xf]
    %v742 = vld [vmem:[#allocation6 + $0x118] sm:$0xf]
    %v743 = vld [vmem:[#allocation6 + $0x11c] sm:$0xf]
    %v744 = vld [vmem:[#allocation6 + $0x120] sm:$0xf]
    %v745 = vld [vmem:[#allocation6 + $0x124] sm:$0xf]
    %v746 = vld [vmem:[#allocation6 + $0x128] sm:$0xf]
    %v747 = vld [vmem:[#allocation6 + $0x12c] sm:$0xf]
    %v748 = vld [vmem:[#allocation6 + $0x130] sm:$0xf]
    %v749 = vld [vmem:[#allocation6 + $0x134] sm:$0xf]
    %v750 = vld [vmem:[#allocation6 + $0x138] sm:$0xf]
    %v751 = vld [vmem:[#allocation6 + $0x13c] sm:$0xf]
    %v752 = vld [vmem:[#allocation6 + $0x140] sm:$0xf]
    %v753 = vld [vmem:[#allocation6 + $0x144] sm:$0xf]
    %v754 = vld [vmem:[#allocation6 + $0x148] sm:$0xf]
    %v755 = vld [vmem:[#allocation6 + $0x14c] sm:$0xf]
    %v756 = vld [vmem:[#allocation6 + $0x150] sm:$0xf]
    %v757 = vld [vmem:[#allocation6 + $0x154] sm:$0xf]
    %v758 = vld [vmem:[#allocation6 + $0x158] sm:$0xf]
    %v759 = vld [vmem:[#allocation6 + $0x15c] sm:$0xf]
    %v760 = vld [vmem:[#allocation6 + $0x160] sm:$0xf]
    %v761 = vld [vmem:[#allocation6 + $0x164] sm:$0xf]
    %v762 = vld [vmem:[#allocation6 + $0x168] sm:$0xf]
    %v763 = vld [vmem:[#allocation6 + $0x16c] sm:$0xf]
    %v764 = vld [vmem:[#allocation6 + $0x170] sm:$0xf]
    %v765 = vld [vmem:[#allocation6 + $0x174] sm:$0xf]
    %v766 = vld [vmem:[#allocation6 + $0x178] sm:$0xf]
    %v767 = vld [vmem:[#allocation6 + $0x17c] sm:$0xf]
    %v768 = vld [vmem:[#allocation6 + $0x180] sm:$0xf]
    %v769 = vld [vmem:[#allocation6 + $0x184] sm:$0xf]
    %v770 = vld [vmem:[#allocation6 + $0x188] sm:$0xf]
    %v771 = vld [vmem:[#allocation6 + $0x18c] sm:$0xf]
    %v772 = vld [vmem:[#allocation6 + $0x190] sm:$0xf]
    %v773 = vld [vmem:[#allocation6 + $0x194] sm:$0xf]
    %v774 = vld [vmem:[#allocation6 + $0x198] sm:$0xf]
    %v775 = vld [vmem:[#allocation6 + $0x19c] sm:$0xf]
    %v776 = vld [vmem:[#allocation6 + $0x1a0] sm:$0xf]
    %v777 = vld [vmem:[#allocation6 + $0x1a4] sm:$0xf]
    %v778 = vld [vmem:[#allocation6 + $0x1a8] sm:$0xf]
    %v779 = vld [vmem:[#allocation6 + $0x1ac] sm:$0xf]
    %v780 = vld [vmem:[#allocation6 + $0x1b0] sm:$0xf]
    %v781 = vld [vmem:[#allocation6 + $0x1b4] sm:$0xf]
    %v782 = vld [vmem:[#allocation6 + $0x1b8] sm:$0xf]
    %v783 = vld [vmem:[#allocation6 + $0x1bc] sm:$0xf]
    %v784 = vld [vmem:[#allocation6 + $0x1c0] sm:$0xf]
    %v785 = vld [vmem:[#allocation6 + $0x1c4] sm:$0xf]
    %v786 = vld [vmem:[#allocation6 + $0x1c8] sm:$0xf]
    %v787 = vld [vmem:[#allocation6 + $0x1cc] sm:$0xf]
    %v788 = vld [vmem:[#allocation6 + $0x1d0] sm:$0xf]
    %v789 = vld [vmem:[#allocation6 + $0x1d4] sm:$0xf]
    %v790 = vld [vmem:[#allocation6 + $0x1d8] sm:$0xf]
    %v791 = vld [vmem:[#allocation6 + $0x1dc] sm:$0xf]
    %v792 = vld [vmem:[#allocation6 + $0x1e0] sm:$0xf]
    %v793 = vld [vmem:[#allocation6 + $0x1e4] sm:$0xf]
    %v794 = vld [vmem:[#allocation6 + $0x1e8] sm:$0xf]
    %v795 = vld [vmem:[#allocation6 + $0x1ec] sm:$0xf]
    %v796 = vld [vmem:[#allocation6 + $0x1f0] sm:$0xf]
    %v797 = vld [vmem:[#allocation6 + $0x1f4] sm:$0xf]
    %v798 = vld [vmem:[#allocation6 + $0x1f8] sm:$0xf]
    %v799 = vld [vmem:[#allocation6 + $0x1fc] sm:$0xf]
    %v800 = vld [vmem:[#allocation6 + $0x200] sm:$0xf]
    %v801 = vld [vmem:[#allocation6 + $0x204] sm:$0xf]
    %v802 = vld [vmem:[#allocation6 + $0x208] sm:$0xf]
    %v803 = vld [vmem:[#allocation6 + $0x20c] sm:$0xf]
    %v804 = vld [vmem:[#allocation6 + $0x210] sm:$0xf]
    %v805 = vld [vmem:[#allocation6 + $0x214] sm:$0xf]
    %v806 = vld [vmem:[#allocation6 + $0x218] sm:$0xf]
    %v807 = vld [vmem:[#allocation6 + $0x21c] sm:$0xf]
    %v808 = vld [vmem:[#allocation6 + $0x220] sm:$0xf]
    %v809 = vld [vmem:[#allocation6 + $0x224] sm:$0xf]
    %v810 = vld [vmem:[#allocation6 + $0x228] sm:$0xf]
    %v811 = vld [vmem:[#allocation6 + $0x22c] sm:$0xf]
    %v812 = vld [vmem:[#allocation6 + $0x230] sm:$0xf]
    %v813 = vld [vmem:[#allocation6 + $0x234] sm:$0xf]
    %v814 = vld [vmem:[#allocation6 + $0x238] sm:$0xf]
    %v815 = vld [vmem:[#allocation6 + $0x23c] sm:$0xf]
    %v816 = vld [vmem:[#allocation7] sm:$0x1]
    %v818 = vlaneseq
    %v819 = vshrl.u32 %v818, 7
    %v820 = vsub.s32 0, %v819
    %v821 = vrot.slane %v816, %v820
    %v967 = vunpack.c.l.b16 %v672
    %v968 = vunpack.c.l.b16 %v673
    %v969 = vunpack.c.l.b16 %v674
    %v970 = vunpack.c.l.b16 %v675
    %v971 = vunpack.c.l.b16 %v676
    %v972 = vunpack.c.l.b16 %v677
    %v973 = vunpack.c.l.b16 %v678
    %v974 = vunpack.c.l.b16 %v679
    %v975 = vunpack.c.l.b16 %v680
    %v976 = vunpack.c.l.b16 %v681
    %v977 = vunpack.c.l.b16 %v682
    %v978 = vunpack.c.l.b16 %v683
    %v979 = vunpack.c.l.b16 %v684
    %v980 = vunpack.c.l.b16 %v685
    %v981 = vunpack.c.l.b16 %v686
    %v982 = vunpack.c.l.b16 %v687
    %v983 = vunpack.c.l.b16 %v688
    %v984 = vunpack.c.l.b16 %v689
    %v985 = vunpack.c.l.b16 %v690
    %v986 = vunpack.c.l.b16 %v691
    %v987 = vunpack.c.l.b16 %v692
    %v988 = vunpack.c.l.b16 %v693
    %v989 = vunpack.c.l.b16 %v694
    %v990 = vunpack.c.l.b16 %v695
    %v991 = vunpack.c.l.b16 %v696
    %v992 = vunpack.c.l.b16 %v697
    %v993 = vunpack.c.l.b16 %v698
    %v994 = vunpack.c.l.b16 %v699
    %v995 = vunpack.c.l.b16 %v700
    %v996 = vunpack.c.l.b16 %v701
    %v997 = vunpack.c.l.b16 %v702
    %v998 = vunpack.c.l.b16 %v703
    %v999 = vunpack.c.l.b16 %v704
    %v1000 = vunpack.c.l.b16 %v705
    %v1001 = vunpack.c.l.b16 %v706
    %v1002 = vunpack.c.l.b16 %v707
    %v1003 = vunpack.c.l.b16 %v708
    %v1004 = vunpack.c.l.b16 %v709
    %v1005 = vunpack.c.l.b16 %v710
    %v1006 = vunpack.c.l.b16 %v711
    %v1007 = vunpack.c.l.b16 %v712
    %v1008 = vunpack.c.l.b16 %v713
    %v1009 = vunpack.c.l.b16 %v714
    %v1010 = vunpack.c.l.b16 %v715
    %v1011 = vunpack.c.l.b16 %v716
    %v1012 = vunpack.c.l.b16 %v717
    %v1013 = vunpack.c.l.b16 %v718
    %v1014 = vunpack.c.l.b16 %v719
    %v1015 = vunpack.c.l.b16 %v720
    %v1016 = vunpack.c.l.b16 %v721
    %v1017 = vunpack.c.l.b16 %v722
    %v1018 = vunpack.c.l.b16 %v723
    %v1019 = vunpack.c.l.b16 %v724
    %v1020 = vunpack.c.l.b16 %v725
    %v1021 = vunpack.c.l.b16 %v726
    %v1022 = vunpack.c.l.b16 %v727
    %v1023 = vunpack.c.l.b16 %v728
    %v1024 = vunpack.c.l.b16 %v729
    %v1025 = vunpack.c.l.b16 %v730
    %v1026 = vunpack.c.l.b16 %v731
    %v1027 = vunpack.c.l.b16 %v732
    %v1028 = vunpack.c.l.b16 %v733
    %v1029 = vunpack.c.l.b16 %v734
    %v1030 = vunpack.c.l.b16 %v735
    %v1031 = vunpack.c.l.b16 %v736
    %v1032 = vunpack.c.l.b16 %v737
    %v1033 = vunpack.c.l.b16 %v738
    %v1034 = vunpack.c.l.b16 %v739
    %v1035 = vunpack.c.l.b16 %v740
    %v1036 = vunpack.c.l.b16 %v741
    %v1037 = vunpack.c.l.b16 %v742
    %v1038 = vunpack.c.l.b16 %v743
    %v1039 = vunpack.c.l.b16 %v744
    %v1040 = vunpack.c.l.b16 %v745
    %v1041 = vunpack.c.l.b16 %v746
    %v1042 = vunpack.c.l.b16 %v747
    %v1043 = vunpack.c.l.b16 %v748
    %v1044 = vunpack.c.l.b16 %v749
    %v1045 = vunpack.c.l.b16 %v750
    %v1046 = vunpack.c.l.b16 %v751
    %v1047 = vunpack.c.l.b16 %v752
    %v1048 = vunpack.c.l.b16 %v753
    %v1049 = vunpack.c.l.b16 %v754
    %v1050 = vunpack.c.l.b16 %v755
    %v1051 = vunpack.c.l.b16 %v756
    %v1052 = vunpack.c.l.b16 %v757
    %v1053 = vunpack.c.l.b16 %v758
    %v1054 = vunpack.c.l.b16 %v759
    %v1055 = vunpack.c.l.b16 %v760
    %v1056 = vunpack.c.l.b16 %v761
    %v1057 = vunpack.c.l.b16 %v762
    %v1058 = vunpack.c.l.b16 %v763
    %v1059 = vunpack.c.l.b16 %v764
    %v1060 = vunpack.c.l.b16 %v765
    %v1061 = vunpack.c.l.b16 %v766
    %v1062 = vunpack.c.l.b16 %v767
    %v1063 = vunpack.c.l.b16 %v768
    %v1064 = vunpack.c.l.b16 %v769
    %v1065 = vunpack.c.l.b16 %v770
    %v1066 = vunpack.c.l.b16 %v771
    %v1067 = vunpack.c.l.b16 %v772
    %v1068 = vunpack.c.l.b16 %v773
    %v1069 = vunpack.c.l.b16 %v774
    %v1070 = vunpack.c.l.b16 %v775
    %v1071 = vunpack.c.l.b16 %v776
    %v1072 = vunpack.c.l.b16 %v777
    %v1073 = vunpack.c.l.b16 %v778
    %v1074 = vunpack.c.l.b16 %v779
    %v1075 = vunpack.c.l.b16 %v780
    %v1076 = vunpack.c.l.b16 %v781
    %v1077 = vunpack.c.l.b16 %v782
    %v1078 = vunpack.c.l.b16 %v783
    %v1079 = vunpack.c.l.b16 %v784
    %v1080 = vunpack.c.l.b16 %v785
    %v1081 = vunpack.c.l.b16 %v786
    %v1082 = vunpack.c.l.b16 %v787
    %v1083 = vunpack.c.l.b16 %v788
    %v1084 = vunpack.c.l.b16 %v789
    %v1085 = vunpack.c.l.b16 %v790
    %v1086 = vunpack.c.l.b16 %v791
    %v1087 = vunpack.c.l.b16 %v792
    %v1088 = vunpack.c.l.b16 %v793
    %v1089 = vunpack.c.l.b16 %v794
    %v1090 = vunpack.c.l.b16 %v795
    %v1091 = vunpack.c.l.b16 %v796
    %v1092 = vunpack.c.l.b16 %v797
    %v1093 = vunpack.c.l.b16 %v798
    %v1094 = vunpack.c.l.b16 %v799
    %v1095 = vunpack.c.l.b16 %v800
    %v1096 = vunpack.c.l.b16 %v801
    %v1097 = vunpack.c.l.b16 %v802
    %v1098 = vunpack.c.l.b16 %v803
    %v1099 = vunpack.c.l.b16 %v804
    %v1100 = vunpack.c.l.b16 %v805
    %v1101 = vunpack.c.l.b16 %v806
    %v1102 = vunpack.c.l.b16 %v807
    %v1103 = vunpack.c.l.b16 %v808
    %v1104 = vunpack.c.l.b16 %v809
    %v1105 = vunpack.c.l.b16 %v810
    %v1106 = vunpack.c.l.b16 %v811
    %v1107 = vunpack.c.l.b16 %v812
    %v1108 = vunpack.c.l.b16 %v813
    %v1109 = vunpack.c.l.b16 %v814
    %v1110 = vunpack.c.l.b16 %v815
    %v1111 = vpack.c.b16 %v968, %v967
    %v1112 = vpack.c.b16 %v970, %v969
    %v1113 = vpack.c.b16 %v972, %v971
    %v1114 = vpack.c.b16 %v974, %v973
    %v1115 = vpack.c.b16 %v976, %v975
    %v1116 = vpack.c.b16 %v978, %v977
    %v1117 = vpack.c.b16 %v980, %v979
    %v1118 = vpack.c.b16 %v982, %v981
    %v1119 = vpack.c.b16 %v984, %v983
    %v1120 = vpack.c.b16 %v986, %v985
    %v1121 = vpack.c.b16 %v988, %v987
    %v1122 = vpack.c.b16 %v990, %v989
    %v1123 = vpack.c.b16 %v992, %v991
    %v1124 = vpack.c.b16 %v994, %v993
    %v1125 = vpack.c.b16 %v996, %v995
    %v1126 = vpack.c.b16 %v998, %v997
    %v1127 = vpack.c.b16 %v1000, %v999
    %v1128 = vpack.c.b16 %v1002, %v1001
    %v1129 = vpack.c.b16 %v1004, %v1003
    %v1130 = vpack.c.b16 %v1006, %v1005
    %v1131 = vpack.c.b16 %v1008, %v1007
    %v1132 = vpack.c.b16 %v1010, %v1009
    %v1133 = vpack.c.b16 %v1012, %v1011
    %v1134 = vpack.c.b16 %v1014, %v1013
    %v1135 = vpack.c.b16 %v1016, %v1015
    %v1136 = vpack.c.b16 %v1018, %v1017
    %v1137 = vpack.c.b16 %v1020, %v1019
    %v1138 = vpack.c.b16 %v1022, %v1021
    %v1139 = vpack.c.b16 %v1024, %v1023
    %v1140 = vpack.c.b16 %v1026, %v1025
    %v1141 = vpack.c.b16 %v1028, %v1027
    %v1142 = vpack.c.b16 %v1030, %v1029
    %v1143 = vpack.c.b16 %v1032, %v1031
    %v1144 = vpack.c.b16 %v1034, %v1033
    %v1145 = vpack.c.b16 %v1036, %v1035
    %v1146 = vpack.c.b16 %v1038, %v1037
    %v1147 = vpack.c.b16 %v1040, %v1039
    %v1148 = vpack.c.b16 %v1042, %v1041
    %v1149 = vpack.c.b16 %v1044, %v1043
    %v1150 = vpack.c.b16 %v1046, %v1045
    %v1151 = vpack.c.b16 %v1048, %v1047
    %v1152 = vpack.c.b16 %v1050, %v1049
    %v1153 = vpack.c.b16 %v1052, %v1051
    %v1154 = vpack.c.b16 %v1054, %v1053
    %v1155 = vpack.c.b16 %v1056, %v1055
    %v1156 = vpack.c.b16 %v1058, %v1057
    %v1157 = vpack.c.b16 %v1060, %v1059
    %v1158 = vpack.c.b16 %v1062, %v1061
    %v1159 = vpack.c.b16 %v1064, %v1063
    %v1160 = vpack.c.b16 %v1066, %v1065
    %v1161 = vpack.c.b16 %v1068, %v1067
    %v1162 = vpack.c.b16 %v1070, %v1069
    %v1163 = vpack.c.b16 %v1072, %v1071
    %v1164 = vpack.c.b16 %v1074, %v1073
    %v1165 = vpack.c.b16 %v1076, %v1075
    %v1166 = vpack.c.b16 %v1078, %v1077
    %v1167 = vpack.c.b16 %v1080, %v1079
    %v1168 = vpack.c.b16 %v1082, %v1081
    %v1169 = vpack.c.b16 %v1084, %v1083
    %v1170 = vpack.c.b16 %v1086, %v1085
    %v1171 = vpack.c.b16 %v1088, %v1087
    %v1172 = vpack.c.b16 %v1090, %v1089
    %v1173 = vpack.c.b16 %v1092, %v1091
    %v1174 = vpack.c.b16 %v1094, %v1093
    %v1175 = vpack.c.b16 %v1096, %v1095
    %v1176 = vpack.c.b16 %v1098, %v1097
    %v1177 = vpack.c.b16 %v1100, %v1099
    %v1178 = vpack.c.b16 %v1102, %v1101
    %v1179 = vpack.c.b16 %v1104, %v1103
    %v1180 = vpack.c.b16 %v1106, %v1105
    %v1181 = vpack.c.b16 %v1108, %v1107
    %v1182 = vpack.c.b16 %v1110, %v1109
    %1255 = vmatprep.subr.bf16.mxu0 0
    %1256 = vmatpush1.bf16.msra.mxu0 %v1111
    %1257 = vmatprep.subr.bf16.mxu0 0
    %1258 = vmatpush1.bf16.msra.mxu0 %v1112
    %1259 = vmatprep.subr.bf16.mxu0 0
    %1260 = vmatpush1.bf16.msra.mxu0 %v1113
    %1261 = vmatprep.subr.bf16.mxu0 0
    %1262 = vmatpush1.bf16.msra.mxu0 %v1114
    %1263 = vmatprep.subr.bf16.mxu0 0
    %1264 = vmatpush1.bf16.msra.mxu0 %v1115
    %1265 = vmatprep.subr.bf16.mxu0 0
    %1266 = vmatpush1.bf16.msra.mxu0 %v1116
    %1267 = vmatprep.subr.bf16.mxu0 0
    %1268 = vmatpush1.bf16.msra.mxu0 %v1117
    %1269 = vmatprep.subr.bf16.mxu0 0
    %1270 = vmatpush1.bf16.msra.mxu0 %v1118
    %1271 = vmatprep.subr.bf16.mxu0 0
    %1272 = vmatpush1.bf16.msra.mxu0 %v1119
    %1273 = vmatprep.subr.bf16.mxu0 0
    %1274 = vmatpush1.bf16.msra.mxu0 %v1120
    %1275 = vmatprep.subr.bf16.mxu0 0
    %1276 = vmatpush1.bf16.msra.mxu0 %v1121
    %1277 = vmatprep.subr.bf16.mxu0 0
    %1278 = vmatpush1.bf16.msra.mxu0 %v1122
    %1279 = vmatprep.subr.bf16.mxu0 0
    %1280 = vmatpush1.bf16.msra.mxu0 %v1123
    %1281 = vmatprep.subr.bf16.mxu0 0
    %1282 = vmatpush1.bf16.msra.mxu0 %v1124
    %1283 = vmatprep.subr.bf16.mxu0 0
    %1284 = vmatpush1.bf16.msra.mxu0 %v1125
    %1285 = vmatprep.subr.bf16.mxu0 0
    %1286 = vmatpush1.bf16.msra.mxu0 %v1126
    %1287 = vmatprep.mubr.bf16.mxu0 %v617
    %1288 = vmatmul.mubr.bf16.gmra.mrb[0].mxu0 %v593
    %v1289 = vpop.f32.mrb[0].mxu0
    %v1290 = vadd.f32 %v821, %v1289
    %v1291 = vpop.f32.mrb[0].mxu0
    %v1292 = vpop.f32.mrb[0].mxu0
    %v1293 = vadd.f32 %v821, %v1292
    %v1294 = vpop.f32.mrb[0].mxu0
    %1295 = vmatprep.mubr.bf16.mxu0 %v619
    %1296 = vmatmul.mubr.bf16.gmra.mrb[0].mxu0 %v594
    %v1297 = vpop.f32.mrb[0].mxu0
    %v1298 = vadd.f32 %v821, %v1297
    %v1299 = vpop.f32.mrb[0].mxu0
    %v1300 = vpop.f32.mrb[0].mxu0
    %v1301 = vadd.f32 %v821, %v1300
    %v1302 = vpop.f32.mrb[0].mxu0
    %1303 = vmatprep.mubr.bf16.mxu0 %v627
    %1304 = vmatmul.mubr.bf16.gmra.mrb[0].mxu0 %v596
    %v1305 = vpop.f32.mrb[0].mxu0
    %v1306 = vadd.f32 %v821, %v1305
    %v1307 = vpop.f32.mrb[0].mxu0
    %v1308 = vpop.f32.mrb[0].mxu0
    %v1309 = vadd.f32 %v821, %v1308
    %v1310 = vpop.f32.mrb[0].mxu0
    %1311 = vmatprep.mubr.bf16.mxu0 %v629
    %1312 = vmatmul.mubr.bf16.gmra.mrb[0].mxu0 %v597
    %v1313 = vpop.f32.mrb[0].mxu0
    %v1314 = vadd.f32 %v821, %v1313
    %v1315 = vpop.f32.mrb[0].mxu0
    %v1316 = vpop.f32.mrb[0].mxu0
    %v1317 = vadd.f32 %v821, %v1316
    %v1318 = vpop.f32.mrb[0].mxu0
    %1319 = vmatprep.mubr.bf16.mxu0 %v637
    %1320 = vmatmul.mubr.bf16.gmra.mrb[0].mxu0 %v599
    %v1321 = vpop.f32.mrb[0].mxu0
    %v1322 = vadd.f32 %v821, %v1321
    %v1323 = vpop.f32.mrb[0].mxu0
    %v1324 = vpop.f32.mrb[0].mxu0
    %v1325 = vadd.f32 %v821, %v1324
    %v1326 = vpop.f32.mrb[0].mxu0
    %1327 = vmatprep.mubr.bf16.mxu0 %v639
    %1328 = vmatmul.mubr.bf16.gmra.mrb[0].mxu0 %v600
    %v1329 = vpop.f32.mrb[0].mxu0
    %v1330 = vadd.f32 %v821, %v1329
    %v1331 = vpop.f32.mrb[0].mxu0
    %v1332 = vpop.f32.mrb[0].mxu0
    %v1333 = vadd.f32 %v821, %v1332
    %v1334 = vpop.f32.mrb[0].mxu0
    %1335 = vmatprep.mubr.bf16.mxu0 %v647
    %1336 = vmatmul.mubr.bf16.gmra.mrb[0].mxu0 %v602
    %v1337 = vpop.f32.mrb[0].mxu0
    %v1338 = vadd.f32 %v821, %v1337
    %v1339 = vpop.f32.mrb[0].mxu0
    %v1340 = vpop.f32.mrb[0].mxu0
    %v1341 = vadd.f32 %v821, %v1340
    %v1342 = vpop.f32.mrb[0].mxu0
    %1343 = vmatprep.mubr.bf16.mxu0 %v649
    %1344 = vmatmul.mubr.bf16.gmra.mrb[0].mxu0 %v603
    %v1345 = vpop.f32.mrb[0].mxu0
    %v1346 = vadd.f32 %v821, %v1345
    %v1347 = vpop.f32.mrb[0].mxu0
    %v1348 = vpop.f32.mrb[0].mxu0
    %v1349 = vadd.f32 %v821, %v1348
    %v1350 = vpop.f32.mrb[0].mxu0
    %1351 = vdwg.mxu0
    %1352 = vmatprep.subr.bf16.mxu0 0
    %1353 = vmatpush1.bf16.msra.mxu0 %v1127
    %1354 = vmatprep.subr.bf16.mxu0 0
    %1355 = vmatpush1.bf16.msra.mxu0 %v1128
    %1356 = vmatprep.subr.bf16.mxu0 0
    %1357 = vmatpush1.bf16.msra.mxu0 %v1129
    %1358 = vmatprep.subr.bf16.mxu0 0
    %1359 = vmatpush1.bf16.msra.mxu0 %v1130
    %1360 = vmatprep.subr.bf16.mxu0 0
    %1361 = vmatpush1.bf16.msra.mxu0 %v1131
    %1362 = vmatprep.subr.bf16.mxu0 0
    %1363 = vmatpush1.bf16.msra.mxu0 %v1132
    %1364 = vmatprep.subr.bf16.mxu0 0
    %1365 = vmatpush1.bf16.msra.mxu0 %v1133
    %1366 = vmatprep.subr.bf16.mxu0 0
    %1367 = vmatpush1.bf16.msra.mxu0 %v1134
    %1368 = vmatprep.subr.bf16.mxu0 0
    %1369 = vmatpush1.bf16.msra.mxu0 %v1135
    %1370 = vmatprep.subr.bf16.mxu0 0
    %1371 = vmatpush1.bf16.msra.mxu0 %v1136
    %1372 = vmatprep.subr.bf16.mxu0 0
    %1373 = vmatpush1.bf16.msra.mxu0 %v1137
    %1374 = vmatprep.subr.bf16.mxu0 0
    %1375 = vmatpush1.bf16.msra.mxu0 %v1138
    %1376 = vmatprep.subr.bf16.mxu0 0
    %1377 = vmatpush1.bf16.msra.mxu0 %v1139
    %1378 = vmatprep.subr.bf16.mxu0 0
    %1379 = vmatpush1.bf16.msra.mxu0 %v1140
    %1380 = vmatprep.subr.bf16.mxu0 0
    %1381 = vmatpush1.bf16.msra.mxu0 %v1141
    %1382 = vmatprep.subr.bf16.mxu0 0
    %1383 = vmatpush1.bf16.msra.mxu0 %v1142
    %1384 = vmatprep.mubr.bf16.mxu0 %v596
    %1385 = vmatmul.mubr.bf16.gmra.mrb[0].mxu0 %v594
    %v1386 = vpop.f32.mrb[0].mxu0
    %v1387 = vadd.f32 %v1290, %v1386
    %v1388 = vpop.f32.mrb[0].mxu0
    %v1389 = vpop.f32.mrb[0].mxu0
    %v1390 = vadd.f32 %v1293, %v1389
    %v1391 = vpop.f32.mrb[0].mxu0
    %1392 = vmatprep.mubr.bf16.mxu0 %v597
    %1393 = vmatmul.mubr.bf16.gmra.mrb[0].mxu0 %v595
    %v1394 = vpop.f32.mrb[0].mxu0
    %v1395 = vadd.f32 %v1298, %v1394
    %v1396 = vpop.f32.mrb[0].mxu0
    %v1397 = vpop.f32.mrb[0].mxu0
    %v1398 = vadd.f32 %v1301, %v1397
    %v1399 = vpop.f32.mrb[0].mxu0
    %1400 = vmatprep.mubr.bf16.mxu0 %v599
    %1401 = vmatmul.mubr.bf16.gmra.mrb[0].mxu0 %v597
    %v1402 = vpop.f32.mrb[0].mxu0
    %v1403 = vadd.f32 %v1306, %v1402
    %v1404 = vpop.f32.mrb[0].mxu0
    %v1405 = vpop.f32.mrb[0].mxu0
    %v1406 = vadd.f32 %v1309, %v1405
    %v1407 = vpop.f32.mrb[0].mxu0
    %1408 = vmatprep.mubr.bf16.mxu0 %v600
    %1409 = vmatmul.mubr.bf16.gmra.mrb[0].mxu0 %v598
    %v1410 = vpop.f32.mrb[0].mxu0
    %v1411 = vadd.f32 %v1314, %v1410
    %v1412 = vpop.f32.mrb[0].mxu0
    %v1413 = vpop.f32.mrb[0].mxu0
    %v1414 = vadd.f32 %v1317, %v1413
    %v1415 = vpop.f32.mrb[0].mxu0
    %1416 = vmatprep.mubr.bf16.mxu0 %v602
    %1417 = vmatmul.mubr.bf16.gmra.mrb[0].mxu0 %v600
    %v1418 = vpop.f32.mrb[0].mxu0
    %v1419 = vadd.f32 %v1322, %v1418
    %v1420 = vpop.f32.mrb[0].mxu0
    %v1421 = vpop.f32.mrb[0].mxu0
    %v1422 = vadd.f32 %v1325, %v1421
    %v1423 = vpop.f32.mrb[0].mxu0
    %1424 = vmatprep.mubr.bf16.mxu0 %v603
    %1425 = vmatmul.mubr.bf16.gmra.mrb[0].mxu0 %v601
    %v1426 = vpop.f32.mrb[0].mxu0
    %v1427 = vadd.f32 %v1330, %v1426
    %v1428 = vpop.f32.mrb[0].mxu0
    %v1429 = vpop.f32.mrb[0].mxu0
    %v1430 = vadd.f32 %v1333, %v1429
    %v1431 = vpop.f32.mrb[0].mxu0
    %1432 = vmatprep.mubr.bf16.mxu0 %v605
    %1433 = vmatmul.mubr.bf16.gmra.mrb[0].mxu0 %v603
    %v1434 = vpop.f32.mrb[0].mxu0
    %v1435 = vadd.f32 %v1338, %v1434
    %v1436 = vpop.f32.mrb[0].mxu0
    %v1437 = vpop.f32.mrb[0].mxu0
    %v1438 = vadd.f32 %v1341, %v1437
    %v1439 = vpop.f32.mrb[0].mxu0
    %1440 = vmatprep.mubr.bf16.mxu0 %v606
    %1441 = vmatmul.mubr.bf16.gmra.mrb[0].mxu0 %v604
    %v1442 = vpop.f32.mrb[0].mxu0
    %v1443 = vadd.f32 %v1346, %v1442
    %v1444 = vpop.f32.mrb[0].mxu0
    %v1445 = vpop.f32.mrb[0].mxu0
    %v1446 = vadd.f32 %v1349, %v1445
    %v1447 = vpop.f32.mrb[0].mxu0
    %1448 = vdwg.mxu0
    %1449 = vmatprep.subr.bf16.mxu0 0
    %1450 = vmatpush1.bf16.msra.mxu0 %v1143
    %1451 = vmatprep.subr.bf16.mxu0 0
    %1452 = vmatpush1.bf16.msra.mxu0 %v1144
    %1453 = vmatprep.subr.bf16.mxu0 0
    %1454 = vmatpush1.bf16.msra.mxu0 %v1145
    %1455 = vmatprep.subr.bf16.mxu0 0
    %1456 = vmatpush1.bf16.msra.mxu0 %v1146
    %1457 = vmatprep.subr.bf16.mxu0 0
    %1458 = vmatpush1.bf16.msra.mxu0 %v1147
    %1459 = vmatprep.subr.bf16.mxu0 0
    %1460 = vmatpush1.bf16.msra.mxu0 %v1148
    %1461 = vmatprep.subr.bf16.mxu0 0
    %1462 = vmatpush1.bf16.msra.mxu0 %v1149
    %1463 = vmatprep.subr.bf16.mxu0 0
    %1464 = vmatpush1.bf16.msra.mxu0 %v1150
    %1465 = vmatprep.subr.bf16.mxu0 0
    %1466 = vmatpush1.bf16.msra.mxu0 %v1151
    %1467 = vmatprep.subr.bf16.mxu0 0
    %1468 = vmatpush1.bf16.msra.mxu0 %v1152
    %1469 = vmatprep.subr.bf16.mxu0 0
    %1470 = vmatpush1.bf16.msra.mxu0 %v1153
    %1471 = vmatprep.subr.bf16.mxu0 0
    %1472 = vmatpush1.bf16.msra.mxu0 %v1154
    %1473 = vmatprep.subr.bf16.mxu0 0
    %1474 = vmatpush1.bf16.msra.mxu0 %v1155
    %1475 = vmatprep.subr.bf16.mxu0 0
    %1476 = vmatpush1.bf16.msra.mxu0 %v1156
    %1477 = vmatprep.subr.bf16.mxu0 0
    %1478 = vmatpush1.bf16.msra.mxu0 %v1157
    %1479 = vmatprep.subr.bf16.mxu0 0
    %1480 = vmatpush1.bf16.msra.mxu0 %v1158
    %1481 = vmatprep.mubr.bf16.mxu0 %v597
    %1482 = vmatmul.mubr.bf16.gmra.mrb[0].mxu0 %v627
    %v1483 = vpop.f32.mrb[0].mxu0
    %v1484 = vadd.f32 %v1387, %v1483
    %v1485 = vpop.f32.mrb[0].mxu0
    %v1486 = vpop.f32.mrb[0].mxu0
    %v1487 = vadd.f32 %v1390, %v1486
    %v1488 = vpop.f32.mrb[0].mxu0
    %1489 = vmatprep.mubr.bf16.mxu0 %v598
    %1490 = vmatmul.mubr.bf16.gmra.mrb[0].mxu0 %v629
    %v1491 = vpop.f32.mrb[0].mxu0
    %v1492 = vadd.f32 %v1395, %v1491
    %v1493 = vpop.f32.mrb[0].mxu0
    %v1494 = vpop.f32.mrb[0].mxu0
    %v1495 = vadd.f32 %v1398, %v1494
    %v1496 = vpop.f32.mrb[0].mxu0
    %1497 = vmatprep.mubr.bf16.mxu0 %v600
    %1498 = vmatmul.mubr.bf16.gmra.mrb[0].mxu0 %v637
    %v1499 = vpop.f32.mrb[0].mxu0
    %v1500 = vadd.f32 %v1403, %v1499
    %v1501 = vpop.f32.mrb[0].mxu0
    %v1502 = vpop.f32.mrb[0].mxu0
    %v1503 = vadd.f32 %v1406, %v1502
    %v1504 = vpop.f32.mrb[0].mxu0
    %1505 = vmatprep.mubr.bf16.mxu0 %v601
    %1506 = vmatmul.mubr.bf16.gmra.mrb[0].mxu0 %v639
    %v1507 = vpop.f32.mrb[0].mxu0
    %v1508 = vadd.f32 %v1411, %v1507
    %v1509 = vpop.f32.mrb[0].mxu0
    %v1510 = vpop.f32.mrb[0].mxu0
    %v1511 = vadd.f32 %v1414, %v1510
    %v1512 = vpop.f32.mrb[0].mxu0
    %1513 = vmatprep.mubr.bf16.mxu0 %v603
    %1514 = vmatmul.mubr.bf16.gmra.mrb[0].mxu0 %v647
    %v1515 = vpop.f32.mrb[0].mxu0
    %v1516 = vadd.f32 %v1419, %v1515
    %v1517 = vpop.f32.mrb[0].mxu0
    %v1518 = vpop.f32.mrb[0].mxu0
    %v1519 = vadd.f32 %v1422, %v1518
    %v1520 = vpop.f32.mrb[0].mxu0
    %1521 = vmatprep.mubr.bf16.mxu0 %v604
    %1522 = vmatmul.mubr.bf16.gmra.mrb[0].mxu0 %v649
    %v1523 = vpop.f32.mrb[0].mxu0
    %v1524 = vadd.f32 %v1427, %v1523
    %v1525 = vpop.f32.mrb[0].mxu0
    %v1526 = vpop.f32.mrb[0].mxu0
    %v1527 = vadd.f32 %v1430, %v1526
    %v1528 = vpop.f32.mrb[0].mxu0
    %1529 = vmatprep.mubr.bf16.mxu0 %v606
    %1530 = vmatmul.mubr.bf16.gmra.mrb[0].mxu0 %v657
    %v1531 = vpop.f32.mrb[0].mxu0
    %v1532 = vadd.f32 %v1435, %v1531
    %v1533 = vpop.f32.mrb[0].mxu0
    %v1534 = vpop.f32.mrb[0].mxu0
    %v1535 = vadd.f32 %v1438, %v1534
    %v1536 = vpop.f32.mrb[0].mxu0
    %1537 = vmatprep.mubr.bf16.mxu0 %v607
    %1538 = vmatmul.mubr.bf16.gmra.mrb[0].mxu0 %v659
    %v1539 = vpop.f32.mrb[0].mxu0
    %v1540 = vadd.f32 %v1443, %v1539
    %v1541 = vpop.f32.mrb[0].mxu0
    %v1542 = vpop.f32.mrb[0].mxu0
    %v1543 = vadd.f32 %v1446, %v1542
    %v1544 = vpop.f32.mrb[0].mxu0
    %1545 = vdwg.mxu0
    %1546 = vmatprep.subr.bf16.mxu0 0
    %1547 = vmatpush1.bf16.msra.mxu0 %v1159
    %1548 = vmatprep.subr.bf16.mxu0 0
    %1549 = vmatpush1.bf16.msra.mxu0 %v1160
    %1550 = vmatprep.subr.bf16.mxu0 0
    %1551 = vmatpush1.bf16.msra.mxu0 %v1161
    %1552 = vmatprep.subr.bf16.mxu0 0
    %1553 = vmatpush1.bf16.msra.mxu0 %v1162
    %1554 = vmatprep.subr.bf16.mxu0 0
    %1555 = vmatpush1.bf16.msra.mxu0 %v1163
    %1556 = vmatprep.subr.bf16.mxu0 0
    %1557 = vmatpush1.bf16.msra.mxu0 %v1164
    %1558 = vmatprep.subr.bf16.mxu0 0
    %1559 = vmatpush1.bf16.msra.mxu0 %v1165
    %1560 = vmatprep.subr.bf16.mxu0 0
    %1561 = vmatpush1.bf16.msra.mxu0 %v1166
    %1562 = vmatprep.subr.bf16.mxu0 0
    %1563 = vmatpush1.bf16.msra.mxu0 %v1167
    %1564 = vmatprep.subr.bf16.mxu0 0
    %1565 = vmatpush1.bf16.msra.mxu0 %v1168
    %1566 = vmatprep.subr.bf16.mxu0 0
    %1567 = vmatpush1.bf16.msra.mxu0 %v1169
    %1568 = vmatprep.subr.bf16.mxu0 0
    %1569 = vmatpush1.bf16.msra.mxu0 %v1170
    %1570 = vmatprep.subr.bf16.mxu0 0
    %1571 = vmatpush1.bf16.msra.mxu0 %v1171
    %1572 = vmatprep.subr.bf16.mxu0 0
    %1573 = vmatpush1.bf16.msra.mxu0 %v1172
    %1574 = vmatprep.subr.bf16.mxu0 0
    %1575 = vmatpush1.bf16.msra.mxu0 %v1173
    %1576 = vmatprep.subr.bf16.mxu0 0
    %1577 = vmatpush1.bf16.msra.mxu0 %v1174
    %1578 = vmatprep.mubr.bf16.mxu0 %v637
    %1579 = vmatmul.mubr.bf16.gmra.mrb[0].mxu0 %v599
    %v1580 = vpop.f32.mrb[0].mxu0
    %v1581 = vadd.f32 %v1484, %v1580
    %v1582 = vpop.f32.mrb[0].mxu0
    %v1583 = vpop.f32.mrb[0].mxu0
    %v1584 = vadd.f32 %v1487, %v1583
    %v1585 = vpop.f32.mrb[0].mxu0
    %1586 = vmatprep.mubr.bf16.mxu0 %v639
    %1587 = vmatmul.mubr.bf16.gmra.mrb[0].mxu0 %v600
    %v1588 = vpop.f32.mrb[0].mxu0
    %v1589 = vadd.f32 %v1492, %v1588
    %v1590 = vpop.f32.mrb[0].mxu0
    %v1591 = vpop.f32.mrb[0].mxu0
    %v1592 = vadd.f32 %v1495, %v1591
    %v1593 = vpop.f32.mrb[0].mxu0
    %1594 = vmatprep.mubr.bf16.mxu0 %v647
    %1595 = vmatmul.mubr.bf16.gmra.mrb[0].mxu0 %v602
    %v1596 = vpop.f32.mrb[0].mxu0
    %v1597 = vadd.f32 %v1500, %v1596
    %v1598 = vpop.f32.mrb[0].mxu0
    %v1599 = vpop.f32.mrb[0].mxu0
    %v1600 = vadd.f32 %v1503, %v1599
    %v1601 = vpop.f32.mrb[0].mxu0
    %1602 = vmatprep.mubr.bf16.mxu0 %v649
    %1603 = vmatmul.mubr.bf16.gmra.mrb[0].mxu0 %v603
    %v1604 = vpop.f32.mrb[0].mxu0
    %v1605 = vadd.f32 %v1508, %v1604
    %v1606 = vpop.f32.mrb[0].mxu0
    %v1607 = vpop.f32.mrb[0].mxu0
    %v1608 = vadd.f32 %v1511, %v1607
    %v1609 = vpop.f32.mrb[0].mxu0
    %1610 = vmatprep.mubr.bf16.mxu0 %v657
    %1611 = vmatmul.mubr.bf16.gmra.mrb[0].mxu0 %v605
    %v1612 = vpop.f32.mrb[0].mxu0
    %v1613 = vadd.f32 %v1516, %v1612
    %v1614 = vpop.f32.mrb[0].mxu0
    %v1615 = vpop.f32.mrb[0].mxu0
    %v1616 = vadd.f32 %v1519, %v1615
    %v1617 = vpop.f32.mrb[0].mxu0
    %1618 = vmatprep.mubr.bf16.mxu0 %v659
    %1619 = vmatmul.mubr.bf16.gmra.mrb[0].mxu0 %v606
    %v1620 = vpop.f32.mrb[0].mxu0
    %v1621 = vadd.f32 %v1524, %v1620
    %v1622 = vpop.f32.mrb[0].mxu0
    %v1623 = vpop.f32.mrb[0].mxu0
    %v1624 = vadd.f32 %v1527, %v1623
    %v1625 = vpop.f32.mrb[0].mxu0
    %1626 = vmatprep.mubr.bf16.mxu0 %v667
    %1627 = vmatmul.mubr.bf16.gmra.mrb[0].mxu0 %v608
    %v1628 = vpop.f32.mrb[0].mxu0
    %v1629 = vadd.f32 %v1532, %v1628
    %v1630 = vpop.f32.mrb[0].mxu0
    %v1631 = vpop.f32.mrb[0].mxu0
    %v1632 = vadd.f32 %v1535, %v1631
    %v1633 = vpop.f32.mrb[0].mxu0
    %1634 = vmatprep.mubr.bf16.mxu0 %v669
    %1635 = vmatmul.mubr.bf16.gmra.mrb[0].mxu0 %v609
    %v1636 = vpop.f32.mrb[0].mxu0
    %v1637 = vadd.f32 %v1540, %v1636
    %v1638 = vpop.f32.mrb[0].mxu0
    %v1639 = vpop.f32.mrb[0].mxu0
    %v1640 = vadd.f32 %v1543, %v1639
    %v1641 = vpop.f32.mrb[0].mxu0
    %1642 = vdwg.mxu0
    %1643 = vmatprep.subr.bf16.mxu0 0
    %1644 = vmatpush1.bf16.msra.mxu0 %v1175
    %1645 = vmatprep.subr.bf16.mxu0 0
    %1646 = vmatpush1.bf16.msra.mxu0 %v1176
    %1647 = vmatprep.subr.bf16.mxu0 0
    %1648 = vmatpush1.bf16.msra.mxu0 %v1177
    %1649 = vmatprep.subr.bf16.mxu0 0
    %1650 = vmatpush1.bf16.msra.mxu0 %v1178
    %1651 = vmatprep.subr.bf16.mxu0 0
    %1652 = vmatpush1.bf16.msra.mxu0 %v1179
    %1653 = vmatprep.subr.bf16.mxu0 0
    %1654 = vmatpush1.bf16.msra.mxu0 %v1180
    %1655 = vmatprep.subr.bf16.mxu0 0
    %1656 = vmatpush1.bf16.msra.mxu0 %v1181
    %1657 = vmatprep.subr.bf16.mxu0 0
    %1658 = vmatpush1.bf16.msra.mxu0 %v1182
    %1659 = vmatprep.subr.bf16.mxu0 0
    %1660 = vmatpush1.bf16.msra.mxu0 0
    %1661 = vmatprep.subr.bf16.mxu0 0
    %1662 = vmatpush1.bf16.msra.mxu0 0
    %1663 = vmatprep.subr.bf16.mxu0 0
    %1664 = vmatpush1.bf16.msra.mxu0 0
    %1665 = vmatprep.subr.bf16.mxu0 0
    %1666 = vmatpush1.bf16.msra.mxu0 0
    %1667 = vmatprep.subr.bf16.mxu0 0
    %1668 = vmatpush1.bf16.msra.mxu0 0
    %1669 = vmatprep.subr.bf16.mxu0 0
    %1670 = vmatpush1.bf16.msra.mxu0 0
    %1671 = vmatprep.subr.bf16.mxu0 0
    %1672 = vmatpush1.bf16.msra.mxu0 0
    %1673 = vmatprep.subr.bf16.mxu0 0
    %1674 = vmatpush1.bf16.msra.mxu0 0
    %1675 = vmatprep.mubr.bf16.mxu0 0
    %1676 = vmatmul.mubr.bf16.gmra.mrb[0].mxu0 %v600
    %v1677 = vpop.f32.mrb[0].mxu0
    %v1678 = vadd.f32 %v1581, %v1677
    %v1679 = vpop.f32.mrb[0].mxu0
    %v1680 = vpop.f32.mrb[0].mxu0
    %v1681 = vadd.f32 %v1584, %v1680
    %v1682 = vpop.f32.mrb[0].mxu0
    %1683 = vmatprep.mubr.bf16.mxu0 0
    %1684 = vmatmul.mubr.bf16.gmra.mrb[0].mxu0 %v601
    %v1685 = vpop.f32.mrb[0].mxu0
    %v1686 = vadd.f32 %v1589, %v1685
    %v1687 = vpop.f32.mrb[0].mxu0
    %v1688 = vpop.f32.mrb[0].mxu0
    %v1689 = vadd.f32 %v1592, %v1688
    %v1690 = vpop.f32.mrb[0].mxu0
    %1691 = vmatprep.mubr.bf16.mxu0 0
    %1692 = vmatmul.mubr.bf16.gmra.mrb[0].mxu0 %v603
    %v1693 = vpop.f32.mrb[0].mxu0
    %v1694 = vadd.f32 %v1597, %v1693
    %v1695 = vpop.f32.mrb[0].mxu0
    %v1696 = vpop.f32.mrb[0].mxu0
    %v1697 = vadd.f32 %v1600, %v1696
    %v1698 = vpop.f32.mrb[0].mxu0
    %1699 = vmatprep.mubr.bf16.mxu0 0
    %1700 = vmatmul.mubr.bf16.gmra.mrb[0].mxu0 %v604
    %v1701 = vpop.f32.mrb[0].mxu0
    %v1702 = vadd.f32 %v1605, %v1701
    %v1703 = vpop.f32.mrb[0].mxu0
    %v1704 = vpop.f32.mrb[0].mxu0
    %v1705 = vadd.f32 %v1608, %v1704
    %v1706 = vpop.f32.mrb[0].mxu0
    %1707 = vmatprep.mubr.bf16.mxu0 0
    %1708 = vmatmul.mubr.bf16.gmra.mrb[0].mxu0 %v606
    %v1709 = vpop.f32.mrb[0].mxu0
    %v1710 = vadd.f32 %v1613, %v1709
    %v1711 = vpop.f32.mrb[0].mxu0
    %v1712 = vpop.f32.mrb[0].mxu0
    %v1713 = vadd.f32 %v1616, %v1712
    %v1714 = vpop.f32.mrb[0].mxu0
    %1715 = vmatprep.mubr.bf16.mxu0 0
    %1716 = vmatmul.mubr.bf16.gmra.mrb[0].mxu0 %v607
    %v1717 = vpop.f32.mrb[0].mxu0
    %v1718 = vadd.f32 %v1621, %v1717
    %v1719 = vpop.f32.mrb[0].mxu0
    %v1720 = vpop.f32.mrb[0].mxu0
    %v1721 = vadd.f32 %v1624, %v1720
    %v1722 = vpop.f32.mrb[0].mxu0
    %1723 = vmatprep.mubr.bf16.mxu0 0
    %1724 = vmatmul.mubr.bf16.gmra.mrb[0].mxu0 %v609
    %v1725 = vpop.f32.mrb[0].mxu0
    %v1726 = vadd.f32 %v1629, %v1725
    %v1727 = vpop.f32.mrb[0].mxu0
    %v1728 = vpop.f32.mrb[0].mxu0
    %v1729 = vadd.f32 %v1632, %v1728
    %v1730 = vpop.f32.mrb[0].mxu0
    %1731 = vmatprep.mubr.bf16.mxu0 0
    %1732 = vmatmul.mubr.bf16.gmra.mrb[0].mxu0 %v610
    %v1733 = vpop.f32.mrb[0].mxu0
    %v1734 = vadd.f32 %v1637, %v1733
    %v1735 = vpop.f32.mrb[0].mxu0
    %v1736 = vpop.f32.mrb[0].mxu0
    %v1737 = vadd.f32 %v1640, %v1736
    %v1738 = vpop.f32.mrb[0].mxu0
    %1739 = vdwg.mxu0
    %v1740 = vmax.f32 %v1678, 0.0
    %v1741 = vmax.f32 %v1681, 0.0
    %v1742 = vmax.f32 %v1686, 0.0
    %v1743 = vmax.f32 %v1689, 0.0
    %v1744 = vmax.f32 %v1694, 0.0
    %v1745 = vmax.f32 %v1697, 0.0
    %v1746 = vmax.f32 %v1702, 0.0
    %v1747 = vmax.f32 %v1705, 0.0
    %v1748 = vmax.f32 %v1710, 0.0
    %v1749 = vmax.f32 %v1713, 0.0
    %v1750 = vmax.f32 %v1718, 0.0
    %v1751 = vmax.f32 %v1721, 0.0
    %v1752 = vmax.f32 %v1726, 0.0
    %v1753 = vmax.f32 %v1729, 0.0
    %v1754 = vmax.f32 %v1734, 0.0
    %v1755 = vmax.f32 %v1737, 0.0
    %v1756 = vpack.c.bf16 %v1741, %v1740
    %v1757 = vpack.c.bf16 %v1743, %v1742
    %v1758 = vpack.c.bf16 %v1745, %v1744
    %v1759 = vpack.c.bf16 %v1747, %v1746
    %v1760 = vpack.c.bf16 %v1749, %v1748
    %v1761 = vpack.c.bf16 %v1751, %v1750
    %v1762 = vpack.c.bf16 %v1753, %v1752
    %v1763 = vpack.c.bf16 %v1755, %v1754
    %v1765 = vrot.slane %v1756, 4
    %v1768 = vrot.slane %v1757, 4
    %v1771 = vrot.slane %v1758, 4
    %v1774 = vrot.slane %v1759, 4
    %v1777 = vrot.slane %v1760, 4
    %v1780 = vrot.slane %v1761, 4
    %v1783 = vrot.slane %v1762, 4
    %v1786 = vrot.slane %v1763, 4
    %v1788 = vld [vmem:[#allocation9] sm:$0xff]
    %v1789 = vld [vmem:[#allocation9 + $0x8] sm:$0xff]
    %v1790 = vld [vmem:[#allocation9 + $0x10] sm:$0xff]
    %v1791 = vld [vmem:[#allocation9 + $0x18] sm:$0xff]
    %v1792 = vld [vmem:[#allocation9 + $0x20] sm:$0xff]
    %v1793 = vld [vmem:[#allocation9 + $0x28] sm:$0xff]
    %v1794 = vld [vmem:[#allocation9 + $0x30] sm:$0xff]
    %v1795 = vld [vmem:[#allocation9 + $0x38] sm:$0xff]
    %v1796 = vld [vmem:[#allocation9 + $0x40] sm:$0xff]
    %v1797 = vld [vmem:[#allocation9 + $0x48] sm:$0xff]
    %v1798 = vld [vmem:[#allocation9 + $0x50] sm:$0xff]
    %v1799 = vld [vmem:[#allocation9 + $0x58] sm:$0xff]
    %v1800 = vld [vmem:[#allocation9 + $0x60] sm:$0xff]
    %v1801 = vld [vmem:[#allocation9 + $0x68] sm:$0xff]
    %v1802 = vld [vmem:[#allocation9 + $0x70] sm:$0xff]
    %v1803 = vld [vmem:[#allocation9 + $0x78] sm:$0xff]
    %v1804 = vld [vmem:[#allocation9 + $0x80] sm:$0xff]
    %v1805 = vld [vmem:[#allocation9 + $0x88] sm:$0xff]
    %v1806 = vld [vmem:[#allocation9 + $0x90] sm:$0xff]
    %v1807 = vld [vmem:[#allocation9 + $0x98] sm:$0xff]
    %v1808 = vld [vmem:[#allocation9 + $0xa0] sm:$0xff]
    %v1809 = vld [vmem:[#allocation9 + $0xa8] sm:$0xff]
    %v1810 = vld [vmem:[#allocation9 + $0xb0] sm:$0xff]
    %v1811 = vld [vmem:[#allocation9 + $0xb8] sm:$0xff]
    %v1812 = vld [vmem:[#allocation9 + $0xc0] sm:$0xff]
    %v1813 = vld [vmem:[#allocation9 + $0xc8] sm:$0xff]
    %v1814 = vld [vmem:[#allocation9 + $0xd0] sm:$0xff]
    %v1815 = vld [vmem:[#allocation9 + $0xd8] sm:$0xff]
    %v1816 = vld [vmem:[#allocation9 + $0xe0] sm:$0xff]
    %v1817 = vld [vmem:[#allocation9 + $0xe8] sm:$0xff]
    %v1818 = vld [vmem:[#allocation9 + $0xf0] sm:$0xff]
    %v1819 = vld [vmem:[#allocation9 + $0xf8] sm:$0xff]
    %v1820 = vld [vmem:[#allocation9 + $0x100] sm:$0xff]
    %v1821 = vld [vmem:[#allocation9 + $0x108] sm:$0xff]
    %v1822 = vld [vmem:[#allocation9 + $0x110] sm:$0xff]
    %v1823 = vld [vmem:[#allocation9 + $0x118] sm:$0xff]
    %v1824 = vld [vmem:[#allocation9 + $0x120] sm:$0xff]
    %v1825 = vld [vmem:[#allocation9 + $0x128] sm:$0xff]
    %v1826 = vld [vmem:[#allocation9 + $0x130] sm:$0xff]
    %v1827 = vld [vmem:[#allocation9 + $0x138] sm:$0xff]
    %v1828 = vld [vmem:[#allocation9 + $0x140] sm:$0xff]
    %v1829 = vld [vmem:[#allocation9 + $0x148] sm:$0xff]
    %v1830 = vld [vmem:[#allocation9 + $0x150] sm:$0xff]
    %v1831 = vld [vmem:[#allocation9 + $0x158] sm:$0xff]
    %v1832 = vld [vmem:[#allocation9 + $0x160] sm:$0xff]
    %v1833 = vld [vmem:[#allocation9 + $0x168] sm:$0xff]
    %v1834 = vld [vmem:[#allocation9 + $0x170] sm:$0xff]
    %v1835 = vld [vmem:[#allocation9 + $0x178] sm:$0xff]
    %v1836 = vld [vmem:[#allocation9 + $0x180] sm:$0xff]
    %v1837 = vld [vmem:[#allocation9 + $0x188] sm:$0xff]
    %v1838 = vld [vmem:[#allocation9 + $0x190] sm:$0xff]
    %v1839 = vld [vmem:[#allocation9 + $0x198] sm:$0xff]
    %v1840 = vld [vmem:[#allocation9 + $0x1a0] sm:$0xff]
    %v1841 = vld [vmem:[#allocation9 + $0x1a8] sm:$0xff]
    %v1842 = vld [vmem:[#allocation9 + $0x1b0] sm:$0xff]
    %v1843 = vld [vmem:[#allocation9 + $0x1b8] sm:$0xff]
    %v1844 = vld [vmem:[#allocation9 + $0x1c0] sm:$0xff]
    %v1845 = vld [vmem:[#allocation9 + $0x1c8] sm:$0xff]
    %v1846 = vld [vmem:[#allocation9 + $0x1d0] sm:$0xff]
    %v1847 = vld [vmem:[#allocation9 + $0x1d8] sm:$0xff]
    %v1848 = vld [vmem:[#allocation9 + $0x1e0] sm:$0xff]
    %v1849 = vld [vmem:[#allocation9 + $0x1e8] sm:$0xff]
    %v1850 = vld [vmem:[#allocation9 + $0x1f0] sm:$0xff]
    %v1851 = vld [vmem:[#allocation9 + $0x1f8] sm:$0xff]
    %v1852 = vld [vmem:[#allocation9 + $0x200] sm:$0xff]
    %v1853 = vld [vmem:[#allocation9 + $0x208] sm:$0xff]
    %v1854 = vld [vmem:[#allocation9 + $0x210] sm:$0xff]
    %v1855 = vld [vmem:[#allocation9 + $0x218] sm:$0xff]
    %v1856 = vld [vmem:[#allocation9 + $0x220] sm:$0xff]
    %v1857 = vld [vmem:[#allocation9 + $0x228] sm:$0xff]
    %v1858 = vld [vmem:[#allocation9 + $0x230] sm:$0xff]
    %v1859 = vld [vmem:[#allocation9 + $0x238] sm:$0xff]
    %v1860 = vld [vmem:[#allocation9 + $0x240] sm:$0xff]
    %v1861 = vld [vmem:[#allocation9 + $0x248] sm:$0xff]
    %v1862 = vld [vmem:[#allocation9 + $0x250] sm:$0xff]
    %v1863 = vld [vmem:[#allocation9 + $0x258] sm:$0xff]
    %v1864 = vld [vmem:[#allocation9 + $0x260] sm:$0xff]
    %v1865 = vld [vmem:[#allocation9 + $0x268] sm:$0xff]
    %v1866 = vld [vmem:[#allocation9 + $0x270] sm:$0xff]
    %v1867 = vld [vmem:[#allocation9 + $0x278] sm:$0xff]
    %v1868 = vld [vmem:[#allocation9 + $0x280] sm:$0xff]
    %v1869 = vld [vmem:[#allocation9 + $0x288] sm:$0xff]
    %v1870 = vld [vmem:[#allocation9 + $0x290] sm:$0xff]
    %v1871 = vld [vmem:[#allocation9 + $0x298] sm:$0xff]
    %v1872 = vld [vmem:[#allocation9 + $0x2a0] sm:$0xff]
    %v1873 = vld [vmem:[#allocation9 + $0x2a8] sm:$0xff]
    %v1874 = vld [vmem:[#allocation9 + $0x2b0] sm:$0xff]
    %v1875 = vld [vmem:[#allocation9 + $0x2b8] sm:$0xff]
    %v1876 = vld [vmem:[#allocation9 + $0x2c0] sm:$0xff]
    %v1877 = vld [vmem:[#allocation9 + $0x2c8] sm:$0xff]
    %v1878 = vld [vmem:[#allocation9 + $0x2d0] sm:$0xff]
    %v1879 = vld [vmem:[#allocation9 + $0x2d8] sm:$0xff]
    %v1880 = vld [vmem:[#allocation9 + $0x2e0] sm:$0xff]
    %v1881 = vld [vmem:[#allocation9 + $0x2e8] sm:$0xff]
    %v1882 = vld [vmem:[#allocation9 + $0x2f0] sm:$0xff]
    %v1883 = vld [vmem:[#allocation9 + $0x2f8] sm:$0xff]
    %v1884 = vld [vmem:[#allocation9 + $0x300] sm:$0xff]
    %v1885 = vld [vmem:[#allocation9 + $0x308] sm:$0xff]
    %v1886 = vld [vmem:[#allocation9 + $0x310] sm:$0xff]
    %v1887 = vld [vmem:[#allocation9 + $0x318] sm:$0xff]
    %v1888 = vld [vmem:[#allocation9 + $0x320] sm:$0xff]
    %v1889 = vld [vmem:[#allocation9 + $0x328] sm:$0xff]
    %v1890 = vld [vmem:[#allocation9 + $0x330] sm:$0xff]
    %v1891 = vld [vmem:[#allocation9 + $0x338] sm:$0xff]
    %v1892 = vld [vmem:[#allocation9 + $0x340] sm:$0xff]
    %v1893 = vld [vmem:[#allocation9 + $0x348] sm:$0xff]
    %v1894 = vld [vmem:[#allocation9 + $0x350] sm:$0xff]
    %v1895 = vld [vmem:[#allocation9 + $0x358] sm:$0xff]
    %v1896 = vld [vmem:[#allocation9 + $0x360] sm:$0xff]
    %v1897 = vld [vmem:[#allocation9 + $0x368] sm:$0xff]
    %v1898 = vld [vmem:[#allocation9 + $0x370] sm:$0xff]
    %v1899 = vld [vmem:[#allocation9 + $0x378] sm:$0xff]
    %v1900 = vld [vmem:[#allocation9 + $0x380] sm:$0xff]
    %v1901 = vld [vmem:[#allocation9 + $0x388] sm:$0xff]
    %v1902 = vld [vmem:[#allocation9 + $0x390] sm:$0xff]
    %v1903 = vld [vmem:[#allocation9 + $0x398] sm:$0xff]
    %v1904 = vld [vmem:[#allocation9 + $0x3a0] sm:$0xff]
    %v1905 = vld [vmem:[#allocation9 + $0x3a8] sm:$0xff]
    %v1906 = vld [vmem:[#allocation9 + $0x3b0] sm:$0xff]
    %v1907 = vld [vmem:[#allocation9 + $0x3b8] sm:$0xff]
    %v1908 = vld [vmem:[#allocation9 + $0x3c0] sm:$0xff]
    %v1909 = vld [vmem:[#allocation9 + $0x3c8] sm:$0xff]
    %v1910 = vld [vmem:[#allocation9 + $0x3d0] sm:$0xff]
    %v1911 = vld [vmem:[#allocation9 + $0x3d8] sm:$0xff]
    %v1912 = vld [vmem:[#allocation9 + $0x3e0] sm:$0xff]
    %v1913 = vld [vmem:[#allocation9 + $0x3e8] sm:$0xff]
    %v1914 = vld [vmem:[#allocation9 + $0x3f0] sm:$0xff]
    %v1915 = vld [vmem:[#allocation9 + $0x3f8] sm:$0xff]
    %v1916 = vld [vmem:[#allocation9 + $0x400] sm:$0xff]
    %v1917 = vld [vmem:[#allocation9 + $0x408] sm:$0xff]
    %v1918 = vld [vmem:[#allocation9 + $0x410] sm:$0xff]
    %v1919 = vld [vmem:[#allocation9 + $0x418] sm:$0xff]
    %v1920 = vld [vmem:[#allocation9 + $0x420] sm:$0xff]
    %v1921 = vld [vmem:[#allocation9 + $0x428] sm:$0xff]
    %v1922 = vld [vmem:[#allocation9 + $0x430] sm:$0xff]
    %v1923 = vld [vmem:[#allocation9 + $0x438] sm:$0xff]
    %v1924 = vld [vmem:[#allocation9 + $0x440] sm:$0xff]
    %v1925 = vld [vmem:[#allocation9 + $0x448] sm:$0xff]
    %v1926 = vld [vmem:[#allocation9 + $0x450] sm:$0xff]
    %v1927 = vld [vmem:[#allocation9 + $0x458] sm:$0xff]
    %v1928 = vld [vmem:[#allocation9 + $0x460] sm:$0xff]
    %v1929 = vld [vmem:[#allocation9 + $0x468] sm:$0xff]
    %v1930 = vld [vmem:[#allocation9 + $0x470] sm:$0xff]
    %v1931 = vld [vmem:[#allocation9 + $0x478] sm:$0xff]
    %v1932 = vld [vmem:[#allocation9 + $0x480] sm:$0xff]
    %v1933 = vld [vmem:[#allocation9 + $0x488] sm:$0xff]
    %v1934 = vld [vmem:[#allocation9 + $0x490] sm:$0xff]
    %v1935 = vld [vmem:[#allocation9 + $0x498] sm:$0xff]
    %v1936 = vld [vmem:[#allocation9 + $0x4a0] sm:$0xff]
    %v1937 = vld [vmem:[#allocation9 + $0x4a8] sm:$0xff]
    %v1938 = vld [vmem:[#allocation9 + $0x4b0] sm:$0xff]
    %v1939 = vld [vmem:[#allocation9 + $0x4b8] sm:$0xff]
    %v1940 = vld [vmem:[#allocation9 + $0x4c0] sm:$0xff]
    %v1941 = vld [vmem:[#allocation9 + $0x4c8] sm:$0xff]
    %v1942 = vld [vmem:[#allocation9 + $0x4d0] sm:$0xff]
    %v1943 = vld [vmem:[#allocation9 + $0x4d8] sm:$0xff]
    %v1944 = vld [vmem:[#allocation9 + $0x4e0] sm:$0xff]
    %v1945 = vld [vmem:[#allocation9 + $0x4e8] sm:$0xff]
    %v1946 = vld [vmem:[#allocation9 + $0x4f0] sm:$0xff]
    %v1947 = vld [vmem:[#allocation9 + $0x4f8] sm:$0xff]
    %v1948 = vld [vmem:[#allocation9 + $0x500] sm:$0xff]
    %v1949 = vld [vmem:[#allocation9 + $0x508] sm:$0xff]
    %v1950 = vld [vmem:[#allocation9 + $0x510] sm:$0xff]
    %v1951 = vld [vmem:[#allocation9 + $0x518] sm:$0xff]
    %v1952 = vld [vmem:[#allocation9 + $0x520] sm:$0xff]
    %v1953 = vld [vmem:[#allocation9 + $0x528] sm:$0xff]
    %v1954 = vld [vmem:[#allocation9 + $0x530] sm:$0xff]
    %v1955 = vld [vmem:[#allocation9 + $0x538] sm:$0xff]
    %v1956 = vld [vmem:[#allocation9 + $0x540] sm:$0xff]
    %v1957 = vld [vmem:[#allocation9 + $0x548] sm:$0xff]
    %v1958 = vld [vmem:[#allocation9 + $0x550] sm:$0xff]
    %v1959 = vld [vmem:[#allocation9 + $0x558] sm:$0xff]
    %v1960 = vld [vmem:[#allocation9 + $0x560] sm:$0xff]
    %v1961 = vld [vmem:[#allocation9 + $0x568] sm:$0xff]
    %v1962 = vld [vmem:[#allocation9 + $0x570] sm:$0xff]
    %v1963 = vld [vmem:[#allocation9 + $0x578] sm:$0xff]
    %v1964 = vld [vmem:[#allocation9 + $0x580] sm:$0xff]
    %v1965 = vld [vmem:[#allocation9 + $0x588] sm:$0xff]
    %v1966 = vld [vmem:[#allocation9 + $0x590] sm:$0xff]
    %v1967 = vld [vmem:[#allocation9 + $0x598] sm:$0xff]
    %v1968 = vld [vmem:[#allocation9 + $0x5a0] sm:$0xff]
    %v1969 = vld [vmem:[#allocation9 + $0x5a8] sm:$0xff]
    %v1970 = vld [vmem:[#allocation9 + $0x5b0] sm:$0xff]
    %v1971 = vld [vmem:[#allocation9 + $0x5b8] sm:$0xff]
    %v1972 = vld [vmem:[#allocation9 + $0x5c0] sm:$0xff]
    %v1973 = vld [vmem:[#allocation9 + $0x5c8] sm:$0xff]
    %v1974 = vld [vmem:[#allocation9 + $0x5d0] sm:$0xff]
    %v1975 = vld [vmem:[#allocation9 + $0x5d8] sm:$0xff]
    %v1976 = vld [vmem:[#allocation9 + $0x5e0] sm:$0xff]
    %v1977 = vld [vmem:[#allocation9 + $0x5e8] sm:$0xff]
    %v1978 = vld [vmem:[#allocation9 + $0x5f0] sm:$0xff]
    %v1979 = vld [vmem:[#allocation9 + $0x5f8] sm:$0xff]
    %v1980 = vld [vmem:[#allocation9 + $0x600] sm:$0xff]
    %v1981 = vld [vmem:[#allocation9 + $0x608] sm:$0xff]
    %v1982 = vld [vmem:[#allocation9 + $0x610] sm:$0xff]
    %v1983 = vld [vmem:[#allocation9 + $0x618] sm:$0xff]
    %v1984 = vld [vmem:[#allocation9 + $0x620] sm:$0xff]
    %v1985 = vld [vmem:[#allocation9 + $0x628] sm:$0xff]
    %v1986 = vld [vmem:[#allocation9 + $0x630] sm:$0xff]
    %v1987 = vld [vmem:[#allocation9 + $0x638] sm:$0xff]
    %v1988 = vld [vmem:[#allocation9 + $0x640] sm:$0xff]
    %v1989 = vld [vmem:[#allocation9 + $0x648] sm:$0xff]
    %v1990 = vld [vmem:[#allocation9 + $0x650] sm:$0xff]
    %v1991 = vld [vmem:[#allocation9 + $0x658] sm:$0xff]
    %v1992 = vld [vmem:[#allocation9 + $0x660] sm:$0xff]
    %v1993 = vld [vmem:[#allocation9 + $0x668] sm:$0xff]
    %v1994 = vld [vmem:[#allocation9 + $0x670] sm:$0xff]
    %v1995 = vld [vmem:[#allocation9 + $0x678] sm:$0xff]
    %v1996 = vld [vmem:[#allocation9 + $0x680] sm:$0xff]
    %v1997 = vld [vmem:[#allocation9 + $0x688] sm:$0xff]
    %v1998 = vld [vmem:[#allocation9 + $0x690] sm:$0xff]
    %v1999 = vld [vmem:[#allocation9 + $0x698] sm:$0xff]
    %v2000 = vld [vmem:[#allocation9 + $0x6a0] sm:$0xff]
    %v2001 = vld [vmem:[#allocation9 + $0x6a8] sm:$0xff]
    %v2002 = vld [vmem:[#allocation9 + $0x6b0] sm:$0xff]
    %v2003 = vld [vmem:[#allocation9 + $0x6b8] sm:$0xff]
    %v2004 = vld [vmem:[#allocation9 + $0x6c0] sm:$0xff]
    %v2005 = vld [vmem:[#allocation9 + $0x6c8] sm:$0xff]
    %v2006 = vld [vmem:[#allocation9 + $0x6d0] sm:$0xff]
    %v2007 = vld [vmem:[#allocation9 + $0x6d8] sm:$0xff]
    %v2008 = vld [vmem:[#allocation9 + $0x6e0] sm:$0xff]
    %v2009 = vld [vmem:[#allocation9 + $0x6e8] sm:$0xff]
    %v2010 = vld [vmem:[#allocation9 + $0x6f0] sm:$0xff]
    %v2011 = vld [vmem:[#allocation9 + $0x6f8] sm:$0xff]
    %v2012 = vld [vmem:[#allocation9 + $0x700] sm:$0xff]
    %v2013 = vld [vmem:[#allocation9 + $0x708] sm:$0xff]
    %v2014 = vld [vmem:[#allocation9 + $0x710] sm:$0xff]
    %v2015 = vld [vmem:[#allocation9 + $0x718] sm:$0xff]
    %v2016 = vld [vmem:[#allocation9 + $0x720] sm:$0xff]
    %v2017 = vld [vmem:[#allocation9 + $0x728] sm:$0xff]
    %v2018 = vld [vmem:[#allocation9 + $0x730] sm:$0xff]
    %v2019 = vld [vmem:[#allocation9 + $0x738] sm:$0xff]
    %v2020 = vld [vmem:[#allocation9 + $0x740] sm:$0xff]
    %v2021 = vld [vmem:[#allocation9 + $0x748] sm:$0xff]
    %v2022 = vld [vmem:[#allocation9 + $0x750] sm:$0xff]
    %v2023 = vld [vmem:[#allocation9 + $0x758] sm:$0xff]
    %v2024 = vld [vmem:[#allocation9 + $0x760] sm:$0xff]
    %v2025 = vld [vmem:[#allocation9 + $0x768] sm:$0xff]
    %v2026 = vld [vmem:[#allocation9 + $0x770] sm:$0xff]
    %v2027 = vld [vmem:[#allocation9 + $0x778] sm:$0xff]
    %v2028 = vld [vmem:[#allocation9 + $0x780] sm:$0xff]
    %v2029 = vld [vmem:[#allocation9 + $0x788] sm:$0xff]
    %v2030 = vld [vmem:[#allocation9 + $0x790] sm:$0xff]
    %v2031 = vld [vmem:[#allocation9 + $0x798] sm:$0xff]
    %v2032 = vld [vmem:[#allocation9 + $0x7a0] sm:$0xff]
    %v2033 = vld [vmem:[#allocation9 + $0x7a8] sm:$0xff]
    %v2034 = vld [vmem:[#allocation9 + $0x7b0] sm:$0xff]
    %v2035 = vld [vmem:[#allocation9 + $0x7b8] sm:$0xff]
    %v2036 = vld [vmem:[#allocation9 + $0x7c0] sm:$0xff]
    %v2037 = vld [vmem:[#allocation9 + $0x7c8] sm:$0xff]
    %v2038 = vld [vmem:[#allocation9 + $0x7d0] sm:$0xff]
    %v2039 = vld [vmem:[#allocation9 + $0x7d8] sm:$0xff]
    %v2040 = vld [vmem:[#allocation9 + $0x7e0] sm:$0xff]
    %v2041 = vld [vmem:[#allocation9 + $0x7e8] sm:$0xff]
    %v2042 = vld [vmem:[#allocation9 + $0x7f0] sm:$0xff]
    %v2043 = vld [vmem:[#allocation9 + $0x7f8] sm:$0xff]
    %v2044 = vld [vmem:[#allocation9 + $0x800] sm:$0xff]
    %v2045 = vld [vmem:[#allocation9 + $0x808] sm:$0xff]
    %v2046 = vld [vmem:[#allocation9 + $0x810] sm:$0xff]
    %v2047 = vld [vmem:[#allocation9 + $0x818] sm:$0xff]
    %v2048 = vld [vmem:[#allocation9 + $0x820] sm:$0xff]
    %v2049 = vld [vmem:[#allocation9 + $0x828] sm:$0xff]
    %v2050 = vld [vmem:[#allocation9 + $0x830] sm:$0xff]
    %v2051 = vld [vmem:[#allocation9 + $0x838] sm:$0xff]
    %v2052 = vld [vmem:[#allocation9 + $0x840] sm:$0xff]
    %v2053 = vld [vmem:[#allocation9 + $0x848] sm:$0xff]
    %v2054 = vld [vmem:[#allocation9 + $0x850] sm:$0xff]
    %v2055 = vld [vmem:[#allocation9 + $0x858] sm:$0xff]
    %v2056 = vld [vmem:[#allocation9 + $0x860] sm:$0xff]
    %v2057 = vld [vmem:[#allocation9 + $0x868] sm:$0xff]
    %v2058 = vld [vmem:[#allocation9 + $0x870] sm:$0xff]
    %v2059 = vld [vmem:[#allocation9 + $0x878] sm:$0xff]
    %v2060 = vld [vmem:[#allocation9 + $0x880] sm:$0xff]
    %v2061 = vld [vmem:[#allocation9 + $0x888] sm:$0xff]
    %v2062 = vld [vmem:[#allocation9 + $0x890] sm:$0xff]
    %v2063 = vld [vmem:[#allocation9 + $0x898] sm:$0xff]
    %v2064 = vld [vmem:[#allocation9 + $0x8a0] sm:$0xff]
    %v2065 = vld [vmem:[#allocation9 + $0x8a8] sm:$0xff]
    %v2066 = vld [vmem:[#allocation9 + $0x8b0] sm:$0xff]
    %v2067 = vld [vmem:[#allocation9 + $0x8b8] sm:$0xff]
    %v2068 = vld [vmem:[#allocation9 + $0x8c0] sm:$0xff]
    %v2069 = vld [vmem:[#allocation9 + $0x8c8] sm:$0xff]
    %v2070 = vld [vmem:[#allocation9 + $0x8d0] sm:$0xff]
    %v2071 = vld [vmem:[#allocation9 + $0x8d8] sm:$0xff]
    %v2072 = vld [vmem:[#allocation9 + $0x8e0] sm:$0xff]
    %v2073 = vld [vmem:[#allocation9 + $0x8e8] sm:$0xff]
    %v2074 = vld [vmem:[#allocation9 + $0x8f0] sm:$0xff]
    %v2075 = vld [vmem:[#allocation9 + $0x8f8] sm:$0xff]
    %v2076 = vld [vmem:[#allocation9 + $0x900] sm:$0xff]
    %v2077 = vld [vmem:[#allocation9 + $0x908] sm:$0xff]
    %v2078 = vld [vmem:[#allocation9 + $0x910] sm:$0xff]
    %v2079 = vld [vmem:[#allocation9 + $0x918] sm:$0xff]
    %v2080 = vld [vmem:[#allocation9 + $0x920] sm:$0xff]
    %v2081 = vld [vmem:[#allocation9 + $0x928] sm:$0xff]
    %v2082 = vld [vmem:[#allocation9 + $0x930] sm:$0xff]
    %v2083 = vld [vmem:[#allocation9 + $0x938] sm:$0xff]
    %v2084 = vld [vmem:[#allocation9 + $0x940] sm:$0xff]
    %v2085 = vld [vmem:[#allocation9 + $0x948] sm:$0xff]
    %v2086 = vld [vmem:[#allocation9 + $0x950] sm:$0xff]
    %v2087 = vld [vmem:[#allocation9 + $0x958] sm:$0xff]
    %v2088 = vld [vmem:[#allocation9 + $0x960] sm:$0xff]
    %v2089 = vld [vmem:[#allocation9 + $0x968] sm:$0xff]
    %v2090 = vld [vmem:[#allocation9 + $0x970] sm:$0xff]
    %v2091 = vld [vmem:[#allocation9 + $0x978] sm:$0xff]
    %v2092 = vld [vmem:[#allocation9 + $0x980] sm:$0xff]
    %v2093 = vld [vmem:[#allocation9 + $0x988] sm:$0xff]
    %v2094 = vld [vmem:[#allocation9 + $0x990] sm:$0xff]
    %v2095 = vld [vmem:[#allocation9 + $0x998] sm:$0xff]
    %v2096 = vld [vmem:[#allocation9 + $0x9a0] sm:$0xff]
    %v2097 = vld [vmem:[#allocation9 + $0x9a8] sm:$0xff]
    %v2098 = vld [vmem:[#allocation9 + $0x9b0] sm:$0xff]
    %v2099 = vld [vmem:[#allocation9 + $0x9b8] sm:$0xff]
    %v2100 = vld [vmem:[#allocation9 + $0x9c0] sm:$0xff]
    %v2101 = vld [vmem:[#allocation9 + $0x9c8] sm:$0xff]
    %v2102 = vld [vmem:[#allocation9 + $0x9d0] sm:$0xff]
    %v2103 = vld [vmem:[#allocation9 + $0x9d8] sm:$0xff]
    %v2104 = vld [vmem:[#allocation9 + $0x9e0] sm:$0xff]
    %v2105 = vld [vmem:[#allocation9 + $0x9e8] sm:$0xff]
    %v2106 = vld [vmem:[#allocation9 + $0x9f0] sm:$0xff]
    %v2107 = vld [vmem:[#allocation9 + $0x9f8] sm:$0xff]
    %v2108 = vld [vmem:[#allocation9 + $0xa00] sm:$0xff]
    %v2109 = vld [vmem:[#allocation9 + $0xa08] sm:$0xff]
    %v2110 = vld [vmem:[#allocation9 + $0xa10] sm:$0xff]
    %v2111 = vld [vmem:[#allocation9 + $0xa18] sm:$0xff]
    %v2112 = vld [vmem:[#allocation9 + $0xa20] sm:$0xff]
    %v2113 = vld [vmem:[#allocation9 + $0xa28] sm:$0xff]
    %v2114 = vld [vmem:[#allocation9 + $0xa30] sm:$0xff]
    %v2115 = vld [vmem:[#allocation9 + $0xa38] sm:$0xff]
    %v2116 = vld [vmem:[#allocation9 + $0xa40] sm:$0xff]
    %v2117 = vld [vmem:[#allocation9 + $0xa48] sm:$0xff]
    %v2118 = vld [vmem:[#allocation9 + $0xa50] sm:$0xff]
    %v2119 = vld [vmem:[#allocation9 + $0xa58] sm:$0xff]
    %v2120 = vld [vmem:[#allocation9 + $0xa60] sm:$0xff]
    %v2121 = vld [vmem:[#allocation9 + $0xa68] sm:$0xff]
    %v2122 = vld [vmem:[#allocation9 + $0xa70] sm:$0xff]
    %v2123 = vld [vmem:[#allocation9 + $0xa78] sm:$0xff]
    %v2124 = vld [vmem:[#allocation9 + $0xa80] sm:$0xff]
    %v2125 = vld [vmem:[#allocation9 + $0xa88] sm:$0xff]
    %v2126 = vld [vmem:[#allocation9 + $0xa90] sm:$0xff]
    %v2127 = vld [vmem:[#allocation9 + $0xa98] sm:$0xff]
    %v2128 = vld [vmem:[#allocation9 + $0xaa0] sm:$0xff]
    %v2129 = vld [vmem:[#allocation9 + $0xaa8] sm:$0xff]
    %v2130 = vld [vmem:[#allocation9 + $0xab0] sm:$0xff]
    %v2131 = vld [vmem:[#allocation9 + $0xab8] sm:$0xff]
    %v2132 = vld [vmem:[#allocation9 + $0xac0] sm:$0xff]
    %v2133 = vld [vmem:[#allocation9 + $0xac8] sm:$0xff]
    %v2134 = vld [vmem:[#allocation9 + $0xad0] sm:$0xff]
    %v2135 = vld [vmem:[#allocation9 + $0xad8] sm:$0xff]
    %v2136 = vld [vmem:[#allocation9 + $0xae0] sm:$0xff]
    %v2137 = vld [vmem:[#allocation9 + $0xae8] sm:$0xff]
    %v2138 = vld [vmem:[#allocation9 + $0xaf0] sm:$0xff]
    %v2139 = vld [vmem:[#allocation9 + $0xaf8] sm:$0xff]
    %v2140 = vld [vmem:[#allocation9 + $0xb00] sm:$0xff]
    %v2141 = vld [vmem:[#allocation9 + $0xb08] sm:$0xff]
    %v2142 = vld [vmem:[#allocation9 + $0xb10] sm:$0xff]
    %v2143 = vld [vmem:[#allocation9 + $0xb18] sm:$0xff]
    %v2144 = vld [vmem:[#allocation9 + $0xb20] sm:$0xff]
    %v2145 = vld [vmem:[#allocation9 + $0xb28] sm:$0xff]
    %v2146 = vld [vmem:[#allocation9 + $0xb30] sm:$0xff]
    %v2147 = vld [vmem:[#allocation9 + $0xb38] sm:$0xff]
    %v2148 = vld [vmem:[#allocation9 + $0xb40] sm:$0xff]
    %v2149 = vld [vmem:[#allocation9 + $0xb48] sm:$0xff]
    %v2150 = vld [vmem:[#allocation9 + $0xb50] sm:$0xff]
    %v2151 = vld [vmem:[#allocation9 + $0xb58] sm:$0xff]
    %v2152 = vld [vmem:[#allocation9 + $0xb60] sm:$0xff]
    %v2153 = vld [vmem:[#allocation9 + $0xb68] sm:$0xff]
    %v2154 = vld [vmem:[#allocation9 + $0xb70] sm:$0xff]
    %v2155 = vld [vmem:[#allocation9 + $0xb78] sm:$0xff]
    %v2156 = vld [vmem:[#allocation9 + $0xb80] sm:$0xff]
    %v2157 = vld [vmem:[#allocation9 + $0xb88] sm:$0xff]
    %v2158 = vld [vmem:[#allocation9 + $0xb90] sm:$0xff]
    %v2159 = vld [vmem:[#allocation9 + $0xb98] sm:$0xff]
    %v2160 = vld [vmem:[#allocation9 + $0xba0] sm:$0xff]
    %v2161 = vld [vmem:[#allocation9 + $0xba8] sm:$0xff]
    %v2162 = vld [vmem:[#allocation9 + $0xbb0] sm:$0xff]
    %v2163 = vld [vmem:[#allocation9 + $0xbb8] sm:$0xff]
    %v2164 = vld [vmem:[#allocation9 + $0xbc0] sm:$0xff]
    %v2165 = vld [vmem:[#allocation9 + $0xbc8] sm:$0xff]
    %v2166 = vld [vmem:[#allocation9 + $0xbd0] sm:$0xff]
    %v2167 = vld [vmem:[#allocation9 + $0xbd8] sm:$0xff]
    %v2168 = vld [vmem:[#allocation9 + $0xbe0] sm:$0xff]
    %v2169 = vld [vmem:[#allocation9 + $0xbe8] sm:$0xff]
    %v2170 = vld [vmem:[#allocation9 + $0xbf0] sm:$0xff]
    %v2171 = vld [vmem:[#allocation9 + $0xbf8] sm:$0xff]
    %v2172 = vld [vmem:[#allocation9 + $0xc00] sm:$0xff]
    %v2173 = vld [vmem:[#allocation9 + $0xc08] sm:$0xff]
    %v2174 = vld [vmem:[#allocation9 + $0xc10] sm:$0xff]
    %v2175 = vld [vmem:[#allocation9 + $0xc18] sm:$0xff]
    %v2176 = vld [vmem:[#allocation9 + $0xc20] sm:$0xff]
    %v2177 = vld [vmem:[#allocation9 + $0xc28] sm:$0xff]
    %v2178 = vld [vmem:[#allocation9 + $0xc30] sm:$0xff]
    %v2179 = vld [vmem:[#allocation9 + $0xc38] sm:$0xff]
    %v2180 = vld [vmem:[#allocation9 + $0xc40] sm:$0xff]
    %v2181 = vld [vmem:[#allocation9 + $0xc48] sm:$0xff]
    %v2182 = vld [vmem:[#allocation9 + $0xc50] sm:$0xff]
    %v2183 = vld [vmem:[#allocation9 + $0xc58] sm:$0xff]
    %v2184 = vld [vmem:[#allocation9 + $0xc60] sm:$0xff]
    %v2185 = vld [vmem:[#allocation9 + $0xc68] sm:$0xff]
    %v2186 = vld [vmem:[#allocation9 + $0xc70] sm:$0xff]
    %v2187 = vld [vmem:[#allocation9 + $0xc78] sm:$0xff]
    %v2188 = vld [vmem:[#allocation9 + $0xc80] sm:$0xff]
    %v2189 = vld [vmem:[#allocation9 + $0xc88] sm:$0xff]
    %v2190 = vld [vmem:[#allocation9 + $0xc90] sm:$0xff]
    %v2191 = vld [vmem:[#allocation9 + $0xc98] sm:$0xff]
    %v2192 = vld [vmem:[#allocation9 + $0xca0] sm:$0xff]
    %v2193 = vld [vmem:[#allocation9 + $0xca8] sm:$0xff]
    %v2194 = vld [vmem:[#allocation9 + $0xcb0] sm:$0xff]
    %v2195 = vld [vmem:[#allocation9 + $0xcb8] sm:$0xff]
    %v2196 = vld [vmem:[#allocation9 + $0xcc0] sm:$0xff]
    %v2197 = vld [vmem:[#allocation9 + $0xcc8] sm:$0xff]
    %v2198 = vld [vmem:[#allocation9 + $0xcd0] sm:$0xff]
    %v2199 = vld [vmem:[#allocation9 + $0xcd8] sm:$0xff]
    %v2200 = vld [vmem:[#allocation9 + $0xce0] sm:$0xff]
    %v2201 = vld [vmem:[#allocation9 + $0xce8] sm:$0xff]
    %v2202 = vld [vmem:[#allocation9 + $0xcf0] sm:$0xff]
    %v2203 = vld [vmem:[#allocation9 + $0xcf8] sm:$0xff]
    %v2204 = vld [vmem:[#allocation9 + $0xd00] sm:$0xff]
    %v2205 = vld [vmem:[#allocation9 + $0xd08] sm:$0xff]
    %v2206 = vld [vmem:[#allocation9 + $0xd10] sm:$0xff]
    %v2207 = vld [vmem:[#allocation9 + $0xd18] sm:$0xff]
    %v2208 = vld [vmem:[#allocation9 + $0xd20] sm:$0xff]
    %v2209 = vld [vmem:[#allocation9 + $0xd28] sm:$0xff]
    %v2210 = vld [vmem:[#allocation9 + $0xd30] sm:$0xff]
    %v2211 = vld [vmem:[#allocation9 + $0xd38] sm:$0xff]
    %v2212 = vld [vmem:[#allocation9 + $0xd40] sm:$0xff]
    %v2213 = vld [vmem:[#allocation9 + $0xd48] sm:$0xff]
    %v2214 = vld [vmem:[#allocation9 + $0xd50] sm:$0xff]
    %v2215 = vld [vmem:[#allocation9 + $0xd58] sm:$0xff]
    %v2216 = vld [vmem:[#allocation9 + $0xd60] sm:$0xff]
    %v2217 = vld [vmem:[#allocation9 + $0xd68] sm:$0xff]
    %v2218 = vld [vmem:[#allocation9 + $0xd70] sm:$0xff]
    %v2219 = vld [vmem:[#allocation9 + $0xd78] sm:$0xff]
    %v2220 = vld [vmem:[#allocation9 + $0xd80] sm:$0xff]
    %v2221 = vld [vmem:[#allocation9 + $0xd88] sm:$0xff]
    %v2222 = vld [vmem:[#allocation9 + $0xd90] sm:$0xff]
    %v2223 = vld [vmem:[#allocation9 + $0xd98] sm:$0xff]
    %v2224 = vld [vmem:[#allocation9 + $0xda0] sm:$0xff]
    %v2225 = vld [vmem:[#allocation9 + $0xda8] sm:$0xff]
    %v2226 = vld [vmem:[#allocation9 + $0xdb0] sm:$0xff]
    %v2227 = vld [vmem:[#allocation9 + $0xdb8] sm:$0xff]
    %v2228 = vld [vmem:[#allocation9 + $0xdc0] sm:$0xff]
    %v2229 = vld [vmem:[#allocation9 + $0xdc8] sm:$0xff]
    %v2230 = vld [vmem:[#allocation9 + $0xdd0] sm:$0xff]
    %v2231 = vld [vmem:[#allocation9 + $0xdd8] sm:$0xff]
    %v2232 = vld [vmem:[#allocation9 + $0xde0] sm:$0xff]
    %v2233 = vld [vmem:[#allocation9 + $0xde8] sm:$0xff]
    %v2234 = vld [vmem:[#allocation9 + $0xdf0] sm:$0xff]
    %v2235 = vld [vmem:[#allocation9 + $0xdf8] sm:$0xff]
    %v2236 = vld [vmem:[#allocation9 + $0xe00] sm:$0xff]
    %v2237 = vld [vmem:[#allocation9 + $0xe08] sm:$0xff]
    %v2238 = vld [vmem:[#allocation9 + $0xe10] sm:$0xff]
    %v2239 = vld [vmem:[#allocation9 + $0xe18] sm:$0xff]
    %v2240 = vld [vmem:[#allocation9 + $0xe20] sm:$0xff]
    %v2241 = vld [vmem:[#allocation9 + $0xe28] sm:$0xff]
    %v2242 = vld [vmem:[#allocation9 + $0xe30] sm:$0xff]
    %v2243 = vld [vmem:[#allocation9 + $0xe38] sm:$0xff]
    %v2244 = vld [vmem:[#allocation9 + $0xe40] sm:$0xff]
    %v2245 = vld [vmem:[#allocation9 + $0xe48] sm:$0xff]
    %v2246 = vld [vmem:[#allocation9 + $0xe50] sm:$0xff]
    %v2247 = vld [vmem:[#allocation9 + $0xe58] sm:$0xff]
    %v2248 = vld [vmem:[#allocation9 + $0xe60] sm:$0xff]
    %v2249 = vld [vmem:[#allocation9 + $0xe68] sm:$0xff]
    %v2250 = vld [vmem:[#allocation9 + $0xe70] sm:$0xff]
    %v2251 = vld [vmem:[#allocation9 + $0xe78] sm:$0xff]
    %v2252 = vld [vmem:[#allocation9 + $0xe80] sm:$0xff]
    %v2253 = vld [vmem:[#allocation9 + $0xe88] sm:$0xff]
    %v2254 = vld [vmem:[#allocation9 + $0xe90] sm:$0xff]
    %v2255 = vld [vmem:[#allocation9 + $0xe98] sm:$0xff]
    %v2256 = vld [vmem:[#allocation9 + $0xea0] sm:$0xff]
    %v2257 = vld [vmem:[#allocation9 + $0xea8] sm:$0xff]
    %v2258 = vld [vmem:[#allocation9 + $0xeb0] sm:$0xff]
    %v2259 = vld [vmem:[#allocation9 + $0xeb8] sm:$0xff]
    %v2260 = vld [vmem:[#allocation9 + $0xec0] sm:$0xff]
    %v2261 = vld [vmem:[#allocation9 + $0xec8] sm:$0xff]
    %v2262 = vld [vmem:[#allocation9 + $0xed0] sm:$0xff]
    %v2263 = vld [vmem:[#allocation9 + $0xed8] sm:$0xff]
    %v2264 = vld [vmem:[#allocation9 + $0xee0] sm:$0xff]
    %v2265 = vld [vmem:[#allocation9 + $0xee8] sm:$0xff]
    %v2266 = vld [vmem:[#allocation9 + $0xef0] sm:$0xff]
    %v2267 = vld [vmem:[#allocation9 + $0xef8] sm:$0xff]
    %v2268 = vld [vmem:[#allocation9 + $0xf00] sm:$0xff]
    %v2269 = vld [vmem:[#allocation9 + $0xf08] sm:$0xff]
    %v2270 = vld [vmem:[#allocation9 + $0xf10] sm:$0xff]
    %v2271 = vld [vmem:[#allocation9 + $0xf18] sm:$0xff]
    %v2272 = vld [vmem:[#allocation9 + $0xf20] sm:$0xff]
    %v2273 = vld [vmem:[#allocation9 + $0xf28] sm:$0xff]
    %v2274 = vld [vmem:[#allocation9 + $0xf30] sm:$0xff]
    %v2275 = vld [vmem:[#allocation9 + $0xf38] sm:$0xff]
    %v2276 = vld [vmem:[#allocation9 + $0xf40] sm:$0xff]
    %v2277 = vld [vmem:[#allocation9 + $0xf48] sm:$0xff]
    %v2278 = vld [vmem:[#allocation9 + $0xf50] sm:$0xff]
    %v2279 = vld [vmem:[#allocation9 + $0xf58] sm:$0xff]
    %v2280 = vld [vmem:[#allocation9 + $0xf60] sm:$0xff]
    %v2281 = vld [vmem:[#allocation9 + $0xf68] sm:$0xff]
    %v2282 = vld [vmem:[#allocation9 + $0xf70] sm:$0xff]
    %v2283 = vld [vmem:[#allocation9 + $0xf78] sm:$0xff]
    %v2284 = vld [vmem:[#allocation9 + $0xf80] sm:$0xff]
    %v2285 = vld [vmem:[#allocation9 + $0xf88] sm:$0xff]
    %v2286 = vld [vmem:[#allocation9 + $0xf90] sm:$0xff]
    %v2287 = vld [vmem:[#allocation9 + $0xf98] sm:$0xff]
    %v2288 = vld [vmem:[#allocation9 + $0xfa0] sm:$0xff]
    %v2289 = vld [vmem:[#allocation9 + $0xfa8] sm:$0xff]
    %v2290 = vld [vmem:[#allocation9 + $0xfb0] sm:$0xff]
    %v2291 = vld [vmem:[#allocation9 + $0xfb8] sm:$0xff]
    %v2292 = vld [vmem:[#allocation9 + $0xfc0] sm:$0xff]
    %v2293 = vld [vmem:[#allocation9 + $0xfc8] sm:$0xff]
    %v2294 = vld [vmem:[#allocation9 + $0xfd0] sm:$0xff]
    %v2295 = vld [vmem:[#allocation9 + $0xfd8] sm:$0xff]
    %v2296 = vld [vmem:[#allocation9 + $0xfe0] sm:$0xff]
    %v2297 = vld [vmem:[#allocation9 + $0xfe8] sm:$0xff]
    %v2298 = vld [vmem:[#allocation9 + $0xff0] sm:$0xff]
    %v2299 = vld [vmem:[#allocation9 + $0xff8] sm:$0xff]
    %v2300 = vld [vmem:[#allocation10] sm:$0xf]
    %v2302 = vlaneseq
    %v2303 = vshrl.u32 %v2302, 7
    %v2304 = vsub.s32 0, %v2303
    %v2305 = vrot.slane %v2300, %v2304
    %v2306 = vlaneseq
    %v2307 = vshrl.u32 %v2306, 7
    %v2308 = vsub.s32 1, %v2307
    %v2309 = vrot.slane %v2300, %v2308
    %v2310 = vlaneseq
    %v2311 = vshrl.u32 %v2310, 7
    %v2312 = vsub.s32 2, %v2311
    %v2313 = vrot.slane %v2300, %v2312
    %v2314 = vlaneseq
    %v2315 = vshrl.u32 %v2314, 7
    %v2316 = vsub.s32 3, %v2315
    %v2317 = vrot.slane %v2300, %v2316
    %v2834 = vunpack.c.l.b16 %v1788
    %v2835 = vunpack.c.h.b16 %v1788
    %v2836 = vunpack.c.l.b16 %v1789
    %v2837 = vunpack.c.h.b16 %v1789
    %v2838 = vunpack.c.l.b16 %v1790
    %v2839 = vunpack.c.h.b16 %v1790
    %v2840 = vunpack.c.l.b16 %v1791
    %v2841 = vunpack.c.h.b16 %v1791
    %v2842 = vunpack.c.l.b16 %v1792
    %v2843 = vunpack.c.h.b16 %v1792
    %v2844 = vunpack.c.l.b16 %v1793
    %v2845 = vunpack.c.h.b16 %v1793
    %v2846 = vunpack.c.l.b16 %v1794
    %v2847 = vunpack.c.h.b16 %v1794
    %v2848 = vunpack.c.l.b16 %v1795
    %v2849 = vunpack.c.h.b16 %v1795
    %v2850 = vunpack.c.l.b16 %v1796
    %v2851 = vunpack.c.h.b16 %v1796
    %v2852 = vunpack.c.l.b16 %v1797
    %v2853 = vunpack.c.h.b16 %v1797
    %v2854 = vunpack.c.l.b16 %v1798
    %v2855 = vunpack.c.h.b16 %v1798
    %v2856 = vunpack.c.l.b16 %v1799
    %v2857 = vunpack.c.h.b16 %v1799
    %v2858 = vunpack.c.l.b16 %v1800
    %v2859 = vunpack.c.h.b16 %v1800
    %v2860 = vunpack.c.l.b16 %v1801
    %v2861 = vunpack.c.h.b16 %v1801
    %v2862 = vunpack.c.l.b16 %v1802
    %v2863 = vunpack.c.h.b16 %v1802
    %v2864 = vunpack.c.l.b16 %v1803
    %v2865 = vunpack.c.h.b16 %v1803
    %v2866 = vunpack.c.l.b16 %v1804
    %v2867 = vunpack.c.h.b16 %v1804
    %v2868 = vunpack.c.l.b16 %v1805
    %v2869 = vunpack.c.h.b16 %v1805
    %v2870 = vunpack.c.l.b16 %v1806
    %v2871 = vunpack.c.h.b16 %v1806
    %v2872 = vunpack.c.l.b16 %v1807
    %v2873 = vunpack.c.h.b16 %v1807
    %v2874 = vunpack.c.l.b16 %v1808
    %v2875 = vunpack.c.h.b16 %v1808
    %v2876 = vunpack.c.l.b16 %v1809
    %v2877 = vunpack.c.h.b16 %v1809
    %v2878 = vunpack.c.l.b16 %v1810
    %v2879 = vunpack.c.h.b16 %v1810
    %v2880 = vunpack.c.l.b16 %v1811
    %v2881 = vunpack.c.h.b16 %v1811
    %v2882 = vunpack.c.l.b16 %v1812
    %v2883 = vunpack.c.h.b16 %v1812
    %v2884 = vunpack.c.l.b16 %v1813
    %v2885 = vunpack.c.h.b16 %v1813
    %v2886 = vunpack.c.l.b16 %v1814
    %v2887 = vunpack.c.h.b16 %v1814
    %v2888 = vunpack.c.l.b16 %v1815
    %v2889 = vunpack.c.h.b16 %v1815
    %v2890 = vunpack.c.l.b16 %v1816
    %v2891 = vunpack.c.h.b16 %v1816
    %v2892 = vunpack.c.l.b16 %v1817
    %v2893 = vunpack.c.h.b16 %v1817
    %v2894 = vunpack.c.l.b16 %v1818
    %v2895 = vunpack.c.h.b16 %v1818
    %v2896 = vunpack.c.l.b16 %v1819
    %v2897 = vunpack.c.h.b16 %v1819
    %v2898 = vunpack.c.l.b16 %v1820
    %v2899 = vunpack.c.h.b16 %v1820
    %v2900 = vunpack.c.l.b16 %v1821
    %v2901 = vunpack.c.h.b16 %v1821
    %v2902 = vunpack.c.l.b16 %v1822
    %v2903 = vunpack.c.h.b16 %v1822
    %v2904 = vunpack.c.l.b16 %v1823
    %v2905 = vunpack.c.h.b16 %v1823
    %v2906 = vunpack.c.l.b16 %v1824
    %v2907 = vunpack.c.h.b16 %v1824
    %v2908 = vunpack.c.l.b16 %v1825
    %v2909 = vunpack.c.h.b16 %v1825
    %v2910 = vunpack.c.l.b16 %v1826
    %v2911 = vunpack.c.h.b16 %v1826
    %v2912 = vunpack.c.l.b16 %v1827
    %v2913 = vunpack.c.h.b16 %v1827
    %v2914 = vunpack.c.l.b16 %v1828
    %v2915 = vunpack.c.h.b16 %v1828
    %v2916 = vunpack.c.l.b16 %v1829
    %v2917 = vunpack.c.h.b16 %v1829
    %v2918 = vunpack.c.l.b16 %v1830
    %v2919 = vunpack.c.h.b16 %v1830
    %v2920 = vunpack.c.l.b16 %v1831
    %v2921 = vunpack.c.h.b16 %v1831
    %v2922 = vunpack.c.l.b16 %v1832
    %v2923 = vunpack.c.h.b16 %v1832
    %v2924 = vunpack.c.l.b16 %v1833
    %v2925 = vunpack.c.h.b16 %v1833
    %v2926 = vunpack.c.l.b16 %v1834
    %v2927 = vunpack.c.h.b16 %v1834
    %v2928 = vunpack.c.l.b16 %v1835
    %v2929 = vunpack.c.h.b16 %v1835
    %v2930 = vunpack.c.l.b16 %v1836
    %v2931 = vunpack.c.h.b16 %v1836
    %v2932 = vunpack.c.l.b16 %v1837
    %v2933 = vunpack.c.h.b16 %v1837
    %v2934 = vunpack.c.l.b16 %v1838
    %v2935 = vunpack.c.h.b16 %v1838
    %v2936 = vunpack.c.l.b16 %v1839
    %v2937 = vunpack.c.h.b16 %v1839
    %v2938 = vunpack.c.l.b16 %v1840
    %v2939 = vunpack.c.h.b16 %v1840
    %v2940 = vunpack.c.l.b16 %v1841
    %v2941 = vunpack.c.h.b16 %v1841
    %v2942 = vunpack.c.l.b16 %v1842
    %v2943 = vunpack.c.h.b16 %v1842
    %v2944 = vunpack.c.l.b16 %v1843
    %v2945 = vunpack.c.h.b16 %v1843
    %v2946 = vunpack.c.l.b16 %v1844
    %v2947 = vunpack.c.h.b16 %v1844
    %v2948 = vunpack.c.l.b16 %v1845
    %v2949 = vunpack.c.h.b16 %v1845
    %v2950 = vunpack.c.l.b16 %v1846
    %v2951 = vunpack.c.h.b16 %v1846
    %v2952 = vunpack.c.l.b16 %v1847
    %v2953 = vunpack.c.h.b16 %v1847
    %v2954 = vunpack.c.l.b16 %v1848
    %v2955 = vunpack.c.h.b16 %v1848
    %v2956 = vunpack.c.l.b16 %v1849
    %v2957 = vunpack.c.h.b16 %v1849
    %v2958 = vunpack.c.l.b16 %v1850
    %v2959 = vunpack.c.h.b16 %v1850
    %v2960 = vunpack.c.l.b16 %v1851
    %v2961 = vunpack.c.h.b16 %v1851
    %v2962 = vunpack.c.l.b16 %v1852
    %v2963 = vunpack.c.h.b16 %v1852
    %v2964 = vunpack.c.l.b16 %v1853
    %v2965 = vunpack.c.h.b16 %v1853
    %v2966 = vunpack.c.l.b16 %v1854
    %v2967 = vunpack.c.h.b16 %v1854
    %v2968 = vunpack.c.l.b16 %v1855
    %v2969 = vunpack.c.h.b16 %v1855
    %v2970 = vunpack.c.l.b16 %v1856
    %v2971 = vunpack.c.h.b16 %v1856
    %v2972 = vunpack.c.l.b16 %v1857
    %v2973 = vunpack.c.h.b16 %v1857
    %v2974 = vunpack.c.l.b16 %v1858
    %v2975 = vunpack.c.h.b16 %v1858
    %v2976 = vunpack.c.l.b16 %v1859
    %v2977 = vunpack.c.h.b16 %v1859
    %v2978 = vunpack.c.l.b16 %v1860
    %v2979 = vunpack.c.h.b16 %v1860
    %v2980 = vunpack.c.l.b16 %v1861
    %v2981 = vunpack.c.h.b16 %v1861
    %v2982 = vunpack.c.l.b16 %v1862
    %v2983 = vunpack.c.h.b16 %v1862
    %v2984 = vunpack.c.l.b16 %v1863
    %v2985 = vunpack.c.h.b16 %v1863
    %v2986 = vunpack.c.l.b16 %v1864
    %v2987 = vunpack.c.h.b16 %v1864
    %v2988 = vunpack.c.l.b16 %v1865
    %v2989 = vunpack.c.h.b16 %v1865
    %v2990 = vunpack.c.l.b16 %v1866
    %v2991 = vunpack.c.h.b16 %v1866
    %v2992 = vunpack.c.l.b16 %v1867
    %v2993 = vunpack.c.h.b16 %v1867
    %v2994 = vunpack.c.l.b16 %v1868
    %v2995 = vunpack.c.h.b16 %v1868
    %v2996 = vunpack.c.l.b16 %v1869
    %v2997 = vunpack.c.h.b16 %v1869
    %v2998 = vunpack.c.l.b16 %v1870
    %v2999 = vunpack.c.h.b16 %v1870
    %v3000 = vunpack.c.l.b16 %v1871
    %v3001 = vunpack.c.h.b16 %v1871
    %v3002 = vunpack.c.l.b16 %v1872
    %v3003 = vunpack.c.h.b16 %v1872
    %v3004 = vunpack.c.l.b16 %v1873
    %v3005 = vunpack.c.h.b16 %v1873
    %v3006 = vunpack.c.l.b16 %v1874
    %v3007 = vunpack.c.h.b16 %v1874
    %v3008 = vunpack.c.l.b16 %v1875
    %v3009 = vunpack.c.h.b16 %v1875
    %v3010 = vunpack.c.l.b16 %v1876
    %v3011 = vunpack.c.h.b16 %v1876
    %v3012 = vunpack.c.l.b16 %v1877
    %v3013 = vunpack.c.h.b16 %v1877
    %v3014 = vunpack.c.l.b16 %v1878
    %v3015 = vunpack.c.h.b16 %v1878
    %v3016 = vunpack.c.l.b16 %v1879
    %v3017 = vunpack.c.h.b16 %v1879
    %v3018 = vunpack.c.l.b16 %v1880
    %v3019 = vunpack.c.h.b16 %v1880
    %v3020 = vunpack.c.l.b16 %v1881
    %v3021 = vunpack.c.h.b16 %v1881
    %v3022 = vunpack.c.l.b16 %v1882
    %v3023 = vunpack.c.h.b16 %v1882
    %v3024 = vunpack.c.l.b16 %v1883
    %v3025 = vunpack.c.h.b16 %v1883
    %v3026 = vunpack.c.l.b16 %v1884
    %v3027 = vunpack.c.h.b16 %v1884
    %v3028 = vunpack.c.l.b16 %v1885
    %v3029 = vunpack.c.h.b16 %v1885
    %v3030 = vunpack.c.l.b16 %v1886
    %v3031 = vunpack.c.h.b16 %v1886
    %v3032 = vunpack.c.l.b16 %v1887
    %v3033 = vunpack.c.h.b16 %v1887
    %v3034 = vunpack.c.l.b16 %v1888
    %v3035 = vunpack.c.h.b16 %v1888
    %v3036 = vunpack.c.l.b16 %v1889
    %v3037 = vunpack.c.h.b16 %v1889
    %v3038 = vunpack.c.l.b16 %v1890
    %v3039 = vunpack.c.h.b16 %v1890
    %v3040 = vunpack.c.l.b16 %v1891
    %v3041 = vunpack.c.h.b16 %v1891
    %v3042 = vunpack.c.l.b16 %v1892
    %v3043 = vunpack.c.h.b16 %v1892
    %v3044 = vunpack.c.l.b16 %v1893
    %v3045 = vunpack.c.h.b16 %v1893
    %v3046 = vunpack.c.l.b16 %v1894
    %v3047 = vunpack.c.h.b16 %v1894
    %v3048 = vunpack.c.l.b16 %v1895
    %v3049 = vunpack.c.h.b16 %v1895
    %v3050 = vunpack.c.l.b16 %v1896
    %v3051 = vunpack.c.h.b16 %v1896
    %v3052 = vunpack.c.l.b16 %v1897
    %v3053 = vunpack.c.h.b16 %v1897
    %v3054 = vunpack.c.l.b16 %v1898
    %v3055 = vunpack.c.h.b16 %v1898
    %v3056 = vunpack.c.l.b16 %v1899
    %v3057 = vunpack.c.h.b16 %v1899
    %v3058 = vunpack.c.l.b16 %v1900
    %v3059 = vunpack.c.h.b16 %v1900
    %v3060 = vunpack.c.l.b16 %v1901
    %v3061 = vunpack.c.h.b16 %v1901
    %v3062 = vunpack.c.l.b16 %v1902
    %v3063 = vunpack.c.h.b16 %v1902
    %v3064 = vunpack.c.l.b16 %v1903
    %v3065 = vunpack.c.h.b16 %v1903
    %v3066 = vunpack.c.l.b16 %v1904
    %v3067 = vunpack.c.h.b16 %v1904
    %v3068 = vunpack.c.l.b16 %v1905
    %v3069 = vunpack.c.h.b16 %v1905
    %v3070 = vunpack.c.l.b16 %v1906
    %v3071 = vunpack.c.h.b16 %v1906
    %v3072 = vunpack.c.l.b16 %v1907
    %v3073 = vunpack.c.h.b16 %v1907
    %v3074 = vunpack.c.l.b16 %v1908
    %v3075 = vunpack.c.h.b16 %v1908
    %v3076 = vunpack.c.l.b16 %v1909
    %v3077 = vunpack.c.h.b16 %v1909
    %v3078 = vunpack.c.l.b16 %v1910
    %v3079 = vunpack.c.h.b16 %v1910
    %v3080 = vunpack.c.l.b16 %v1911
    %v3081 = vunpack.c.h.b16 %v1911
    %v3082 = vunpack.c.l.b16 %v1912
    %v3083 = vunpack.c.h.b16 %v1912
    %v3084 = vunpack.c.l.b16 %v1913
    %v3085 = vunpack.c.h.b16 %v1913
    %v3086 = vunpack.c.l.b16 %v1914
    %v3087 = vunpack.c.h.b16 %v1914
    %v3088 = vunpack.c.l.b16 %v1915
    %v3089 = vunpack.c.h.b16 %v1915
    %v3090 = vunpack.c.l.b16 %v1916
    %v3091 = vunpack.c.h.b16 %v1916
    %v3092 = vunpack.c.l.b16 %v1917
    %v3093 = vunpack.c.h.b16 %v1917
    %v3094 = vunpack.c.l.b16 %v1918
    %v3095 = vunpack.c.h.b16 %v1918
    %v3096 = vunpack.c.l.b16 %v1919
    %v3097 = vunpack.c.h.b16 %v1919
    %v3098 = vunpack.c.l.b16 %v1920
    %v3099 = vunpack.c.h.b16 %v1920
    %v3100 = vunpack.c.l.b16 %v1921
    %v3101 = vunpack.c.h.b16 %v1921
    %v3102 = vunpack.c.l.b16 %v1922
    %v3103 = vunpack.c.h.b16 %v1922
    %v3104 = vunpack.c.l.b16 %v1923
    %v3105 = vunpack.c.h.b16 %v1923
    %v3106 = vunpack.c.l.b16 %v1924
    %v3107 = vunpack.c.h.b16 %v1924
    %v3108 = vunpack.c.l.b16 %v1925
    %v3109 = vunpack.c.h.b16 %v1925
    %v3110 = vunpack.c.l.b16 %v1926
    %v3111 = vunpack.c.h.b16 %v1926
    %v3112 = vunpack.c.l.b16 %v1927
    %v3113 = vunpack.c.h.b16 %v1927
    %v3114 = vunpack.c.l.b16 %v1928
    %v3115 = vunpack.c.h.b16 %v1928
    %v3116 = vunpack.c.l.b16 %v1929
    %v3117 = vunpack.c.h.b16 %v1929
    %v3118 = vunpack.c.l.b16 %v1930
    %v3119 = vunpack.c.h.b16 %v1930
    %v3120 = vunpack.c.l.b16 %v1931
    %v3121 = vunpack.c.h.b16 %v1931
    %v3122 = vunpack.c.l.b16 %v1932
    %v3123 = vunpack.c.h.b16 %v1932
    %v3124 = vunpack.c.l.b16 %v1933
    %v3125 = vunpack.c.h.b16 %v1933
    %v3126 = vunpack.c.l.b16 %v1934
    %v3127 = vunpack.c.h.b16 %v1934
    %v3128 = vunpack.c.l.b16 %v1935
    %v3129 = vunpack.c.h.b16 %v1935
    %v3130 = vunpack.c.l.b16 %v1936
    %v3131 = vunpack.c.h.b16 %v1936
    %v3132 = vunpack.c.l.b16 %v1937
    %v3133 = vunpack.c.h.b16 %v1937
    %v3134 = vunpack.c.l.b16 %v1938
    %v3135 = vunpack.c.h.b16 %v1938
    %v3136 = vunpack.c.l.b16 %v1939
    %v3137 = vunpack.c.h.b16 %v1939
    %v3138 = vunpack.c.l.b16 %v1940
    %v3139 = vunpack.c.h.b16 %v1940
    %v3140 = vunpack.c.l.b16 %v1941
    %v3141 = vunpack.c.h.b16 %v1941
    %v3142 = vunpack.c.l.b16 %v1942
    %v3143 = vunpack.c.h.b16 %v1942
    %v3144 = vunpack.c.l.b16 %v1943
    %v3145 = vunpack.c.h.b16 %v1943
    %v3146 = vunpack.c.l.b16 %v1944
    %v3147 = vunpack.c.h.b16 %v1944
    %v3148 = vunpack.c.l.b16 %v1945
    %v3149 = vunpack.c.h.b16 %v1945
    %v3150 = vunpack.c.l.b16 %v1946
    %v3151 = vunpack.c.h.b16 %v1946
    %v3152 = vunpack.c.l.b16 %v1947
    %v3153 = vunpack.c.h.b16 %v1947
    %v3154 = vunpack.c.l.b16 %v1948
    %v3155 = vunpack.c.h.b16 %v1948
    %v3156 = vunpack.c.l.b16 %v1949
    %v3157 = vunpack.c.h.b16 %v1949
    %v3158 = vunpack.c.l.b16 %v1950
    %v3159 = vunpack.c.h.b16 %v1950
    %v3160 = vunpack.c.l.b16 %v1951
    %v3161 = vunpack.c.h.b16 %v1951
    %v3162 = vunpack.c.l.b16 %v1952
    %v3163 = vunpack.c.h.b16 %v1952
    %v3164 = vunpack.c.l.b16 %v1953
    %v3165 = vunpack.c.h.b16 %v1953
    %v3166 = vunpack.c.l.b16 %v1954
    %v3167 = vunpack.c.h.b16 %v1954
    %v3168 = vunpack.c.l.b16 %v1955
    %v3169 = vunpack.c.h.b16 %v1955
    %v3170 = vunpack.c.l.b16 %v1956
    %v3171 = vunpack.c.h.b16 %v1956
    %v3172 = vunpack.c.l.b16 %v1957
    %v3173 = vunpack.c.h.b16 %v1957
    %v3174 = vunpack.c.l.b16 %v1958
    %v3175 = vunpack.c.h.b16 %v1958
    %v3176 = vunpack.c.l.b16 %v1959
    %v3177 = vunpack.c.h.b16 %v1959
    %v3178 = vunpack.c.l.b16 %v1960
    %v3179 = vunpack.c.h.b16 %v1960
    %v3180 = vunpack.c.l.b16 %v1961
    %v3181 = vunpack.c.h.b16 %v1961
    %v3182 = vunpack.c.l.b16 %v1962
    %v3183 = vunpack.c.h.b16 %v1962
    %v3184 = vunpack.c.l.b16 %v1963
    %v3185 = vunpack.c.h.b16 %v1963
    %v3186 = vunpack.c.l.b16 %v1964
    %v3187 = vunpack.c.h.b16 %v1964
    %v3188 = vunpack.c.l.b16 %v1965
    %v3189 = vunpack.c.h.b16 %v1965
    %v3190 = vunpack.c.l.b16 %v1966
    %v3191 = vunpack.c.h.b16 %v1966
    %v3192 = vunpack.c.l.b16 %v1967
    %v3193 = vunpack.c.h.b16 %v1967
    %v3194 = vunpack.c.l.b16 %v1968
    %v3195 = vunpack.c.h.b16 %v1968
    %v3196 = vunpack.c.l.b16 %v1969
    %v3197 = vunpack.c.h.b16 %v1969
    %v3198 = vunpack.c.l.b16 %v1970
    %v3199 = vunpack.c.h.b16 %v1970
    %v3200 = vunpack.c.l.b16 %v1971
    %v3201 = vunpack.c.h.b16 %v1971
    %v3202 = vunpack.c.l.b16 %v1972
    %v3203 = vunpack.c.h.b16 %v1972
    %v3204 = vunpack.c.l.b16 %v1973
    %v3205 = vunpack.c.h.b16 %v1973
    %v3206 = vunpack.c.l.b16 %v1974
    %v3207 = vunpack.c.h.b16 %v1974
    %v3208 = vunpack.c.l.b16 %v1975
    %v3209 = vunpack.c.h.b16 %v1975
    %v3210 = vunpack.c.l.b16 %v1976
    %v3211 = vunpack.c.h.b16 %v1976
    %v3212 = vunpack.c.l.b16 %v1977
    %v3213 = vunpack.c.h.b16 %v1977
    %v3214 = vunpack.c.l.b16 %v1978
    %v3215 = vunpack.c.h.b16 %v1978
    %v3216 = vunpack.c.l.b16 %v1979
    %v3217 = vunpack.c.h.b16 %v1979
    %v3218 = vunpack.c.l.b16 %v1980
    %v3219 = vunpack.c.h.b16 %v1980
    %v3220 = vunpack.c.l.b16 %v1981
    %v3221 = vunpack.c.h.b16 %v1981
    %v3222 = vunpack.c.l.b16 %v1982
    %v3223 = vunpack.c.h.b16 %v1982
    %v3224 = vunpack.c.l.b16 %v1983
    %v3225 = vunpack.c.h.b16 %v1983
    %v3226 = vunpack.c.l.b16 %v1984
    %v3227 = vunpack.c.h.b16 %v1984
    %v3228 = vunpack.c.l.b16 %v1985
    %v3229 = vunpack.c.h.b16 %v1985
    %v3230 = vunpack.c.l.b16 %v1986
    %v3231 = vunpack.c.h.b16 %v1986
    %v3232 = vunpack.c.l.b16 %v1987
    %v3233 = vunpack.c.h.b16 %v1987
    %v3234 = vunpack.c.l.b16 %v1988
    %v3235 = vunpack.c.h.b16 %v1988
    %v3236 = vunpack.c.l.b16 %v1989
    %v3237 = vunpack.c.h.b16 %v1989
    %v3238 = vunpack.c.l.b16 %v1990
    %v3239 = vunpack.c.h.b16 %v1990
    %v3240 = vunpack.c.l.b16 %v1991
    %v3241 = vunpack.c.h.b16 %v1991
    %v3242 = vunpack.c.l.b16 %v1992
    %v3243 = vunpack.c.h.b16 %v1992
    %v3244 = vunpack.c.l.b16 %v1993
    %v3245 = vunpack.c.h.b16 %v1993
    %v3246 = vunpack.c.l.b16 %v1994
    %v3247 = vunpack.c.h.b16 %v1994
    %v3248 = vunpack.c.l.b16 %v1995
    %v3249 = vunpack.c.h.b16 %v1995
    %v3250 = vunpack.c.l.b16 %v1996
    %v3251 = vunpack.c.h.b16 %v1996
    %v3252 = vunpack.c.l.b16 %v1997
    %v3253 = vunpack.c.h.b16 %v1997
    %v3254 = vunpack.c.l.b16 %v1998
    %v3255 = vunpack.c.h.b16 %v1998
    %v3256 = vunpack.c.l.b16 %v1999
    %v3257 = vunpack.c.h.b16 %v1999
    %v3258 = vunpack.c.l.b16 %v2000
    %v3259 = vunpack.c.h.b16 %v2000
    %v3260 = vunpack.c.l.b16 %v2001
    %v3261 = vunpack.c.h.b16 %v2001
    %v3262 = vunpack.c.l.b16 %v2002
    %v3263 = vunpack.c.h.b16 %v2002
    %v3264 = vunpack.c.l.b16 %v2003
    %v3265 = vunpack.c.h.b16 %v2003
    %v3266 = vunpack.c.l.b16 %v2004
    %v3267 = vunpack.c.h.b16 %v2004
    %v3268 = vunpack.c.l.b16 %v2005
    %v3269 = vunpack.c.h.b16 %v2005
    %v3270 = vunpack.c.l.b16 %v2006
    %v3271 = vunpack.c.h.b16 %v2006
    %v3272 = vunpack.c.l.b16 %v2007
    %v3273 = vunpack.c.h.b16 %v2007
    %v3274 = vunpack.c.l.b16 %v2008
    %v3275 = vunpack.c.h.b16 %v2008
    %v3276 = vunpack.c.l.b16 %v2009
    %v3277 = vunpack.c.h.b16 %v2009
    %v3278 = vunpack.c.l.b16 %v2010
    %v3279 = vunpack.c.h.b16 %v2010
    %v3280 = vunpack.c.l.b16 %v2011
    %v3281 = vunpack.c.h.b16 %v2011
    %v3282 = vunpack.c.l.b16 %v2012
    %v3283 = vunpack.c.h.b16 %v2012
    %v3284 = vunpack.c.l.b16 %v2013
    %v3285 = vunpack.c.h.b16 %v2013
    %v3286 = vunpack.c.l.b16 %v2014
    %v3287 = vunpack.c.h.b16 %v2014
    %v3288 = vunpack.c.l.b16 %v2015
    %v3289 = vunpack.c.h.b16 %v2015
    %v3290 = vunpack.c.l.b16 %v2016
    %v3291 = vunpack.c.h.b16 %v2016
    %v3292 = vunpack.c.l.b16 %v2017
    %v3293 = vunpack.c.h.b16 %v2017
    %v3294 = vunpack.c.l.b16 %v2018
    %v3295 = vunpack.c.h.b16 %v2018
    %v3296 = vunpack.c.l.b16 %v2019
    %v3297 = vunpack.c.h.b16 %v2019
    %v3298 = vunpack.c.l.b16 %v2020
    %v3299 = vunpack.c.h.b16 %v2020
    %v3300 = vunpack.c.l.b16 %v2021
    %v3301 = vunpack.c.h.b16 %v2021
    %v3302 = vunpack.c.l.b16 %v2022
    %v3303 = vunpack.c.h.b16 %v2022
    %v3304 = vunpack.c.l.b16 %v2023
    %v3305 = vunpack.c.h.b16 %v2023
    %v3306 = vunpack.c.l.b16 %v2024
    %v3307 = vunpack.c.h.b16 %v2024
    %v3308 = vunpack.c.l.b16 %v2025
    %v3309 = vunpack.c.h.b16 %v2025
    %v3310 = vunpack.c.l.b16 %v2026
    %v3311 = vunpack.c.h.b16 %v2026
    %v3312 = vunpack.c.l.b16 %v2027
    %v3313 = vunpack.c.h.b16 %v2027
    %v3314 = vunpack.c.l.b16 %v2028
    %v3315 = vunpack.c.h.b16 %v2028
    %v3316 = vunpack.c.l.b16 %v2029
    %v3317 = vunpack.c.h.b16 %v2029
    %v3318 = vunpack.c.l.b16 %v2030
    %v3319 = vunpack.c.h.b16 %v2030
    %v3320 = vunpack.c.l.b16 %v2031
    %v3321 = vunpack.c.h.b16 %v2031
    %v3322 = vunpack.c.l.b16 %v2032
    %v3323 = vunpack.c.h.b16 %v2032
    %v3324 = vunpack.c.l.b16 %v2033
    %v3325 = vunpack.c.h.b16 %v2033
    %v3326 = vunpack.c.l.b16 %v2034
    %v3327 = vunpack.c.h.b16 %v2034
    %v3328 = vunpack.c.l.b16 %v2035
    %v3329 = vunpack.c.h.b16 %v2035
    %v3330 = vunpack.c.l.b16 %v2036
    %v3331 = vunpack.c.h.b16 %v2036
    %v3332 = vunpack.c.l.b16 %v2037
    %v3333 = vunpack.c.h.b16 %v2037
    %v3334 = vunpack.c.l.b16 %v2038
    %v3335 = vunpack.c.h.b16 %v2038
    %v3336 = vunpack.c.l.b16 %v2039
    %v3337 = vunpack.c.h.b16 %v2039
    %v3338 = vunpack.c.l.b16 %v2040
    %v3339 = vunpack.c.h.b16 %v2040
    %v3340 = vunpack.c.l.b16 %v2041
    %v3341 = vunpack.c.h.b16 %v2041
    %v3342 = vunpack.c.l.b16 %v2042
    %v3343 = vunpack.c.h.b16 %v2042
    %v3344 = vunpack.c.l.b16 %v2043
    %v3345 = vunpack.c.h.b16 %v2043
    %v3346 = vunpack.c.l.b16 %v2044
    %v3347 = vunpack.c.h.b16 %v2044
    %v3348 = vunpack.c.l.b16 %v2045
    %v3349 = vunpack.c.h.b16 %v2045
    %v3350 = vunpack.c.l.b16 %v2046
    %v3351 = vunpack.c.h.b16 %v2046
    %v3352 = vunpack.c.l.b16 %v2047
    %v3353 = vunpack.c.h.b16 %v2047
    %v3354 = vunpack.c.l.b16 %v2048
    %v3355 = vunpack.c.h.b16 %v2048
    %v3356 = vunpack.c.l.b16 %v2049
    %v3357 = vunpack.c.h.b16 %v2049
    %v3358 = vunpack.c.l.b16 %v2050
    %v3359 = vunpack.c.h.b16 %v2050
    %v3360 = vunpack.c.l.b16 %v2051
    %v3361 = vunpack.c.h.b16 %v2051
    %v3362 = vunpack.c.l.b16 %v2052
    %v3363 = vunpack.c.h.b16 %v2052
    %v3364 = vunpack.c.l.b16 %v2053
    %v3365 = vunpack.c.h.b16 %v2053
    %v3366 = vunpack.c.l.b16 %v2054
    %v3367 = vunpack.c.h.b16 %v2054
    %v3368 = vunpack.c.l.b16 %v2055
    %v3369 = vunpack.c.h.b16 %v2055
    %v3370 = vunpack.c.l.b16 %v2056
    %v3371 = vunpack.c.h.b16 %v2056
    %v3372 = vunpack.c.l.b16 %v2057
    %v3373 = vunpack.c.h.b16 %v2057
    %v3374 = vunpack.c.l.b16 %v2058
    %v3375 = vunpack.c.h.b16 %v2058
    %v3376 = vunpack.c.l.b16 %v2059
    %v3377 = vunpack.c.h.b16 %v2059
    %v3378 = vunpack.c.l.b16 %v2060
    %v3379 = vunpack.c.h.b16 %v2060
    %v3380 = vunpack.c.l.b16 %v2061
    %v3381 = vunpack.c.h.b16 %v2061
    %v3382 = vunpack.c.l.b16 %v2062
    %v3383 = vunpack.c.h.b16 %v2062
    %v3384 = vunpack.c.l.b16 %v2063
    %v3385 = vunpack.c.h.b16 %v2063
    %v3386 = vunpack.c.l.b16 %v2064
    %v3387 = vunpack.c.h.b16 %v2064
    %v3388 = vunpack.c.l.b16 %v2065
    %v3389 = vunpack.c.h.b16 %v2065
    %v3390 = vunpack.c.l.b16 %v2066
    %v3391 = vunpack.c.h.b16 %v2066
    %v3392 = vunpack.c.l.b16 %v2067
    %v3393 = vunpack.c.h.b16 %v2067
    %v3394 = vunpack.c.l.b16 %v2068
    %v3395 = vunpack.c.h.b16 %v2068
    %v3396 = vunpack.c.l.b16 %v2069
    %v3397 = vunpack.c.h.b16 %v2069
    %v3398 = vunpack.c.l.b16 %v2070
    %v3399 = vunpack.c.h.b16 %v2070
    %v3400 = vunpack.c.l.b16 %v2071
    %v3401 = vunpack.c.h.b16 %v2071
    %v3402 = vunpack.c.l.b16 %v2072
    %v3403 = vunpack.c.h.b16 %v2072
    %v3404 = vunpack.c.l.b16 %v2073
    %v3405 = vunpack.c.h.b16 %v2073
    %v3406 = vunpack.c.l.b16 %v2074
    %v3407 = vunpack.c.h.b16 %v2074
    %v3408 = vunpack.c.l.b16 %v2075
    %v3409 = vunpack.c.h.b16 %v2075
    %v3410 = vunpack.c.l.b16 %v2076
    %v3411 = vunpack.c.h.b16 %v2076
    %v3412 = vunpack.c.l.b16 %v2077
    %v3413 = vunpack.c.h.b16 %v2077
    %v3414 = vunpack.c.l.b16 %v2078
    %v3415 = vunpack.c.h.b16 %v2078
    %v3416 = vunpack.c.l.b16 %v2079
    %v3417 = vunpack.c.h.b16 %v2079
    %v3418 = vunpack.c.l.b16 %v2080
    %v3419 = vunpack.c.h.b16 %v2080
    %v3420 = vunpack.c.l.b16 %v2081
    %v3421 = vunpack.c.h.b16 %v2081
    %v3422 = vunpack.c.l.b16 %v2082
    %v3423 = vunpack.c.h.b16 %v2082
    %v3424 = vunpack.c.l.b16 %v2083
    %v3425 = vunpack.c.h.b16 %v2083
    %v3426 = vunpack.c.l.b16 %v2084
    %v3427 = vunpack.c.h.b16 %v2084
    %v3428 = vunpack.c.l.b16 %v2085
    %v3429 = vunpack.c.h.b16 %v2085
    %v3430 = vunpack.c.l.b16 %v2086
    %v3431 = vunpack.c.h.b16 %v2086
    %v3432 = vunpack.c.l.b16 %v2087
    %v3433 = vunpack.c.h.b16 %v2087
    %v3434 = vunpack.c.l.b16 %v2088
    %v3435 = vunpack.c.h.b16 %v2088
    %v3436 = vunpack.c.l.b16 %v2089
    %v3437 = vunpack.c.h.b16 %v2089
    %v3438 = vunpack.c.l.b16 %v2090
    %v3439 = vunpack.c.h.b16 %v2090
    %v3440 = vunpack.c.l.b16 %v2091
    %v3441 = vunpack.c.h.b16 %v2091
    %v3442 = vunpack.c.l.b16 %v2092
    %v3443 = vunpack.c.h.b16 %v2092
    %v3444 = vunpack.c.l.b16 %v2093
    %v3445 = vunpack.c.h.b16 %v2093
    %v3446 = vunpack.c.l.b16 %v2094
    %v3447 = vunpack.c.h.b16 %v2094
    %v3448 = vunpack.c.l.b16 %v2095
    %v3449 = vunpack.c.h.b16 %v2095
    %v3450 = vunpack.c.l.b16 %v2096
    %v3451 = vunpack.c.h.b16 %v2096
    %v3452 = vunpack.c.l.b16 %v2097
    %v3453 = vunpack.c.h.b16 %v2097
    %v3454 = vunpack.c.l.b16 %v2098
    %v3455 = vunpack.c.h.b16 %v2098
    %v3456 = vunpack.c.l.b16 %v2099
    %v3457 = vunpack.c.h.b16 %v2099
    %v3458 = vunpack.c.l.b16 %v2100
    %v3459 = vunpack.c.h.b16 %v2100
    %v3460 = vunpack.c.l.b16 %v2101
    %v3461 = vunpack.c.h.b16 %v2101
    %v3462 = vunpack.c.l.b16 %v2102
    %v3463 = vunpack.c.h.b16 %v2102
    %v3464 = vunpack.c.l.b16 %v2103
    %v3465 = vunpack.c.h.b16 %v2103
    %v3466 = vunpack.c.l.b16 %v2104
    %v3467 = vunpack.c.h.b16 %v2104
    %v3468 = vunpack.c.l.b16 %v2105
    %v3469 = vunpack.c.h.b16 %v2105
    %v3470 = vunpack.c.l.b16 %v2106
    %v3471 = vunpack.c.h.b16 %v2106
    %v3472 = vunpack.c.l.b16 %v2107
    %v3473 = vunpack.c.h.b16 %v2107
    %v3474 = vunpack.c.l.b16 %v2108
    %v3475 = vunpack.c.h.b16 %v2108
    %v3476 = vunpack.c.l.b16 %v2109
    %v3477 = vunpack.c.h.b16 %v2109
    %v3478 = vunpack.c.l.b16 %v2110
    %v3479 = vunpack.c.h.b16 %v2110
    %v3480 = vunpack.c.l.b16 %v2111
    %v3481 = vunpack.c.h.b16 %v2111
    %v3482 = vunpack.c.l.b16 %v2112
    %v3483 = vunpack.c.h.b16 %v2112
    %v3484 = vunpack.c.l.b16 %v2113
    %v3485 = vunpack.c.h.b16 %v2113
    %v3486 = vunpack.c.l.b16 %v2114
    %v3487 = vunpack.c.h.b16 %v2114
    %v3488 = vunpack.c.l.b16 %v2115
    %v3489 = vunpack.c.h.b16 %v2115
    %v3490 = vunpack.c.l.b16 %v2116
    %v3491 = vunpack.c.h.b16 %v2116
    %v3492 = vunpack.c.l.b16 %v2117
    %v3493 = vunpack.c.h.b16 %v2117
    %v3494 = vunpack.c.l.b16 %v2118
    %v3495 = vunpack.c.h.b16 %v2118
    %v3496 = vunpack.c.l.b16 %v2119
    %v3497 = vunpack.c.h.b16 %v2119
    %v3498 = vunpack.c.l.b16 %v2120
    %v3499 = vunpack.c.h.b16 %v2120
    %v3500 = vunpack.c.l.b16 %v2121
    %v3501 = vunpack.c.h.b16 %v2121
    %v3502 = vunpack.c.l.b16 %v2122
    %v3503 = vunpack.c.h.b16 %v2122
    %v3504 = vunpack.c.l.b16 %v2123
    %v3505 = vunpack.c.h.b16 %v2123
    %v3506 = vunpack.c.l.b16 %v2124
    %v3507 = vunpack.c.h.b16 %v2124
    %v3508 = vunpack.c.l.b16 %v2125
    %v3509 = vunpack.c.h.b16 %v2125
    %v3510 = vunpack.c.l.b16 %v2126
    %v3511 = vunpack.c.h.b16 %v2126
    %v3512 = vunpack.c.l.b16 %v2127
    %v3513 = vunpack.c.h.b16 %v2127
    %v3514 = vunpack.c.l.b16 %v2128
    %v3515 = vunpack.c.h.b16 %v2128
    %v3516 = vunpack.c.l.b16 %v2129
    %v3517 = vunpack.c.h.b16 %v2129
    %v3518 = vunpack.c.l.b16 %v2130
    %v3519 = vunpack.c.h.b16 %v2130
    %v3520 = vunpack.c.l.b16 %v2131
    %v3521 = vunpack.c.h.b16 %v2131
    %v3522 = vunpack.c.l.b16 %v2132
    %v3523 = vunpack.c.h.b16 %v2132
    %v3524 = vunpack.c.l.b16 %v2133
    %v3525 = vunpack.c.h.b16 %v2133
    %v3526 = vunpack.c.l.b16 %v2134
    %v3527 = vunpack.c.h.b16 %v2134
    %v3528 = vunpack.c.l.b16 %v2135
    %v3529 = vunpack.c.h.b16 %v2135
    %v3530 = vunpack.c.l.b16 %v2136
    %v3531 = vunpack.c.h.b16 %v2136
    %v3532 = vunpack.c.l.b16 %v2137
    %v3533 = vunpack.c.h.b16 %v2137
    %v3534 = vunpack.c.l.b16 %v2138
    %v3535 = vunpack.c.h.b16 %v2138
    %v3536 = vunpack.c.l.b16 %v2139
    %v3537 = vunpack.c.h.b16 %v2139
    %v3538 = vunpack.c.l.b16 %v2140
    %v3539 = vunpack.c.h.b16 %v2140
    %v3540 = vunpack.c.l.b16 %v2141
    %v3541 = vunpack.c.h.b16 %v2141
    %v3542 = vunpack.c.l.b16 %v2142
    %v3543 = vunpack.c.h.b16 %v2142
    %v3544 = vunpack.c.l.b16 %v2143
    %v3545 = vunpack.c.h.b16 %v2143
    %v3546 = vunpack.c.l.b16 %v2144
    %v3547 = vunpack.c.h.b16 %v2144
    %v3548 = vunpack.c.l.b16 %v2145
    %v3549 = vunpack.c.h.b16 %v2145
    %v3550 = vunpack.c.l.b16 %v2146
    %v3551 = vunpack.c.h.b16 %v2146
    %v3552 = vunpack.c.l.b16 %v2147
    %v3553 = vunpack.c.h.b16 %v2147
    %v3554 = vunpack.c.l.b16 %v2148
    %v3555 = vunpack.c.h.b16 %v2148
    %v3556 = vunpack.c.l.b16 %v2149
    %v3557 = vunpack.c.h.b16 %v2149
    %v3558 = vunpack.c.l.b16 %v2150
    %v3559 = vunpack.c.h.b16 %v2150
    %v3560 = vunpack.c.l.b16 %v2151
    %v3561 = vunpack.c.h.b16 %v2151
    %v3562 = vunpack.c.l.b16 %v2152
    %v3563 = vunpack.c.h.b16 %v2152
    %v3564 = vunpack.c.l.b16 %v2153
    %v3565 = vunpack.c.h.b16 %v2153
    %v3566 = vunpack.c.l.b16 %v2154
    %v3567 = vunpack.c.h.b16 %v2154
    %v3568 = vunpack.c.l.b16 %v2155
    %v3569 = vunpack.c.h.b16 %v2155
    %v3570 = vunpack.c.l.b16 %v2156
    %v3571 = vunpack.c.h.b16 %v2156
    %v3572 = vunpack.c.l.b16 %v2157
    %v3573 = vunpack.c.h.b16 %v2157
    %v3574 = vunpack.c.l.b16 %v2158
    %v3575 = vunpack.c.h.b16 %v2158
    %v3576 = vunpack.c.l.b16 %v2159
    %v3577 = vunpack.c.h.b16 %v2159
    %v3578 = vunpack.c.l.b16 %v2160
    %v3579 = vunpack.c.h.b16 %v2160
    %v3580 = vunpack.c.l.b16 %v2161
    %v3581 = vunpack.c.h.b16 %v2161
    %v3582 = vunpack.c.l.b16 %v2162
    %v3583 = vunpack.c.h.b16 %v2162
    %v3584 = vunpack.c.l.b16 %v2163
    %v3585 = vunpack.c.h.b16 %v2163
    %v3586 = vunpack.c.l.b16 %v2164
    %v3587 = vunpack.c.h.b16 %v2164
    %v3588 = vunpack.c.l.b16 %v2165
    %v3589 = vunpack.c.h.b16 %v2165
    %v3590 = vunpack.c.l.b16 %v2166
    %v3591 = vunpack.c.h.b16 %v2166
    %v3592 = vunpack.c.l.b16 %v2167
    %v3593 = vunpack.c.h.b16 %v2167
    %v3594 = vunpack.c.l.b16 %v2168
    %v3595 = vunpack.c.h.b16 %v2168
    %v3596 = vunpack.c.l.b16 %v2169
    %v3597 = vunpack.c.h.b16 %v2169
    %v3598 = vunpack.c.l.b16 %v2170
    %v3599 = vunpack.c.h.b16 %v2170
    %v3600 = vunpack.c.l.b16 %v2171
    %v3601 = vunpack.c.h.b16 %v2171
    %v3602 = vunpack.c.l.b16 %v2172
    %v3603 = vunpack.c.h.b16 %v2172
    %v3604 = vunpack.c.l.b16 %v2173
    %v3605 = vunpack.c.h.b16 %v2173
    %v3606 = vunpack.c.l.b16 %v2174
    %v3607 = vunpack.c.h.b16 %v2174
    %v3608 = vunpack.c.l.b16 %v2175
    %v3609 = vunpack.c.h.b16 %v2175
    %v3610 = vunpack.c.l.b16 %v2176
    %v3611 = vunpack.c.h.b16 %v2176
    %v3612 = vunpack.c.l.b16 %v2177
    %v3613 = vunpack.c.h.b16 %v2177
    %v3614 = vunpack.c.l.b16 %v2178
    %v3615 = vunpack.c.h.b16 %v2178
    %v3616 = vunpack.c.l.b16 %v2179
    %v3617 = vunpack.c.h.b16 %v2179
    %v3618 = vunpack.c.l.b16 %v2180
    %v3619 = vunpack.c.h.b16 %v2180
    %v3620 = vunpack.c.l.b16 %v2181
    %v3621 = vunpack.c.h.b16 %v2181
    %v3622 = vunpack.c.l.b16 %v2182
    %v3623 = vunpack.c.h.b16 %v2182
    %v3624 = vunpack.c.l.b16 %v2183
    %v3625 = vunpack.c.h.b16 %v2183
    %v3626 = vunpack.c.l.b16 %v2184
    %v3627 = vunpack.c.h.b16 %v2184
    %v3628 = vunpack.c.l.b16 %v2185
    %v3629 = vunpack.c.h.b16 %v2185
    %v3630 = vunpack.c.l.b16 %v2186
    %v3631 = vunpack.c.h.b16 %v2186
    %v3632 = vunpack.c.l.b16 %v2187
    %v3633 = vunpack.c.h.b16 %v2187
    %v3634 = vunpack.c.l.b16 %v2188
    %v3635 = vunpack.c.h.b16 %v2188
    %v3636 = vunpack.c.l.b16 %v2189
    %v3637 = vunpack.c.h.b16 %v2189
    %v3638 = vunpack.c.l.b16 %v2190
    %v3639 = vunpack.c.h.b16 %v2190
    %v3640 = vunpack.c.l.b16 %v2191
    %v3641 = vunpack.c.h.b16 %v2191
    %v3642 = vunpack.c.l.b16 %v2192
    %v3643 = vunpack.c.h.b16 %v2192
    %v3644 = vunpack.c.l.b16 %v2193
    %v3645 = vunpack.c.h.b16 %v2193
    %v3646 = vunpack.c.l.b16 %v2194
    %v3647 = vunpack.c.h.b16 %v2194
    %v3648 = vunpack.c.l.b16 %v2195
    %v3649 = vunpack.c.h.b16 %v2195
    %v3650 = vunpack.c.l.b16 %v2196
    %v3651 = vunpack.c.h.b16 %v2196
    %v3652 = vunpack.c.l.b16 %v2197
    %v3653 = vunpack.c.h.b16 %v2197
    %v3654 = vunpack.c.l.b16 %v2198
    %v3655 = vunpack.c.h.b16 %v2198
    %v3656 = vunpack.c.l.b16 %v2199
    %v3657 = vunpack.c.h.b16 %v2199
    %v3658 = vunpack.c.l.b16 %v2200
    %v3659 = vunpack.c.h.b16 %v2200
    %v3660 = vunpack.c.l.b16 %v2201
    %v3661 = vunpack.c.h.b16 %v2201
    %v3662 = vunpack.c.l.b16 %v2202
    %v3663 = vunpack.c.h.b16 %v2202
    %v3664 = vunpack.c.l.b16 %v2203
    %v3665 = vunpack.c.h.b16 %v2203
    %v3666 = vunpack.c.l.b16 %v2204
    %v3667 = vunpack.c.h.b16 %v2204
    %v3668 = vunpack.c.l.b16 %v2205
    %v3669 = vunpack.c.h.b16 %v2205
    %v3670 = vunpack.c.l.b16 %v2206
    %v3671 = vunpack.c.h.b16 %v2206
    %v3672 = vunpack.c.l.b16 %v2207
    %v3673 = vunpack.c.h.b16 %v2207
    %v3674 = vunpack.c.l.b16 %v2208
    %v3675 = vunpack.c.h.b16 %v2208
    %v3676 = vunpack.c.l.b16 %v2209
    %v3677 = vunpack.c.h.b16 %v2209
    %v3678 = vunpack.c.l.b16 %v2210
    %v3679 = vunpack.c.h.b16 %v2210
    %v3680 = vunpack.c.l.b16 %v2211
    %v3681 = vunpack.c.h.b16 %v2211
    %v3682 = vunpack.c.l.b16 %v2212
    %v3683 = vunpack.c.h.b16 %v2212
    %v3684 = vunpack.c.l.b16 %v2213
    %v3685 = vunpack.c.h.b16 %v2213
    %v3686 = vunpack.c.l.b16 %v2214
    %v3687 = vunpack.c.h.b16 %v2214
    %v3688 = vunpack.c.l.b16 %v2215
    %v3689 = vunpack.c.h.b16 %v2215
    %v3690 = vunpack.c.l.b16 %v2216
    %v3691 = vunpack.c.h.b16 %v2216
    %v3692 = vunpack.c.l.b16 %v2217
    %v3693 = vunpack.c.h.b16 %v2217
    %v3694 = vunpack.c.l.b16 %v2218
    %v3695 = vunpack.c.h.b16 %v2218
    %v3696 = vunpack.c.l.b16 %v2219
    %v3697 = vunpack.c.h.b16 %v2219
    %v3698 = vunpack.c.l.b16 %v2220
    %v3699 = vunpack.c.h.b16 %v2220
    %v3700 = vunpack.c.l.b16 %v2221
    %v3701 = vunpack.c.h.b16 %v2221
    %v3702 = vunpack.c.l.b16 %v2222
    %v3703 = vunpack.c.h.b16 %v2222
    %v3704 = vunpack.c.l.b16 %v2223
    %v3705 = vunpack.c.h.b16 %v2223
    %v3706 = vunpack.c.l.b16 %v2224
    %v3707 = vunpack.c.h.b16 %v2224
    %v3708 = vunpack.c.l.b16 %v2225
    %v3709 = vunpack.c.h.b16 %v2225
    %v3710 = vunpack.c.l.b16 %v2226
    %v3711 = vunpack.c.h.b16 %v2226
    %v3712 = vunpack.c.l.b16 %v2227
    %v3713 = vunpack.c.h.b16 %v2227
    %v3714 = vunpack.c.l.b16 %v2228
    %v3715 = vunpack.c.h.b16 %v2228
    %v3716 = vunpack.c.l.b16 %v2229
    %v3717 = vunpack.c.h.b16 %v2229
    %v3718 = vunpack.c.l.b16 %v2230
    %v3719 = vunpack.c.h.b16 %v2230
    %v3720 = vunpack.c.l.b16 %v2231
    %v3721 = vunpack.c.h.b16 %v2231
    %v3722 = vunpack.c.l.b16 %v2232
    %v3723 = vunpack.c.h.b16 %v2232
    %v3724 = vunpack.c.l.b16 %v2233
    %v3725 = vunpack.c.h.b16 %v2233
    %v3726 = vunpack.c.l.b16 %v2234
    %v3727 = vunpack.c.h.b16 %v2234
    %v3728 = vunpack.c.l.b16 %v2235
    %v3729 = vunpack.c.h.b16 %v2235
    %v3730 = vunpack.c.l.b16 %v2236
    %v3731 = vunpack.c.h.b16 %v2236
    %v3732 = vunpack.c.l.b16 %v2237
    %v3733 = vunpack.c.h.b16 %v2237
    %v3734 = vunpack.c.l.b16 %v2238
    %v3735 = vunpack.c.h.b16 %v2238
    %v3736 = vunpack.c.l.b16 %v2239
    %v3737 = vunpack.c.h.b16 %v2239
    %v3738 = vunpack.c.l.b16 %v2240
    %v3739 = vunpack.c.h.b16 %v2240
    %v3740 = vunpack.c.l.b16 %v2241
    %v3741 = vunpack.c.h.b16 %v2241
    %v3742 = vunpack.c.l.b16 %v2242
    %v3743 = vunpack.c.h.b16 %v2242
    %v3744 = vunpack.c.l.b16 %v2243
    %v3745 = vunpack.c.h.b16 %v2243
    %v3746 = vunpack.c.l.b16 %v2244
    %v3747 = vunpack.c.h.b16 %v2244
    %v3748 = vunpack.c.l.b16 %v2245
    %v3749 = vunpack.c.h.b16 %v2245
    %v3750 = vunpack.c.l.b16 %v2246
    %v3751 = vunpack.c.h.b16 %v2246
    %v3752 = vunpack.c.l.b16 %v2247
    %v3753 = vunpack.c.h.b16 %v2247
    %v3754 = vunpack.c.l.b16 %v2248
    %v3755 = vunpack.c.h.b16 %v2248
    %v3756 = vunpack.c.l.b16 %v2249
    %v3757 = vunpack.c.h.b16 %v2249
    %v3758 = vunpack.c.l.b16 %v2250
    %v3759 = vunpack.c.h.b16 %v2250
    %v3760 = vunpack.c.l.b16 %v2251
    %v3761 = vunpack.c.h.b16 %v2251
    %v3762 = vunpack.c.l.b16 %v2252
    %v3763 = vunpack.c.h.b16 %v2252
    %v3764 = vunpack.c.l.b16 %v2253
    %v3765 = vunpack.c.h.b16 %v2253
    %v3766 = vunpack.c.l.b16 %v2254
    %v3767 = vunpack.c.h.b16 %v2254
    %v3768 = vunpack.c.l.b16 %v2255
    %v3769 = vunpack.c.h.b16 %v2255
    %v3770 = vunpack.c.l.b16 %v2256
    %v3771 = vunpack.c.h.b16 %v2256
    %v3772 = vunpack.c.l.b16 %v2257
    %v3773 = vunpack.c.h.b16 %v2257
    %v3774 = vunpack.c.l.b16 %v2258
    %v3775 = vunpack.c.h.b16 %v2258
    %v3776 = vunpack.c.l.b16 %v2259
    %v3777 = vunpack.c.h.b16 %v2259
    %v3778 = vunpack.c.l.b16 %v2260
    %v3779 = vunpack.c.h.b16 %v2260
    %v3780 = vunpack.c.l.b16 %v2261
    %v3781 = vunpack.c.h.b16 %v2261
    %v3782 = vunpack.c.l.b16 %v2262
    %v3783 = vunpack.c.h.b16 %v2262
    %v3784 = vunpack.c.l.b16 %v2263
    %v3785 = vunpack.c.h.b16 %v2263
    %v3786 = vunpack.c.l.b16 %v2264
    %v3787 = vunpack.c.h.b16 %v2264
    %v3788 = vunpack.c.l.b16 %v2265
    %v3789 = vunpack.c.h.b16 %v2265
    %v3790 = vunpack.c.l.b16 %v2266
    %v3791 = vunpack.c.h.b16 %v2266
    %v3792 = vunpack.c.l.b16 %v2267
    %v3793 = vunpack.c.h.b16 %v2267
    %v3794 = vunpack.c.l.b16 %v2268
    %v3795 = vunpack.c.h.b16 %v2268
    %v3796 = vunpack.c.l.b16 %v2269
    %v3797 = vunpack.c.h.b16 %v2269
    %v3798 = vunpack.c.l.b16 %v2270
    %v3799 = vunpack.c.h.b16 %v2270
    %v3800 = vunpack.c.l.b16 %v2271
    %v3801 = vunpack.c.h.b16 %v2271
    %v3802 = vunpack.c.l.b16 %v2272
    %v3803 = vunpack.c.h.b16 %v2272
    %v3804 = vunpack.c.l.b16 %v2273
    %v3805 = vunpack.c.h.b16 %v2273
    %v3806 = vunpack.c.l.b16 %v2274
    %v3807 = vunpack.c.h.b16 %v2274
    %v3808 = vunpack.c.l.b16 %v2275
    %v3809 = vunpack.c.h.b16 %v2275
    %v3810 = vunpack.c.l.b16 %v2276
    %v3811 = vunpack.c.h.b16 %v2276
    %v3812 = vunpack.c.l.b16 %v2277
    %v3813 = vunpack.c.h.b16 %v2277
    %v3814 = vunpack.c.l.b16 %v2278
    %v3815 = vunpack.c.h.b16 %v2278
    %v3816 = vunpack.c.l.b16 %v2279
    %v3817 = vunpack.c.h.b16 %v2279
    %v3818 = vunpack.c.l.b16 %v2280
    %v3819 = vunpack.c.h.b16 %v2280
    %v3820 = vunpack.c.l.b16 %v2281
    %v3821 = vunpack.c.h.b16 %v2281
    %v3822 = vunpack.c.l.b16 %v2282
    %v3823 = vunpack.c.h.b16 %v2282
    %v3824 = vunpack.c.l.b16 %v2283
    %v3825 = vunpack.c.h.b16 %v2283
    %v3826 = vunpack.c.l.b16 %v2284
    %v3827 = vunpack.c.h.b16 %v2284
    %v3828 = vunpack.c.l.b16 %v2285
    %v3829 = vunpack.c.h.b16 %v2285
    %v3830 = vunpack.c.l.b16 %v2286
    %v3831 = vunpack.c.h.b16 %v2286
    %v3832 = vunpack.c.l.b16 %v2287
    %v3833 = vunpack.c.h.b16 %v2287
    %v3834 = vunpack.c.l.b16 %v2288
    %v3835 = vunpack.c.h.b16 %v2288
    %v3836 = vunpack.c.l.b16 %v2289
    %v3837 = vunpack.c.h.b16 %v2289
    %v3838 = vunpack.c.l.b16 %v2290
    %v3839 = vunpack.c.h.b16 %v2290
    %v3840 = vunpack.c.l.b16 %v2291
    %v3841 = vunpack.c.h.b16 %v2291
    %v3842 = vunpack.c.l.b16 %v2292
    %v3843 = vunpack.c.h.b16 %v2292
    %v3844 = vunpack.c.l.b16 %v2293
    %v3845 = vunpack.c.h.b16 %v2293
    %v3846 = vunpack.c.l.b16 %v2294
    %v3847 = vunpack.c.h.b16 %v2294
    %v3848 = vunpack.c.l.b16 %v2295
    %v3849 = vunpack.c.h.b16 %v2295
    %v3850 = vunpack.c.l.b16 %v2296
    %v3851 = vunpack.c.h.b16 %v2296
    %v3852 = vunpack.c.l.b16 %v2297
    %v3853 = vunpack.c.h.b16 %v2297
    %v3854 = vunpack.c.l.b16 %v2298
    %v3855 = vunpack.c.h.b16 %v2298
    %v3856 = vunpack.c.l.b16 %v2299
    %v3857 = vunpack.c.h.b16 %v2299
    %v3858 = vpack.c.b16 %v2838, %v2834
    %v3859 = vpack.c.b16 %v2839, %v2835
    %v3860 = vpack.c.b16 %v2840, %v2836
    %v3861 = vpack.c.b16 %v2841, %v2837
    %v3862 = vpack.c.b16 %v2846, %v2842
    %v3863 = vpack.c.b16 %v2847, %v2843
    %v3864 = vpack.c.b16 %v2848, %v2844
    %v3865 = vpack.c.b16 %v2849, %v2845
    %v3866 = vpack.c.b16 %v2854, %v2850
    %v3867 = vpack.c.b16 %v2855, %v2851
    %v3868 = vpack.c.b16 %v2856, %v2852
    %v3869 = vpack.c.b16 %v2857, %v2853
    %v3870 = vpack.c.b16 %v2862, %v2858
    %v3871 = vpack.c.b16 %v2863, %v2859
    %v3872 = vpack.c.b16 %v2864, %v2860
    %v3873 = vpack.c.b16 %v2865, %v2861
    %v3874 = vpack.c.b16 %v2870, %v2866
    %v3875 = vpack.c.b16 %v2871, %v2867
    %v3876 = vpack.c.b16 %v2872, %v2868
    %v3877 = vpack.c.b16 %v2873, %v2869
    %v3878 = vpack.c.b16 %v2878, %v2874
    %v3879 = vpack.c.b16 %v2879, %v2875
    %v3880 = vpack.c.b16 %v2880, %v2876
    %v3881 = vpack.c.b16 %v2881, %v2877
    %v3882 = vpack.c.b16 %v2886, %v2882
    %v3883 = vpack.c.b16 %v2887, %v2883
    %v3884 = vpack.c.b16 %v2888, %v2884
    %v3885 = vpack.c.b16 %v2889, %v2885
    %v3886 = vpack.c.b16 %v2894, %v2890
    %v3887 = vpack.c.b16 %v2895, %v2891
    %v3888 = vpack.c.b16 %v2896, %v2892
    %v3889 = vpack.c.b16 %v2897, %v2893
    %v3890 = vpack.c.b16 %v2902, %v2898
    %v3891 = vpack.c.b16 %v2903, %v2899
    %v3892 = vpack.c.b16 %v2904, %v2900
    %v3893 = vpack.c.b16 %v2905, %v2901
    %v3894 = vpack.c.b16 %v2910, %v2906
    %v3895 = vpack.c.b16 %v2911, %v2907
    %v3896 = vpack.c.b16 %v2912, %v2908
    %v3897 = vpack.c.b16 %v2913, %v2909
    %v3898 = vpack.c.b16 %v2918, %v2914
    %v3899 = vpack.c.b16 %v2919, %v2915
    %v3900 = vpack.c.b16 %v2920, %v2916
    %v3901 = vpack.c.b16 %v2921, %v2917
    %v3902 = vpack.c.b16 %v2926, %v2922
    %v3903 = vpack.c.b16 %v2927, %v2923
    %v3904 = vpack.c.b16 %v2928, %v2924
    %v3905 = vpack.c.b16 %v2929, %v2925
    %v3906 = vpack.c.b16 %v2934, %v2930
    %v3907 = vpack.c.b16 %v2935, %v2931
    %v3908 = vpack.c.b16 %v2936, %v2932
    %v3909 = vpack.c.b16 %v2937, %v2933
    %v3910 = vpack.c.b16 %v2942, %v2938
    %v3911 = vpack.c.b16 %v2943, %v2939
    %v3912 = vpack.c.b16 %v2944, %v2940
    %v3913 = vpack.c.b16 %v2945, %v2941
    %v3914 = vpack.c.b16 %v2950, %v2946
    %v3915 = vpack.c.b16 %v2951, %v2947
    %v3916 = vpack.c.b16 %v2952, %v2948
    %v3917 = vpack.c.b16 %v2953, %v2949
    %v3918 = vpack.c.b16 %v2958, %v2954
    %v3919 = vpack.c.b16 %v2959, %v2955
    %v3920 = vpack.c.b16 %v2960, %v2956
    %v3921 = vpack.c.b16 %v2961, %v2957
    %v3922 = vpack.c.b16 %v2966, %v2962
    %v3923 = vpack.c.b16 %v2967, %v2963
    %v3924 = vpack.c.b16 %v2968, %v2964
    %v3925 = vpack.c.b16 %v2969, %v2965
    %v3926 = vpack.c.b16 %v2974, %v2970
    %v3927 = vpack.c.b16 %v2975, %v2971
    %v3928 = vpack.c.b16 %v2976, %v2972
    %v3929 = vpack.c.b16 %v2977, %v2973
    %v3930 = vpack.c.b16 %v2982, %v2978
    %v3931 = vpack.c.b16 %v2983, %v2979
    %v3932 = vpack.c.b16 %v2984, %v2980
    %v3933 = vpack.c.b16 %v2985, %v2981
    %v3934 = vpack.c.b16 %v2990, %v2986
    %v3935 = vpack.c.b16 %v2991, %v2987
    %v3936 = vpack.c.b16 %v2992, %v2988
    %v3937 = vpack.c.b16 %v2993, %v2989
    %v3938 = vpack.c.b16 %v2998, %v2994
    %v3939 = vpack.c.b16 %v2999, %v2995
    %v3940 = vpack.c.b16 %v3000, %v2996
    %v3941 = vpack.c.b16 %v3001, %v2997
    %v3942 = vpack.c.b16 %v3006, %v3002
    %v3943 = vpack.c.b16 %v3007, %v3003
    %v3944 = vpack.c.b16 %v3008, %v3004
    %v3945 = vpack.c.b16 %v3009, %v3005
    %v3946 = vpack.c.b16 %v3014, %v3010
    %v3947 = vpack.c.b16 %v3015, %v3011
    %v3948 = vpack.c.b16 %v3016, %v3012
    %v3949 = vpack.c.b16 %v3017, %v3013
    %v3950 = vpack.c.b16 %v3022, %v3018
    %v3951 = vpack.c.b16 %v3023, %v3019
    %v3952 = vpack.c.b16 %v3024, %v3020
    %v3953 = vpack.c.b16 %v3025, %v3021
    %v3954 = vpack.c.b16 %v3030, %v3026
    %v3955 = vpack.c.b16 %v3031, %v3027
    %v3956 = vpack.c.b16 %v3032, %v3028
    %v3957 = vpack.c.b16 %v3033, %v3029
    %v3958 = vpack.c.b16 %v3038, %v3034
    %v3959 = vpack.c.b16 %v3039, %v3035
    %v3960 = vpack.c.b16 %v3040, %v3036
    %v3961 = vpack.c.b16 %v3041, %v3037
    %v3962 = vpack.c.b16 %v3046, %v3042
    %v3963 = vpack.c.b16 %v3047, %v3043
    %v3964 = vpack.c.b16 %v3048, %v3044
    %v3965 = vpack.c.b16 %v3049, %v3045
    %v3966 = vpack.c.b16 %v3054, %v3050
    %v3967 = vpack.c.b16 %v3055, %v3051
    %v3968 = vpack.c.b16 %v3056, %v3052
    %v3969 = vpack.c.b16 %v3057, %v3053
    %v3970 = vpack.c.b16 %v3062, %v3058
    %v3971 = vpack.c.b16 %v3063, %v3059
    %v3972 = vpack.c.b16 %v3064, %v3060
    %v3973 = vpack.c.b16 %v3065, %v3061
    %v3974 = vpack.c.b16 %v3070, %v3066
    %v3975 = vpack.c.b16 %v3071, %v3067
    %v3976 = vpack.c.b16 %v3072, %v3068
    %v3977 = vpack.c.b16 %v3073, %v3069
    %v3978 = vpack.c.b16 %v3078, %v3074
    %v3979 = vpack.c.b16 %v3079, %v3075
    %v3980 = vpack.c.b16 %v3080, %v3076
    %v3981 = vpack.c.b16 %v3081, %v3077
    %v3982 = vpack.c.b16 %v3086, %v3082
    %v3983 = vpack.c.b16 %v3087, %v3083
    %v3984 = vpack.c.b16 %v3088, %v3084
    %v3985 = vpack.c.b16 %v3089, %v3085
    %v3986 = vpack.c.b16 %v3094, %v3090
    %v3987 = vpack.c.b16 %v3095, %v3091
    %v3988 = vpack.c.b16 %v3096, %v3092
    %v3989 = vpack.c.b16 %v3097, %v3093
    %v3990 = vpack.c.b16 %v3102, %v3098
    %v3991 = vpack.c.b16 %v3103, %v3099
    %v3992 = vpack.c.b16 %v3104, %v3100
    %v3993 = vpack.c.b16 %v3105, %v3101
    %v3994 = vpack.c.b16 %v3110, %v3106
    %v3995 = vpack.c.b16 %v3111, %v3107
    %v3996 = vpack.c.b16 %v3112, %v3108
    %v3997 = vpack.c.b16 %v3113, %v3109
    %v3998 = vpack.c.b16 %v3118, %v3114
    %v3999 = vpack.c.b16 %v3119, %v3115
    %v4000 = vpack.c.b16 %v3120, %v3116
    %v4001 = vpack.c.b16 %v3121, %v3117
    %v4002 = vpack.c.b16 %v3126, %v3122
    %v4003 = vpack.c.b16 %v3127, %v3123
    %v4004 = vpack.c.b16 %v3128, %v3124
    %v4005 = vpack.c.b16 %v3129, %v3125
    %v4006 = vpack.c.b16 %v3134, %v3130
    %v4007 = vpack.c.b16 %v3135, %v3131
    %v4008 = vpack.c.b16 %v3136, %v3132
    %v4009 = vpack.c.b16 %v3137, %v3133
    %v4010 = vpack.c.b16 %v3142, %v3138
    %v4011 = vpack.c.b16 %v3143, %v3139
    %v4012 = vpack.c.b16 %v3144, %v3140
    %v4013 = vpack.c.b16 %v3145, %v3141
    %v4014 = vpack.c.b16 %v3150, %v3146
    %v4015 = vpack.c.b16 %v3151, %v3147
    %v4016 = vpack.c.b16 %v3152, %v3148
    %v4017 = vpack.c.b16 %v3153, %v3149
    %v4018 = vpack.c.b16 %v3158, %v3154
    %v4019 = vpack.c.b16 %v3159, %v3155
    %v4020 = vpack.c.b16 %v3160, %v3156
    %v4021 = vpack.c.b16 %v3161, %v3157
    %v4022 = vpack.c.b16 %v3166, %v3162
    %v4023 = vpack.c.b16 %v3167, %v3163
    %v4024 = vpack.c.b16 %v3168, %v3164
    %v4025 = vpack.c.b16 %v3169, %v3165
    %v4026 = vpack.c.b16 %v3174, %v3170
    %v4027 = vpack.c.b16 %v3175, %v3171
    %v4028 = vpack.c.b16 %v3176, %v3172
    %v4029 = vpack.c.b16 %v3177, %v3173
    %v4030 = vpack.c.b16 %v3182, %v3178
    %v4031 = vpack.c.b16 %v3183, %v3179
    %v4032 = vpack.c.b16 %v3184, %v3180
    %v4033 = vpack.c.b16 %v3185, %v3181
    %v4034 = vpack.c.b16 %v3190, %v3186
    %v4035 = vpack.c.b16 %v3191, %v3187
    %v4036 = vpack.c.b16 %v3192, %v3188
    %v4037 = vpack.c.b16 %v3193, %v3189
    %v4038 = vpack.c.b16 %v3198, %v3194
    %v4039 = vpack.c.b16 %v3199, %v3195
    %v4040 = vpack.c.b16 %v3200, %v3196
    %v4041 = vpack.c.b16 %v3201, %v3197
    %v4042 = vpack.c.b16 %v3206, %v3202
    %v4043 = vpack.c.b16 %v3207, %v3203
    %v4044 = vpack.c.b16 %v3208, %v3204
    %v4045 = vpack.c.b16 %v3209, %v3205
    %v4046 = vpack.c.b16 %v3214, %v3210
    %v4047 = vpack.c.b16 %v3215, %v3211
    %v4048 = vpack.c.b16 %v3216, %v3212
    %v4049 = vpack.c.b16 %v3217, %v3213
    %v4050 = vpack.c.b16 %v3222, %v3218
    %v4051 = vpack.c.b16 %v3223, %v3219
    %v4052 = vpack.c.b16 %v3224, %v3220
    %v4053 = vpack.c.b16 %v3225, %v3221
    %v4054 = vpack.c.b16 %v3230, %v3226
    %v4055 = vpack.c.b16 %v3231, %v3227
    %v4056 = vpack.c.b16 %v3232, %v3228
    %v4057 = vpack.c.b16 %v3233, %v3229
    %v4058 = vpack.c.b16 %v3238, %v3234
    %v4059 = vpack.c.b16 %v3239, %v3235
    %v4060 = vpack.c.b16 %v3240, %v3236
    %v4061 = vpack.c.b16 %v3241, %v3237
    %v4062 = vpack.c.b16 %v3246, %v3242
    %v4063 = vpack.c.b16 %v3247, %v3243
    %v4064 = vpack.c.b16 %v3248, %v3244
    %v4065 = vpack.c.b16 %v3249, %v3245
    %v4066 = vpack.c.b16 %v3254, %v3250
    %v4067 = vpack.c.b16 %v3255, %v3251
    %v4068 = vpack.c.b16 %v3256, %v3252
    %v4069 = vpack.c.b16 %v3257, %v3253
    %v4070 = vpack.c.b16 %v3262, %v3258
    %v4071 = vpack.c.b16 %v3263, %v3259
    %v4072 = vpack.c.b16 %v3264, %v3260
    %v4073 = vpack.c.b16 %v3265, %v3261
    %v4074 = vpack.c.b16 %v3270, %v3266
    %v4075 = vpack.c.b16 %v3271, %v3267
    %v4076 = vpack.c.b16 %v3272, %v3268
    %v4077 = vpack.c.b16 %v3273, %v3269
    %v4078 = vpack.c.b16 %v3278, %v3274
    %v4079 = vpack.c.b16 %v3279, %v3275
    %v4080 = vpack.c.b16 %v3280, %v3276
    %v4081 = vpack.c.b16 %v3281, %v3277
    %v4082 = vpack.c.b16 %v3286, %v3282
    %v4083 = vpack.c.b16 %v3287, %v3283
    %v4084 = vpack.c.b16 %v3288, %v3284
    %v4085 = vpack.c.b16 %v3289, %v3285
    %v4086 = vpack.c.b16 %v3294, %v3290
    %v4087 = vpack.c.b16 %v3295, %v3291
    %v4088 = vpack.c.b16 %v3296, %v3292
    %v4089 = vpack.c.b16 %v3297, %v3293
    %v4090 = vpack.c.b16 %v3302, %v3298
    %v4091 = vpack.c.b16 %v3303, %v3299
    %v4092 = vpack.c.b16 %v3304, %v3300
    %v4093 = vpack.c.b16 %v3305, %v3301
    %v4094 = vpack.c.b16 %v3310, %v3306
    %v4095 = vpack.c.b16 %v3311, %v3307
    %v4096 = vpack.c.b16 %v3312, %v3308
    %v4097 = vpack.c.b16 %v3313, %v3309
    %v4098 = vpack.c.b16 %v3318, %v3314
    %v4099 = vpack.c.b16 %v3319, %v3315
    %v4100 = vpack.c.b16 %v3320, %v3316
    %v4101 = vpack.c.b16 %v3321, %v3317
    %v4102 = vpack.c.b16 %v3326, %v3322
    %v4103 = vpack.c.b16 %v3327, %v3323
    %v4104 = vpack.c.b16 %v3328, %v3324
    %v4105 = vpack.c.b16 %v3329, %v3325
    %v4106 = vpack.c.b16 %v3334, %v3330
    %v4107 = vpack.c.b16 %v3335, %v3331
    %v4108 = vpack.c.b16 %v3336, %v3332
    %v4109 = vpack.c.b16 %v3337, %v3333
    %v4110 = vpack.c.b16 %v3342, %v3338
    %v4111 = vpack.c.b16 %v3343, %v3339
    %v4112 = vpack.c.b16 %v3344, %v3340
    %v4113 = vpack.c.b16 %v3345, %v3341
    %v4114 = vpack.c.b16 %v3350, %v3346
    %v4115 = vpack.c.b16 %v3351, %v3347
    %v4116 = vpack.c.b16 %v3352, %v3348
    %v4117 = vpack.c.b16 %v3353, %v3349
    %v4118 = vpack.c.b16 %v3358, %v3354
    %v4119 = vpack.c.b16 %v3359, %v3355
    %v4120 = vpack.c.b16 %v3360, %v3356
    %v4121 = vpack.c.b16 %v3361, %v3357
    %v4122 = vpack.c.b16 %v3366, %v3362
    %v4123 = vpack.c.b16 %v3367, %v3363
    %v4124 = vpack.c.b16 %v3368, %v3364
    %v4125 = vpack.c.b16 %v3369, %v3365
    %v4126 = vpack.c.b16 %v3374, %v3370
    %v4127 = vpack.c.b16 %v3375, %v3371
    %v4128 = vpack.c.b16 %v3376, %v3372
    %v4129 = vpack.c.b16 %v3377, %v3373
    %v4130 = vpack.c.b16 %v3382, %v3378
    %v4131 = vpack.c.b16 %v3383, %v3379
    %v4132 = vpack.c.b16 %v3384, %v3380
    %v4133 = vpack.c.b16 %v3385, %v3381
    %v4134 = vpack.c.b16 %v3390, %v3386
    %v4135 = vpack.c.b16 %v3391, %v3387
    %v4136 = vpack.c.b16 %v3392, %v3388
    %v4137 = vpack.c.b16 %v3393, %v3389
    %v4138 = vpack.c.b16 %v3398, %v3394
    %v4139 = vpack.c.b16 %v3399, %v3395
    %v4140 = vpack.c.b16 %v3400, %v3396
    %v4141 = vpack.c.b16 %v3401, %v3397
    %v4142 = vpack.c.b16 %v3406, %v3402
    %v4143 = vpack.c.b16 %v3407, %v3403
    %v4144 = vpack.c.b16 %v3408, %v3404
    %v4145 = vpack.c.b16 %v3409, %v3405
    %v4146 = vpack.c.b16 %v3414, %v3410
    %v4147 = vpack.c.b16 %v3415, %v3411
    %v4148 = vpack.c.b16 %v3416, %v3412
    %v4149 = vpack.c.b16 %v3417, %v3413
    %v4150 = vpack.c.b16 %v3422, %v3418
    %v4151 = vpack.c.b16 %v3423, %v3419
    %v4152 = vpack.c.b16 %v3424, %v3420
    %v4153 = vpack.c.b16 %v3425, %v3421
    %v4154 = vpack.c.b16 %v3430, %v3426
    %v4155 = vpack.c.b16 %v3431, %v3427
    %v4156 = vpack.c.b16 %v3432, %v3428
    %v4157 = vpack.c.b16 %v3433, %v3429
    %v4158 = vpack.c.b16 %v3438, %v3434
    %v4159 = vpack.c.b16 %v3439, %v3435
    %v4160 = vpack.c.b16 %v3440, %v3436
    %v4161 = vpack.c.b16 %v3441, %v3437
    %v4162 = vpack.c.b16 %v3446, %v3442
    %v4163 = vpack.c.b16 %v3447, %v3443
    %v4164 = vpack.c.b16 %v3448, %v3444
    %v4165 = vpack.c.b16 %v3449, %v3445
    %v4166 = vpack.c.b16 %v3454, %v3450
    %v4167 = vpack.c.b16 %v3455, %v3451
    %v4168 = vpack.c.b16 %v3456, %v3452
    %v4169 = vpack.c.b16 %v3457, %v3453
    %v4170 = vpack.c.b16 %v3462, %v3458
    %v4171 = vpack.c.b16 %v3463, %v3459
    %v4172 = vpack.c.b16 %v3464, %v3460
    %v4173 = vpack.c.b16 %v3465, %v3461
    %v4174 = vpack.c.b16 %v3470, %v3466
    %v4175 = vpack.c.b16 %v3471, %v3467
    %v4176 = vpack.c.b16 %v3472, %v3468
    %v4177 = vpack.c.b16 %v3473, %v3469
    %v4178 = vpack.c.b16 %v3478, %v3474
    %v4179 = vpack.c.b16 %v3479, %v3475
    %v4180 = vpack.c.b16 %v3480, %v3476
    %v4181 = vpack.c.b16 %v3481, %v3477
    %v4182 = vpack.c.b16 %v3486, %v3482
    %v4183 = vpack.c.b16 %v3487, %v3483
    %v4184 = vpack.c.b16 %v3488, %v3484
    %v4185 = vpack.c.b16 %v3489, %v3485
    %v4186 = vpack.c.b16 %v3494, %v3490
    %v4187 = vpack.c.b16 %v3495, %v3491
    %v4188 = vpack.c.b16 %v3496, %v3492
    %v4189 = vpack.c.b16 %v3497, %v3493
    %v4190 = vpack.c.b16 %v3502, %v3498
    %v4191 = vpack.c.b16 %v3503, %v3499
    %v4192 = vpack.c.b16 %v3504, %v3500
    %v4193 = vpack.c.b16 %v3505, %v3501
    %v4194 = vpack.c.b16 %v3510, %v3506
    %v4195 = vpack.c.b16 %v3511, %v3507
    %v4196 = vpack.c.b16 %v3512, %v3508
    %v4197 = vpack.c.b16 %v3513, %v3509
    %v4198 = vpack.c.b16 %v3518, %v3514
    %v4199 = vpack.c.b16 %v3519, %v3515
    %v4200 = vpack.c.b16 %v3520, %v3516
    %v4201 = vpack.c.b16 %v3521, %v3517
    %v4202 = vpack.c.b16 %v3526, %v3522
    %v4203 = vpack.c.b16 %v3527, %v3523
    %v4204 = vpack.c.b16 %v3528, %v3524
    %v4205 = vpack.c.b16 %v3529, %v3525
    %v4206 = vpack.c.b16 %v3534, %v3530
    %v4207 = vpack.c.b16 %v3535, %v3531
    %v4208 = vpack.c.b16 %v3536, %v3532
    %v4209 = vpack.c.b16 %v3537, %v3533
    %v4210 = vpack.c.b16 %v3542, %v3538
    %v4211 = vpack.c.b16 %v3543, %v3539
    %v4212 = vpack.c.b16 %v3544, %v3540
    %v4213 = vpack.c.b16 %v3545, %v3541
    %v4214 = vpack.c.b16 %v3550, %v3546
    %v4215 = vpack.c.b16 %v3551, %v3547
    %v4216 = vpack.c.b16 %v3552, %v3548
    %v4217 = vpack.c.b16 %v3553, %v3549
    %v4218 = vpack.c.b16 %v3558, %v3554
    %v4219 = vpack.c.b16 %v3559, %v3555
    %v4220 = vpack.c.b16 %v3560, %v3556
    %v4221 = vpack.c.b16 %v3561, %v3557
    %v4222 = vpack.c.b16 %v3566, %v3562
    %v4223 = vpack.c.b16 %v3567, %v3563
    %v4224 = vpack.c.b16 %v3568, %v3564
    %v4225 = vpack.c.b16 %v3569, %v3565
    %v4226 = vpack.c.b16 %v3574, %v3570
    %v4227 = vpack.c.b16 %v3575, %v3571
    %v4228 = vpack.c.b16 %v3576, %v3572
    %v4229 = vpack.c.b16 %v3577, %v3573
    %v4230 = vpack.c.b16 %v3582, %v3578
    %v4231 = vpack.c.b16 %v3583, %v3579
    %v4232 = vpack.c.b16 %v3584, %v3580
    %v4233 = vpack.c.b16 %v3585, %v3581
    %v4234 = vpack.c.b16 %v3590, %v3586
    %v4235 = vpack.c.b16 %v3591, %v3587
    %v4236 = vpack.c.b16 %v3592, %v3588
    %v4237 = vpack.c.b16 %v3593, %v3589
    %v4238 = vpack.c.b16 %v3598, %v3594
    %v4239 = vpack.c.b16 %v3599, %v3595
    %v4240 = vpack.c.b16 %v3600, %v3596
    %v4241 = vpack.c.b16 %v3601, %v3597
    %v4242 = vpack.c.b16 %v3606, %v3602
    %v4243 = vpack.c.b16 %v3607, %v3603
    %v4244 = vpack.c.b16 %v3608, %v3604
    %v4245 = vpack.c.b16 %v3609, %v3605
    %v4246 = vpack.c.b16 %v3614, %v3610
    %v4247 = vpack.c.b16 %v3615, %v3611
    %v4248 = vpack.c.b16 %v3616, %v3612
    %v4249 = vpack.c.b16 %v3617, %v3613
    %v4250 = vpack.c.b16 %v3622, %v3618
    %v4251 = vpack.c.b16 %v3623, %v3619
    %v4252 = vpack.c.b16 %v3624, %v3620
    %v4253 = vpack.c.b16 %v3625, %v3621
    %v4254 = vpack.c.b16 %v3630, %v3626
    %v4255 = vpack.c.b16 %v3631, %v3627
    %v4256 = vpack.c.b16 %v3632, %v3628
    %v4257 = vpack.c.b16 %v3633, %v3629
    %v4258 = vpack.c.b16 %v3638, %v3634
    %v4259 = vpack.c.b16 %v3639, %v3635
    %v4260 = vpack.c.b16 %v3640, %v3636
    %v4261 = vpack.c.b16 %v3641, %v3637
    %v4262 = vpack.c.b16 %v3646, %v3642
    %v4263 = vpack.c.b16 %v3647, %v3643
    %v4264 = vpack.c.b16 %v3648, %v3644
    %v4265 = vpack.c.b16 %v3649, %v3645
    %v4266 = vpack.c.b16 %v3654, %v3650
    %v4267 = vpack.c.b16 %v3655, %v3651
    %v4268 = vpack.c.b16 %v3656, %v3652
    %v4269 = vpack.c.b16 %v3657, %v3653
    %v4270 = vpack.c.b16 %v3662, %v3658
    %v4271 = vpack.c.b16 %v3663, %v3659
    %v4272 = vpack.c.b16 %v3664, %v3660
    %v4273 = vpack.c.b16 %v3665, %v3661
    %v4274 = vpack.c.b16 %v3670, %v3666
    %v4275 = vpack.c.b16 %v3671, %v3667
    %v4276 = vpack.c.b16 %v3672, %v3668
    %v4277 = vpack.c.b16 %v3673, %v3669
    %v4278 = vpack.c.b16 %v3678, %v3674
    %v4279 = vpack.c.b16 %v3679, %v3675
    %v4280 = vpack.c.b16 %v3680, %v3676
    %v4281 = vpack.c.b16 %v3681, %v3677
    %v4282 = vpack.c.b16 %v3686, %v3682
    %v4283 = vpack.c.b16 %v3687, %v3683
    %v4284 = vpack.c.b16 %v3688, %v3684
    %v4285 = vpack.c.b16 %v3689, %v3685
    %v4286 = vpack.c.b16 %v3694, %v3690
    %v4287 = vpack.c.b16 %v3695, %v3691
    %v4288 = vpack.c.b16 %v3696, %v3692
    %v4289 = vpack.c.b16 %v3697, %v3693
    %v4290 = vpack.c.b16 %v3702, %v3698
    %v4291 = vpack.c.b16 %v3703, %v3699
    %v4292 = vpack.c.b16 %v3704, %v3700
    %v4293 = vpack.c.b16 %v3705, %v3701
    %v4294 = vpack.c.b16 %v3710, %v3706
    %v4295 = vpack.c.b16 %v3711, %v3707
    %v4296 = vpack.c.b16 %v3712, %v3708
    %v4297 = vpack.c.b16 %v3713, %v3709
    %v4298 = vpack.c.b16 %v3718, %v3714
    %v4299 = vpack.c.b16 %v3719, %v3715
    %v4300 = vpack.c.b16 %v3720, %v3716
    %v4301 = vpack.c.b16 %v3721, %v3717
    %v4302 = vpack.c.b16 %v3726, %v3722
    %v4303 = vpack.c.b16 %v3727, %v3723
    %v4304 = vpack.c.b16 %v3728, %v3724
    %v4305 = vpack.c.b16 %v3729, %v3725
    %v4306 = vpack.c.b16 %v3734, %v3730
    %v4307 = vpack.c.b16 %v3735, %v3731
    %v4308 = vpack.c.b16 %v3736, %v3732
    %v4309 = vpack.c.b16 %v3737, %v3733
    %v4310 = vpack.c.b16 %v3742, %v3738
    %v4311 = vpack.c.b16 %v3743, %v3739
    %v4312 = vpack.c.b16 %v3744, %v3740
    %v4313 = vpack.c.b16 %v3745, %v3741
    %v4314 = vpack.c.b16 %v3750, %v3746
    %v4315 = vpack.c.b16 %v3751, %v3747
    %v4316 = vpack.c.b16 %v3752, %v3748
    %v4317 = vpack.c.b16 %v3753, %v3749
    %v4318 = vpack.c.b16 %v3758, %v3754
    %v4319 = vpack.c.b16 %v3759, %v3755
    %v4320 = vpack.c.b16 %v3760, %v3756
    %v4321 = vpack.c.b16 %v3761, %v3757
    %v4322 = vpack.c.b16 %v3766, %v3762
    %v4323 = vpack.c.b16 %v3767, %v3763
    %v4324 = vpack.c.b16 %v3768, %v3764
    %v4325 = vpack.c.b16 %v3769, %v3765
    %v4326 = vpack.c.b16 %v3774, %v3770
    %v4327 = vpack.c.b16 %v3775, %v3771
    %v4328 = vpack.c.b16 %v3776, %v3772
    %v4329 = vpack.c.b16 %v3777, %v3773
    %v4330 = vpack.c.b16 %v3782, %v3778
    %v4331 = vpack.c.b16 %v3783, %v3779
    %v4332 = vpack.c.b16 %v3784, %v3780
    %v4333 = vpack.c.b16 %v3785, %v3781
    %v4334 = vpack.c.b16 %v3790, %v3786
    %v4335 = vpack.c.b16 %v3791, %v3787
    %v4336 = vpack.c.b16 %v3792, %v3788
    %v4337 = vpack.c.b16 %v3793, %v3789
    %v4338 = vpack.c.b16 %v3798, %v3794
    %v4339 = vpack.c.b16 %v3799, %v3795
    %v4340 = vpack.c.b16 %v3800, %v3796
    %v4341 = vpack.c.b16 %v3801, %v3797
    %v4342 = vpack.c.b16 %v3806, %v3802
    %v4343 = vpack.c.b16 %v3807, %v3803
    %v4344 = vpack.c.b16 %v3808, %v3804
    %v4345 = vpack.c.b16 %v3809, %v3805
    %v4346 = vpack.c.b16 %v3814, %v3810
    %v4347 = vpack.c.b16 %v3815, %v3811
    %v4348 = vpack.c.b16 %v3816, %v3812
    %v4349 = vpack.c.b16 %v3817, %v3813
    %v4350 = vpack.c.b16 %v3822, %v3818
    %v4351 = vpack.c.b16 %v3823, %v3819
    %v4352 = vpack.c.b16 %v3824, %v3820
    %v4353 = vpack.c.b16 %v3825, %v3821
    %v4354 = vpack.c.b16 %v3830, %v3826
    %v4355 = vpack.c.b16 %v3831, %v3827
    %v4356 = vpack.c.b16 %v3832, %v3828
    %v4357 = vpack.c.b16 %v3833, %v3829
    %v4358 = vpack.c.b16 %v3838, %v3834
    %v4359 = vpack.c.b16 %v3839, %v3835
    %v4360 = vpack.c.b16 %v3840, %v3836
    %v4361 = vpack.c.b16 %v3841, %v3837
    %v4362 = vpack.c.b16 %v3846, %v3842
    %v4363 = vpack.c.b16 %v3847, %v3843
    %v4364 = vpack.c.b16 %v3848, %v3844
    %v4365 = vpack.c.b16 %v3849, %v3845
    %v4366 = vpack.c.b16 %v3854, %v3850
    %v4367 = vpack.c.b16 %v3855, %v3851
    %v4368 = vpack.c.b16 %v3856, %v3852
    %v4369 = vpack.c.b16 %v3857, %v3853
    %4882 = vmatprep.subr.bf16.mxu0 %v3859
    %4883 = vmatpush1.bf16.msra.mxu0 %v3858
    %4884 = vmatprep.subr.bf16.mxu0 %v3863
    %4885 = vmatpush1.bf16.msra.mxu0 %v3862
    %4886 = vmatprep.subr.bf16.mxu0 %v3867
    %4887 = vmatpush1.bf16.msra.mxu0 %v3866
    %4888 = vmatprep.subr.bf16.mxu0 %v3871
    %4889 = vmatpush1.bf16.msra.mxu0 %v3870
    %4890 = vmatprep.subr.bf16.mxu0 %v3875
    %4891 = vmatpush1.bf16.msra.mxu0 %v3874
    %4892 = vmatprep.subr.bf16.mxu0 %v3879
    %4893 = vmatpush1.bf16.msra.mxu0 %v3878
    %4894 = vmatprep.subr.bf16.mxu0 %v3883
    %4895 = vmatpush1.bf16.msra.mxu0 %v3882
    %4896 = vmatprep.subr.bf16.mxu0 %v3887
    %4897 = vmatpush1.bf16.msra.mxu0 %v3886
    %4898 = vmatprep.subr.bf16.mxu0 %v3891
    %4899 = vmatpush1.bf16.msra.mxu0 %v3890
    %4900 = vmatprep.subr.bf16.mxu0 %v3895
    %4901 = vmatpush1.bf16.msra.mxu0 %v3894
    %4902 = vmatprep.subr.bf16.mxu0 %v3899
    %4903 = vmatpush1.bf16.msra.mxu0 %v3898
    %4904 = vmatprep.subr.bf16.mxu0 %v3903
    %4905 = vmatpush1.bf16.msra.mxu0 %v3902
    %4906 = vmatprep.subr.bf16.mxu0 %v3907
    %4907 = vmatpush1.bf16.msra.mxu0 %v3906
    %4908 = vmatprep.subr.bf16.mxu0 %v3911
    %4909 = vmatpush1.bf16.msra.mxu0 %v3910
    %4910 = vmatprep.subr.bf16.mxu0 %v3915
    %4911 = vmatpush1.bf16.msra.mxu0 %v3914
    %4912 = vmatprep.subr.bf16.mxu0 %v3919
    %4913 = vmatpush1.bf16.msra.mxu0 %v3918
    %4914 = vmatprep.mubr.bf16.mxu0 %v1765
    %4915 = vmatmul.mubr.bf16.gmra.mrb[0].mxu0 %v1756
    %v4916 = vpop.f32.mrb[0].mxu0
    %v4917 = vadd.f32 %v2305, %v4916
    %v4918 = vpop.f32.mrb[0].mxu0
    %v4919 = vadd.f32 %v2309, %v4918
    %v4920 = vpop.f32.mrb[0].mxu0
    %v4921 = vpop.f32.mrb[0].mxu0
    %4922 = vdwg.mxu0
    %4923 = vmatprep.subr.bf16.mxu0 %v3923
    %4924 = vmatpush1.bf16.msra.mxu0 %v3922
    %4925 = vmatprep.subr.bf16.mxu0 %v3927
    %4926 = vmatpush1.bf16.msra.mxu0 %v3926
    %4927 = vmatprep.subr.bf16.mxu0 %v3931
    %4928 = vmatpush1.bf16.msra.mxu0 %v3930
    %4929 = vmatprep.subr.bf16.mxu0 %v3935
    %4930 = vmatpush1.bf16.msra.mxu0 %v3934
    %4931 = vmatprep.subr.bf16.mxu0 %v3939
    %4932 = vmatpush1.bf16.msra.mxu0 %v3938
    %4933 = vmatprep.subr.bf16.mxu0 %v3943
    %4934 = vmatpush1.bf16.msra.mxu0 %v3942
    %4935 = vmatprep.subr.bf16.mxu0 %v3947
    %4936 = vmatpush1.bf16.msra.mxu0 %v3946
    %4937 = vmatprep.subr.bf16.mxu0 %v3951
    %4938 = vmatpush1.bf16.msra.mxu0 %v3950
    %4939 = vmatprep.subr.bf16.mxu0 %v3955
    %4940 = vmatpush1.bf16.msra.mxu0 %v3954
    %4941 = vmatprep.subr.bf16.mxu0 %v3959
    %4942 = vmatpush1.bf16.msra.mxu0 %v3958
    %4943 = vmatprep.subr.bf16.mxu0 %v3963
    %4944 = vmatpush1.bf16.msra.mxu0 %v3962
    %4945 = vmatprep.subr.bf16.mxu0 %v3967
    %4946 = vmatpush1.bf16.msra.mxu0 %v3966
    %4947 = vmatprep.subr.bf16.mxu0 %v3971
    %4948 = vmatpush1.bf16.msra.mxu0 %v3970
    %4949 = vmatprep.subr.bf16.mxu0 %v3975
    %4950 = vmatpush1.bf16.msra.mxu0 %v3974
    %4951 = vmatprep.subr.bf16.mxu0 %v3979
    %4952 = vmatpush1.bf16.msra.mxu0 %v3978
    %4953 = vmatprep.subr.bf16.mxu0 %v3983
    %4954 = vmatpush1.bf16.msra.mxu0 %v3982
    %4955 = vmatprep.mubr.bf16.mxu0 %v1768
    %4956 = vmatmul.mubr.bf16.gmra.mrb[0].mxu0 %v1757
    %v4957 = vpop.f32.mrb[0].mxu0
    %v4958 = vadd.f32 %v4917, %v4957
    %v4959 = vpop.f32.mrb[0].mxu0
    %v4960 = vadd.f32 %v4919, %v4959
    %v4961 = vpop.f32.mrb[0].mxu0
    %v4962 = vpop.f32.mrb[0].mxu0
    %4963 = vdwg.mxu0
    %4964 = vmatprep.subr.bf16.mxu0 %v3987
    %4965 = vmatpush1.bf16.msra.mxu0 %v3986
    %4966 = vmatprep.subr.bf16.mxu0 %v3991
    %4967 = vmatpush1.bf16.msra.mxu0 %v3990
    %4968 = vmatprep.subr.bf16.mxu0 %v3995
    %4969 = vmatpush1.bf16.msra.mxu0 %v3994
    %4970 = vmatprep.subr.bf16.mxu0 %v3999
    %4971 = vmatpush1.bf16.msra.mxu0 %v3998
    %4972 = vmatprep.subr.bf16.mxu0 %v4003
    %4973 = vmatpush1.bf16.msra.mxu0 %v4002
    %4974 = vmatprep.subr.bf16.mxu0 %v4007
    %4975 = vmatpush1.bf16.msra.mxu0 %v4006
    %4976 = vmatprep.subr.bf16.mxu0 %v4011
    %4977 = vmatpush1.bf16.msra.mxu0 %v4010
    %4978 = vmatprep.subr.bf16.mxu0 %v4015
    %4979 = vmatpush1.bf16.msra.mxu0 %v4014
    %4980 = vmatprep.subr.bf16.mxu0 %v4019
    %4981 = vmatpush1.bf16.msra.mxu0 %v4018
    %4982 = vmatprep.subr.bf16.mxu0 %v4023
    %4983 = vmatpush1.bf16.msra.mxu0 %v4022
    %4984 = vmatprep.subr.bf16.mxu0 %v4027
    %4985 = vmatpush1.bf16.msra.mxu0 %v4026
    %4986 = vmatprep.subr.bf16.mxu0 %v4031
    %4987 = vmatpush1.bf16.msra.mxu0 %v4030
    %4988 = vmatprep.subr.bf16.mxu0 %v4035
    %4989 = vmatpush1.bf16.msra.mxu0 %v4034
    %4990 = vmatprep.subr.bf16.mxu0 %v4039
    %4991 = vmatpush1.bf16.msra.mxu0 %v4038
    %4992 = vmatprep.subr.bf16.mxu0 %v4043
    %4993 = vmatpush1.bf16.msra.mxu0 %v4042
    %4994 = vmatprep.subr.bf16.mxu0 %v4047
    %4995 = vmatpush1.bf16.msra.mxu0 %v4046
    %4996 = vmatprep.mubr.bf16.mxu0 %v1771
    %4997 = vmatmul.mubr.bf16.gmra.mrb[0].mxu0 %v1758
    %v4998 = vpop.f32.mrb[0].mxu0
    %v4999 = vadd.f32 %v4958, %v4998
    %v5000 = vpop.f32.mrb[0].mxu0
    %v5001 = vadd.f32 %v4960, %v5000
    %v5002 = vpop.f32.mrb[0].mxu0
    %v5003 = vpop.f32.mrb[0].mxu0
    %5004 = vdwg.mxu0
    %5005 = vmatprep.subr.bf16.mxu0 %v4051
    %5006 = vmatpush1.bf16.msra.mxu0 %v4050
    %5007 = vmatprep.subr.bf16.mxu0 %v4055
    %5008 = vmatpush1.bf16.msra.mxu0 %v4054
    %5009 = vmatprep.subr.bf16.mxu0 %v4059
    %5010 = vmatpush1.bf16.msra.mxu0 %v4058
    %5011 = vmatprep.subr.bf16.mxu0 %v4063
    %5012 = vmatpush1.bf16.msra.mxu0 %v4062
    %5013 = vmatprep.subr.bf16.mxu0 %v4067
    %5014 = vmatpush1.bf16.msra.mxu0 %v4066
    %5015 = vmatprep.subr.bf16.mxu0 %v4071
    %5016 = vmatpush1.bf16.msra.mxu0 %v4070
    %5017 = vmatprep.subr.bf16.mxu0 %v4075
    %5018 = vmatpush1.bf16.msra.mxu0 %v4074
    %5019 = vmatprep.subr.bf16.mxu0 %v4079
    %5020 = vmatpush1.bf16.msra.mxu0 %v4078
    %5021 = vmatprep.subr.bf16.mxu0 %v4083
    %5022 = vmatpush1.bf16.msra.mxu0 %v4082
    %5023 = vmatprep.subr.bf16.mxu0 %v4087
    %5024 = vmatpush1.bf16.msra.mxu0 %v4086
    %5025 = vmatprep.subr.bf16.mxu0 %v4091
    %5026 = vmatpush1.bf16.msra.mxu0 %v4090
    %5027 = vmatprep.subr.bf16.mxu0 %v4095
    %5028 = vmatpush1.bf16.msra.mxu0 %v4094
    %5029 = vmatprep.subr.bf16.mxu0 %v4099
    %5030 = vmatpush1.bf16.msra.mxu0 %v4098
    %5031 = vmatprep.subr.bf16.mxu0 %v4103
    %5032 = vmatpush1.bf16.msra.mxu0 %v4102
    %5033 = vmatprep.subr.bf16.mxu0 %v4107
    %5034 = vmatpush1.bf16.msra.mxu0 %v4106
    %5035 = vmatprep.subr.bf16.mxu0 %v4111
    %5036 = vmatpush1.bf16.msra.mxu0 %v4110
    %5037 = vmatprep.mubr.bf16.mxu0 %v1774
    %5038 = vmatmul.mubr.bf16.gmra.mrb[0].mxu0 %v1759
    %v5039 = vpop.f32.mrb[0].mxu0
    %v5040 = vadd.f32 %v4999, %v5039
    %v5041 = vpop.f32.mrb[0].mxu0
    %v5042 = vadd.f32 %v5001, %v5041
    %v5043 = vpop.f32.mrb[0].mxu0
    %v5044 = vpop.f32.mrb[0].mxu0
    %5045 = vdwg.mxu0
    %5046 = vmatprep.subr.bf16.mxu0 %v4115
    %5047 = vmatpush1.bf16.msra.mxu0 %v4114
    %5048 = vmatprep.subr.bf16.mxu0 %v4119
    %5049 = vmatpush1.bf16.msra.mxu0 %v4118
    %5050 = vmatprep.subr.bf16.mxu0 %v4123
    %5051 = vmatpush1.bf16.msra.mxu0 %v4122
    %5052 = vmatprep.subr.bf16.mxu0 %v4127
    %5053 = vmatpush1.bf16.msra.mxu0 %v4126
    %5054 = vmatprep.subr.bf16.mxu0 %v4131
    %5055 = vmatpush1.bf16.msra.mxu0 %v4130
    %5056 = vmatprep.subr.bf16.mxu0 %v4135
    %5057 = vmatpush1.bf16.msra.mxu0 %v4134
    %5058 = vmatprep.subr.bf16.mxu0 %v4139
    %5059 = vmatpush1.bf16.msra.mxu0 %v4138
    %5060 = vmatprep.subr.bf16.mxu0 %v4143
    %5061 = vmatpush1.bf16.msra.mxu0 %v4142
    %5062 = vmatprep.subr.bf16.mxu0 %v4147
    %5063 = vmatpush1.bf16.msra.mxu0 %v4146
    %5064 = vmatprep.subr.bf16.mxu0 %v4151
    %5065 = vmatpush1.bf16.msra.mxu0 %v4150
    %5066 = vmatprep.subr.bf16.mxu0 %v4155
    %5067 = vmatpush1.bf16.msra.mxu0 %v4154
    %5068 = vmatprep.subr.bf16.mxu0 %v4159
    %5069 = vmatpush1.bf16.msra.mxu0 %v4158
    %5070 = vmatprep.subr.bf16.mxu0 %v4163
    %5071 = vmatpush1.bf16.msra.mxu0 %v4162
    %5072 = vmatprep.subr.bf16.mxu0 %v4167
    %5073 = vmatpush1.bf16.msra.mxu0 %v4166
    %5074 = vmatprep.subr.bf16.mxu0 %v4171
    %5075 = vmatpush1.bf16.msra.mxu0 %v4170
    %5076 = vmatprep.subr.bf16.mxu0 %v4175
    %5077 = vmatpush1.bf16.msra.mxu0 %v4174
    %5078 = vmatprep.mubr.bf16.mxu0 %v1777
    %5079 = vmatmul.mubr.bf16.gmra.mrb[0].mxu0 %v1760
    %v5080 = vpop.f32.mrb[0].mxu0
    %v5081 = vadd.f32 %v5040, %v5080
    %v5082 = vpop.f32.mrb[0].mxu0
    %v5083 = vadd.f32 %v5042, %v5082
    %v5084 = vpop.f32.mrb[0].mxu0
    %v5085 = vpop.f32.mrb[0].mxu0
    %5086 = vdwg.mxu0
    %5087 = vmatprep.subr.bf16.mxu0 %v4179
    %5088 = vmatpush1.bf16.msra.mxu0 %v4178
    %5089 = vmatprep.subr.bf16.mxu0 %v4183
    %5090 = vmatpush1.bf16.msra.mxu0 %v4182
    %5091 = vmatprep.subr.bf16.mxu0 %v4187
    %5092 = vmatpush1.bf16.msra.mxu0 %v4186
    %5093 = vmatprep.subr.bf16.mxu0 %v4191
    %5094 = vmatpush1.bf16.msra.mxu0 %v4190
    %5095 = vmatprep.subr.bf16.mxu0 %v4195
    %5096 = vmatpush1.bf16.msra.mxu0 %v4194
    %5097 = vmatprep.subr.bf16.mxu0 %v4199
    %5098 = vmatpush1.bf16.msra.mxu0 %v4198
    %5099 = vmatprep.subr.bf16.mxu0 %v4203
    %5100 = vmatpush1.bf16.msra.mxu0 %v4202
    %5101 = vmatprep.subr.bf16.mxu0 %v4207
    %5102 = vmatpush1.bf16.msra.mxu0 %v4206
    %5103 = vmatprep.subr.bf16.mxu0 %v4211
    %5104 = vmatpush1.bf16.msra.mxu0 %v4210
    %5105 = vmatprep.subr.bf16.mxu0 %v4215
    %5106 = vmatpush1.bf16.msra.mxu0 %v4214
    %5107 = vmatprep.subr.bf16.mxu0 %v4219
    %5108 = vmatpush1.bf16.msra.mxu0 %v4218
    %5109 = vmatprep.subr.bf16.mxu0 %v4223
    %5110 = vmatpush1.bf16.msra.mxu0 %v4222
    %5111 = vmatprep.subr.bf16.mxu0 %v4227
    %5112 = vmatpush1.bf16.msra.mxu0 %v4226
    %5113 = vmatprep.subr.bf16.mxu0 %v4231
    %5114 = vmatpush1.bf16.msra.mxu0 %v4230
    %5115 = vmatprep.subr.bf16.mxu0 %v4235
    %5116 = vmatpush1.bf16.msra.mxu0 %v4234
    %5117 = vmatprep.subr.bf16.mxu0 %v4239
    %5118 = vmatpush1.bf16.msra.mxu0 %v4238
    %5119 = vmatprep.mubr.bf16.mxu0 %v1780
    %5120 = vmatmul.mubr.bf16.gmra.mrb[0].mxu0 %v1761
    %v5121 = vpop.f32.mrb[0].mxu0
    %v5122 = vadd.f32 %v5081, %v5121
    %v5123 = vpop.f32.mrb[0].mxu0
    %v5124 = vadd.f32 %v5083, %v5123
    %v5125 = vpop.f32.mrb[0].mxu0
    %v5126 = vpop.f32.mrb[0].mxu0
    %5127 = vdwg.mxu0
    %5128 = vmatprep.subr.bf16.mxu0 %v4243
    %5129 = vmatpush1.bf16.msra.mxu0 %v4242
    %5130 = vmatprep.subr.bf16.mxu0 %v4247
    %5131 = vmatpush1.bf16.msra.mxu0 %v4246
    %5132 = vmatprep.subr.bf16.mxu0 %v4251
    %5133 = vmatpush1.bf16.msra.mxu0 %v4250
    %5134 = vmatprep.subr.bf16.mxu0 %v4255
    %5135 = vmatpush1.bf16.msra.mxu0 %v4254
    %5136 = vmatprep.subr.bf16.mxu0 %v4259
    %5137 = vmatpush1.bf16.msra.mxu0 %v4258
    %5138 = vmatprep.subr.bf16.mxu0 %v4263
    %5139 = vmatpush1.bf16.msra.mxu0 %v4262
    %5140 = vmatprep.subr.bf16.mxu0 %v4267
    %5141 = vmatpush1.bf16.msra.mxu0 %v4266
    %5142 = vmatprep.subr.bf16.mxu0 %v4271
    %5143 = vmatpush1.bf16.msra.mxu0 %v4270
    %5144 = vmatprep.subr.bf16.mxu0 %v4275
    %5145 = vmatpush1.bf16.msra.mxu0 %v4274
    %5146 = vmatprep.subr.bf16.mxu0 %v4279
    %5147 = vmatpush1.bf16.msra.mxu0 %v4278
    %5148 = vmatprep.subr.bf16.mxu0 %v4283
    %5149 = vmatpush1.bf16.msra.mxu0 %v4282
    %5150 = vmatprep.subr.bf16.mxu0 %v4287
    %5151 = vmatpush1.bf16.msra.mxu0 %v4286
    %5152 = vmatprep.subr.bf16.mxu0 %v4291
    %5153 = vmatpush1.bf16.msra.mxu0 %v4290
    %5154 = vmatprep.subr.bf16.mxu0 %v4295
    %5155 = vmatpush1.bf16.msra.mxu0 %v4294
    %5156 = vmatprep.subr.bf16.mxu0 %v4299
    %5157 = vmatpush1.bf16.msra.mxu0 %v4298
    %5158 = vmatprep.subr.bf16.mxu0 %v4303
    %5159 = vmatpush1.bf16.msra.mxu0 %v4302
    %5160 = vmatprep.mubr.bf16.mxu0 %v1783
    %5161 = vmatmul.mubr.bf16.gmra.mrb[0].mxu0 %v1762
    %v5162 = vpop.f32.mrb[0].mxu0
    %v5163 = vadd.f32 %v5122, %v5162
    %v5164 = vpop.f32.mrb[0].mxu0
    %v5165 = vadd.f32 %v5124, %v5164
    %v5166 = vpop.f32.mrb[0].mxu0
    %v5167 = vpop.f32.mrb[0].mxu0
    %5168 = vdwg.mxu0
    %5169 = vmatprep.subr.bf16.mxu0 %v4307
    %5170 = vmatpush1.bf16.msra.mxu0 %v4306
    %5171 = vmatprep.subr.bf16.mxu0 %v4311
    %5172 = vmatpush1.bf16.msra.mxu0 %v4310
    %5173 = vmatprep.subr.bf16.mxu0 %v4315
    %5174 = vmatpush1.bf16.msra.mxu0 %v4314
    %5175 = vmatprep.subr.bf16.mxu0 %v4319
    %5176 = vmatpush1.bf16.msra.mxu0 %v4318
    %5177 = vmatprep.subr.bf16.mxu0 %v4323
    %5178 = vmatpush1.bf16.msra.mxu0 %v4322
    %5179 = vmatprep.subr.bf16.mxu0 %v4327
    %5180 = vmatpush1.bf16.msra.mxu0 %v4326
    %5181 = vmatprep.subr.bf16.mxu0 %v4331
    %5182 = vmatpush1.bf16.msra.mxu0 %v4330
    %5183 = vmatprep.subr.bf16.mxu0 %v4335
    %5184 = vmatpush1.bf16.msra.mxu0 %v4334
    %5185 = vmatprep.subr.bf16.mxu0 %v4339
    %5186 = vmatpush1.bf16.msra.mxu0 %v4338
    %5187 = vmatprep.subr.bf16.mxu0 %v4343
    %5188 = vmatpush1.bf16.msra.mxu0 %v4342
    %5189 = vmatprep.subr.bf16.mxu0 %v4347
    %5190 = vmatpush1.bf16.msra.mxu0 %v4346
    %5191 = vmatprep.subr.bf16.mxu0 %v4351
    %5192 = vmatpush1.bf16.msra.mxu0 %v4350
    %5193 = vmatprep.subr.bf16.mxu0 %v4355
    %5194 = vmatpush1.bf16.msra.mxu0 %v4354
    %5195 = vmatprep.subr.bf16.mxu0 %v4359
    %5196 = vmatpush1.bf16.msra.mxu0 %v4358
    %5197 = vmatprep.subr.bf16.mxu0 %v4363
    %5198 = vmatpush1.bf16.msra.mxu0 %v4362
    %5199 = vmatprep.subr.bf16.mxu0 %v4367
    %5200 = vmatpush1.bf16.msra.mxu0 %v4366
    %5201 = vmatprep.mubr.bf16.mxu0 %v1786
    %5202 = vmatmul.mubr.bf16.gmra.mrb[0].mxu0 %v1763
    %v5203 = vpop.f32.mrb[0].mxu0
    %v5204 = vadd.f32 %v5163, %v5203
    %v5205 = vpop.f32.mrb[0].mxu0
    %v5206 = vadd.f32 %v5165, %v5205
    %v5207 = vpop.f32.mrb[0].mxu0
    %v5208 = vpop.f32.mrb[0].mxu0
    %5209 = vdwg.mxu0
    %5210 = vmatprep.subr.bf16.mxu0 %v3861
    %5211 = vmatpush1.bf16.msra.mxu0 %v3860
    %5212 = vmatprep.subr.bf16.mxu0 %v3865
    %5213 = vmatpush1.bf16.msra.mxu0 %v3864
    %5214 = vmatprep.subr.bf16.mxu0 %v3869
    %5215 = vmatpush1.bf16.msra.mxu0 %v3868
    %5216 = vmatprep.subr.bf16.mxu0 %v3873
    %5217 = vmatpush1.bf16.msra.mxu0 %v3872
    %5218 = vmatprep.subr.bf16.mxu0 %v3877
    %5219 = vmatpush1.bf16.msra.mxu0 %v3876
    %5220 = vmatprep.subr.bf16.mxu0 %v3881
    %5221 = vmatpush1.bf16.msra.mxu0 %v3880
    %5222 = vmatprep.subr.bf16.mxu0 %v3885
    %5223 = vmatpush1.bf16.msra.mxu0 %v3884
    %5224 = vmatprep.subr.bf16.mxu0 %v3889
    %5225 = vmatpush1.bf16.msra.mxu0 %v3888
    %5226 = vmatprep.subr.bf16.mxu0 %v3893
    %5227 = vmatpush1.bf16.msra.mxu0 %v3892
    %5228 = vmatprep.subr.bf16.mxu0 %v3897
    %5229 = vmatpush1.bf16.msra.mxu0 %v3896
    %5230 = vmatprep.subr.bf16.mxu0 %v3901
    %5231 = vmatpush1.bf16.msra.mxu0 %v3900
    %5232 = vmatprep.subr.bf16.mxu0 %v3905
    %5233 = vmatpush1.bf16.msra.mxu0 %v3904
    %5234 = vmatprep.subr.bf16.mxu0 %v3909
    %5235 = vmatpush1.bf16.msra.mxu0 %v3908
    %5236 = vmatprep.subr.bf16.mxu0 %v3913
    %5237 = vmatpush1.bf16.msra.mxu0 %v3912
    %5238 = vmatprep.subr.bf16.mxu0 %v3917
    %5239 = vmatpush1.bf16.msra.mxu0 %v3916
    %5240 = vmatprep.subr.bf16.mxu0 %v3921
    %5241 = vmatpush1.bf16.msra.mxu0 %v3920
    %5242 = vmatprep.mubr.bf16.mxu0 %v1765
    %5243 = vmatmul.mubr.bf16.gmra.mrb[0].mxu0 %v1756
    %v5244 = vpop.f32.mrb[0].mxu0
    %v5245 = vadd.f32 %v2313, %v5244
    %v5246 = vpop.f32.mrb[0].mxu0
    %v5247 = vadd.f32 %v2317, %v5246
    %v5248 = vpop.f32.mrb[0].mxu0
    %v5249 = vpop.f32.mrb[0].mxu0
    %5250 = vdwg.mxu0
    %5251 = vmatprep.subr.bf16.mxu0 %v3925
    %5252 = vmatpush1.bf16.msra.mxu0 %v3924
    %5253 = vmatprep.subr.bf16.mxu0 %v3929
    %5254 = vmatpush1.bf16.msra.mxu0 %v3928
    %5255 = vmatprep.subr.bf16.mxu0 %v3933
    %5256 = vmatpush1.bf16.msra.mxu0 %v3932
    %5257 = vmatprep.subr.bf16.mxu0 %v3937
    %5258 = vmatpush1.bf16.msra.mxu0 %v3936
    %5259 = vmatprep.subr.bf16.mxu0 %v3941
    %5260 = vmatpush1.bf16.msra.mxu0 %v3940
    %5261 = vmatprep.subr.bf16.mxu0 %v3945
    %5262 = vmatpush1.bf16.msra.mxu0 %v3944
    %5263 = vmatprep.subr.bf16.mxu0 %v3949
    %5264 = vmatpush1.bf16.msra.mxu0 %v3948
    %5265 = vmatprep.subr.bf16.mxu0 %v3953
    %5266 = vmatpush1.bf16.msra.mxu0 %v3952
    %5267 = vmatprep.subr.bf16.mxu0 %v3957
    %5268 = vmatpush1.bf16.msra.mxu0 %v3956
    %5269 = vmatprep.subr.bf16.mxu0 %v3961
    %5270 = vmatpush1.bf16.msra.mxu0 %v3960
    %5271 = vmatprep.subr.bf16.mxu0 %v3965
    %5272 = vmatpush1.bf16.msra.mxu0 %v3964
    %5273 = vmatprep.subr.bf16.mxu0 %v3969
    %5274 = vmatpush1.bf16.msra.mxu0 %v3968
    %5275 = vmatprep.subr.bf16.mxu0 %v3973
    %5276 = vmatpush1.bf16.msra.mxu0 %v3972
    %5277 = vmatprep.subr.bf16.mxu0 %v3977
    %5278 = vmatpush1.bf16.msra.mxu0 %v3976
    %5279 = vmatprep.subr.bf16.mxu0 %v3981
    %5280 = vmatpush1.bf16.msra.mxu0 %v3980
    %5281 = vmatprep.subr.bf16.mxu0 %v3985
    %5282 = vmatpush1.bf16.msra.mxu0 %v3984
    %5283 = vmatprep.mubr.bf16.mxu0 %v1768
    %5284 = vmatmul.mubr.bf16.gmra.mrb[0].mxu0 %v1757
    %v5285 = vpop.f32.mrb[0].mxu0
    %v5286 = vadd.f32 %v5245, %v5285
    %v5287 = vpop.f32.mrb[0].mxu0
    %v5288 = vadd.f32 %v5247, %v5287
    %v5289 = vpop.f32.mrb[0].mxu0
    %v5290 = vpop.f32.mrb[0].mxu0
    %5291 = vdwg.mxu0
    %5292 = vmatprep.subr.bf16.mxu0 %v3989
    %5293 = vmatpush1.bf16.msra.mxu0 %v3988
    %5294 = vmatprep.subr.bf16.mxu0 %v3993
    %5295 = vmatpush1.bf16.msra.mxu0 %v3992
    %5296 = vmatprep.subr.bf16.mxu0 %v3997
    %5297 = vmatpush1.bf16.msra.mxu0 %v3996
    %5298 = vmatprep.subr.bf16.mxu0 %v4001
    %5299 = vmatpush1.bf16.msra.mxu0 %v4000
    %5300 = vmatprep.subr.bf16.mxu0 %v4005
    %5301 = vmatpush1.bf16.msra.mxu0 %v4004
    %5302 = vmatprep.subr.bf16.mxu0 %v4009
    %5303 = vmatpush1.bf16.msra.mxu0 %v4008
    %5304 = vmatprep.subr.bf16.mxu0 %v4013
    %5305 = vmatpush1.bf16.msra.mxu0 %v4012
    %5306 = vmatprep.subr.bf16.mxu0 %v4017
    %5307 = vmatpush1.bf16.msra.mxu0 %v4016
    %5308 = vmatprep.subr.bf16.mxu0 %v4021
    %5309 = vmatpush1.bf16.msra.mxu0 %v4020
    %5310 = vmatprep.subr.bf16.mxu0 %v4025
    %5311 = vmatpush1.bf16.msra.mxu0 %v4024
    %5312 = vmatprep.subr.bf16.mxu0 %v4029
    %5313 = vmatpush1.bf16.msra.mxu0 %v4028
    %5314 = vmatprep.subr.bf16.mxu0 %v4033
    %5315 = vmatpush1.bf16.msra.mxu0 %v4032
    %5316 = vmatprep.subr.bf16.mxu0 %v4037
    %5317 = vmatpush1.bf16.msra.mxu0 %v4036
    %5318 = vmatprep.subr.bf16.mxu0 %v4041
    %5319 = vmatpush1.bf16.msra.mxu0 %v4040
    %5320 = vmatprep.subr.bf16.mxu0 %v4045
    %5321 = vmatpush1.bf16.msra.mxu0 %v4044
    %5322 = vmatprep.subr.bf16.mxu0 %v4049
    %5323 = vmatpush1.bf16.msra.mxu0 %v4048
    %5324 = vmatprep.mubr.bf16.mxu0 %v1771
    %5325 = vmatmul.mubr.bf16.gmra.mrb[0].mxu0 %v1758
    %v5326 = vpop.f32.mrb[0].mxu0
    %v5327 = vadd.f32 %v5286, %v5326
    %v5328 = vpop.f32.mrb[0].mxu0
    %v5329 = vadd.f32 %v5288, %v5328
    %v5330 = vpop.f32.mrb[0].mxu0
    %v5331 = vpop.f32.mrb[0].mxu0
    %5332 = vdwg.mxu0
    %5333 = vmatprep.subr.bf16.mxu0 %v4053
    %5334 = vmatpush1.bf16.msra.mxu0 %v4052
    %5335 = vmatprep.subr.bf16.mxu0 %v4057
    %5336 = vmatpush1.bf16.msra.mxu0 %v4056
    %5337 = vmatprep.subr.bf16.mxu0 %v4061
    %5338 = vmatpush1.bf16.msra.mxu0 %v4060
    %5339 = vmatprep.subr.bf16.mxu0 %v4065
    %5340 = vmatpush1.bf16.msra.mxu0 %v4064
    %5341 = vmatprep.subr.bf16.mxu0 %v4069
    %5342 = vmatpush1.bf16.msra.mxu0 %v4068
    %5343 = vmatprep.subr.bf16.mxu0 %v4073
    %5344 = vmatpush1.bf16.msra.mxu0 %v4072
    %5345 = vmatprep.subr.bf16.mxu0 %v4077
    %5346 = vmatpush1.bf16.msra.mxu0 %v4076
    %5347 = vmatprep.subr.bf16.mxu0 %v4081
    %5348 = vmatpush1.bf16.msra.mxu0 %v4080
    %5349 = vmatprep.subr.bf16.mxu0 %v4085
    %5350 = vmatpush1.bf16.msra.mxu0 %v4084
    %5351 = vmatprep.subr.bf16.mxu0 %v4089
    %5352 = vmatpush1.bf16.msra.mxu0 %v4088
    %5353 = vmatprep.subr.bf16.mxu0 %v4093
    %5354 = vmatpush1.bf16.msra.mxu0 %v4092
    %5355 = vmatprep.subr.bf16.mxu0 %v4097
    %5356 = vmatpush1.bf16.msra.mxu0 %v4096
    %5357 = vmatprep.subr.bf16.mxu0 %v4101
    %5358 = vmatpush1.bf16.msra.mxu0 %v4100
    %5359 = vmatprep.subr.bf16.mxu0 %v4105
    %5360 = vmatpush1.bf16.msra.mxu0 %v4104
    %5361 = vmatprep.subr.bf16.mxu0 %v4109
    %5362 = vmatpush1.bf16.msra.mxu0 %v4108
    %5363 = vmatprep.subr.bf16.mxu0 %v4113
    %5364 = vmatpush1.bf16.msra.mxu0 %v4112
    %5365 = vmatprep.mubr.bf16.mxu0 %v1774
    %5366 = vmatmul.mubr.bf16.gmra.mrb[0].mxu0 %v1759
    %v5367 = vpop.f32.mrb[0].mxu0
    %v5368 = vadd.f32 %v5327, %v5367
    %v5369 = vpop.f32.mrb[0].mxu0
    %v5370 = vadd.f32 %v5329, %v5369
    %v5371 = vpop.f32.mrb[0].mxu0
    %v5372 = vpop.f32.mrb[0].mxu0
    %5373 = vdwg.mxu0
    %5374 = vmatprep.subr.bf16.mxu0 %v4117
    %5375 = vmatpush1.bf16.msra.mxu0 %v4116
    %5376 = vmatprep.subr.bf16.mxu0 %v4121
    %5377 = vmatpush1.bf16.msra.mxu0 %v4120
    %5378 = vmatprep.subr.bf16.mxu0 %v4125
    %5379 = vmatpush1.bf16.msra.mxu0 %v4124
    %5380 = vmatprep.subr.bf16.mxu0 %v4129
    %5381 = vmatpush1.bf16.msra.mxu0 %v4128
    %5382 = vmatprep.subr.bf16.mxu0 %v4133
    %5383 = vmatpush1.bf16.msra.mxu0 %v4132
    %5384 = vmatprep.subr.bf16.mxu0 %v4137
    %5385 = vmatpush1.bf16.msra.mxu0 %v4136
    %5386 = vmatprep.subr.bf16.mxu0 %v4141
    %5387 = vmatpush1.bf16.msra.mxu0 %v4140
    %5388 = vmatprep.subr.bf16.mxu0 %v4145
    %5389 = vmatpush1.bf16.msra.mxu0 %v4144
    %5390 = vmatprep.subr.bf16.mxu0 %v4149
    %5391 = vmatpush1.bf16.msra.mxu0 %v4148
    %5392 = vmatprep.subr.bf16.mxu0 %v4153
    %5393 = vmatpush1.bf16.msra.mxu0 %v4152
    %5394 = vmatprep.subr.bf16.mxu0 %v4157
    %5395 = vmatpush1.bf16.msra.mxu0 %v4156
    %5396 = vmatprep.subr.bf16.mxu0 %v4161
    %5397 = vmatpush1.bf16.msra.mxu0 %v4160
    %5398 = vmatprep.subr.bf16.mxu0 %v4165
    %5399 = vmatpush1.bf16.msra.mxu0 %v4164
    %5400 = vmatprep.subr.bf16.mxu0 %v4169
    %5401 = vmatpush1.bf16.msra.mxu0 %v4168
    %5402 = vmatprep.subr.bf16.mxu0 %v4173
    %5403 = vmatpush1.bf16.msra.mxu0 %v4172
    %5404 = vmatprep.subr.bf16.mxu0 %v4177
    %5405 = vmatpush1.bf16.msra.mxu0 %v4176
    %5406 = vmatprep.mubr.bf16.mxu0 %v1777
    %5407 = vmatmul.mubr.bf16.gmra.mrb[0].mxu0 %v1760
    %v5408 = vpop.f32.mrb[0].mxu0
    %v5409 = vadd.f32 %v5368, %v5408
    %v5410 = vpop.f32.mrb[0].mxu0
    %v5411 = vadd.f32 %v5370, %v5410
    %v5412 = vpop.f32.mrb[0].mxu0
    %v5413 = vpop.f32.mrb[0].mxu0
    %5414 = vdwg.mxu0
    %5415 = vmatprep.subr.bf16.mxu0 %v4181
    %5416 = vmatpush1.bf16.msra.mxu0 %v4180
    %5417 = vmatprep.subr.bf16.mxu0 %v4185
    %5418 = vmatpush1.bf16.msra.mxu0 %v4184
    %5419 = vmatprep.subr.bf16.mxu0 %v4189
    %5420 = vmatpush1.bf16.msra.mxu0 %v4188
    %5421 = vmatprep.subr.bf16.mxu0 %v4193
    %5422 = vmatpush1.bf16.msra.mxu0 %v4192
    %5423 = vmatprep.subr.bf16.mxu0 %v4197
    %5424 = vmatpush1.bf16.msra.mxu0 %v4196
    %5425 = vmatprep.subr.bf16.mxu0 %v4201
    %5426 = vmatpush1.bf16.msra.mxu0 %v4200
    %5427 = vmatprep.subr.bf16.mxu0 %v4205
    %5428 = vmatpush1.bf16.msra.mxu0 %v4204
    %5429 = vmatprep.subr.bf16.mxu0 %v4209
    %5430 = vmatpush1.bf16.msra.mxu0 %v4208
    %5431 = vmatprep.subr.bf16.mxu0 %v4213
    %5432 = vmatpush1.bf16.msra.mxu0 %v4212
    %5433 = vmatprep.subr.bf16.mxu0 %v4217
    %5434 = vmatpush1.bf16.msra.mxu0 %v4216
    %5435 = vmatprep.subr.bf16.mxu0 %v4221
    %5436 = vmatpush1.bf16.msra.mxu0 %v4220
    %5437 = vmatprep.subr.bf16.mxu0 %v4225
    %5438 = vmatpush1.bf16.msra.mxu0 %v4224
    %5439 = vmatprep.subr.bf16.mxu0 %v4229
    %5440 = vmatpush1.bf16.msra.mxu0 %v4228
    %5441 = vmatprep.subr.bf16.mxu0 %v4233
    %5442 = vmatpush1.bf16.msra.mxu0 %v4232
    %5443 = vmatprep.subr.bf16.mxu0 %v4237
    %5444 = vmatpush1.bf16.msra.mxu0 %v4236
    %5445 = vmatprep.subr.bf16.mxu0 %v4241
    %5446 = vmatpush1.bf16.msra.mxu0 %v4240
    %5447 = vmatprep.mubr.bf16.mxu0 %v1780
    %5448 = vmatmul.mubr.bf16.gmra.mrb[0].mxu0 %v1761
    %v5449 = vpop.f32.mrb[0].mxu0
    %v5450 = vadd.f32 %v5409, %v5449
    %v5451 = vpop.f32.mrb[0].mxu0
    %v5452 = vadd.f32 %v5411, %v5451
    %v5453 = vpop.f32.mrb[0].mxu0
    %v5454 = vpop.f32.mrb[0].mxu0
    %5455 = vdwg.mxu0
    %5456 = vmatprep.subr.bf16.mxu0 %v4245
    %5457 = vmatpush1.bf16.msra.mxu0 %v4244
    %5458 = vmatprep.subr.bf16.mxu0 %v4249
    %5459 = vmatpush1.bf16.msra.mxu0 %v4248
    %5460 = vmatprep.subr.bf16.mxu0 %v4253
    %5461 = vmatpush1.bf16.msra.mxu0 %v4252
    %5462 = vmatprep.subr.bf16.mxu0 %v4257
    %5463 = vmatpush1.bf16.msra.mxu0 %v4256
    %5464 = vmatprep.subr.bf16.mxu0 %v4261
    %5465 = vmatpush1.bf16.msra.mxu0 %v4260
    %5466 = vmatprep.subr.bf16.mxu0 %v4265
    %5467 = vmatpush1.bf16.msra.mxu0 %v4264
    %5468 = vmatprep.subr.bf16.mxu0 %v4269
    %5469 = vmatpush1.bf16.msra.mxu0 %v4268
    %5470 = vmatprep.subr.bf16.mxu0 %v4273
    %5471 = vmatpush1.bf16.msra.mxu0 %v4272
    %5472 = vmatprep.subr.bf16.mxu0 %v4277
    %5473 = vmatpush1.bf16.msra.mxu0 %v4276
    %5474 = vmatprep.subr.bf16.mxu0 %v4281
    %5475 = vmatpush1.bf16.msra.mxu0 %v4280
    %5476 = vmatprep.subr.bf16.mxu0 %v4285
    %5477 = vmatpush1.bf16.msra.mxu0 %v4284
    %5478 = vmatprep.subr.bf16.mxu0 %v4289
    %5479 = vmatpush1.bf16.msra.mxu0 %v4288
    %5480 = vmatprep.subr.bf16.mxu0 %v4293
    %5481 = vmatpush1.bf16.msra.mxu0 %v4292
    %5482 = vmatprep.subr.bf16.mxu0 %v4297
    %5483 = vmatpush1.bf16.msra.mxu0 %v4296
    %5484 = vmatprep.subr.bf16.mxu0 %v4301
    %5485 = vmatpush1.bf16.msra.mxu0 %v4300
    %5486 = vmatprep.subr.bf16.mxu0 %v4305
    %5487 = vmatpush1.bf16.msra.mxu0 %v4304
    %5488 = vmatprep.mubr.bf16.mxu0 %v1783
    %5489 = vmatmul.mubr.bf16.gmra.mrb[0].mxu0 %v1762
    %v5490 = vpop.f32.mrb[0].mxu0
    %v5491 = vadd.f32 %v5450, %v5490
    %v5492 = vpop.f32.mrb[0].mxu0
    %v5493 = vadd.f32 %v5452, %v5492
    %v5494 = vpop.f32.mrb[0].mxu0
    %v5495 = vpop.f32.mrb[0].mxu0
    %5496 = vdwg.mxu0
    %5497 = vmatprep.subr.bf16.mxu0 %v4309
    %5498 = vmatpush1.bf16.msra.mxu0 %v4308
    %5499 = vmatprep.subr.bf16.mxu0 %v4313
    %5500 = vmatpush1.bf16.msra.mxu0 %v4312
    %5501 = vmatprep.subr.bf16.mxu0 %v4317
    %5502 = vmatpush1.bf16.msra.mxu0 %v4316
    %5503 = vmatprep.subr.bf16.mxu0 %v4321
    %5504 = vmatpush1.bf16.msra.mxu0 %v4320
    %5505 = vmatprep.subr.bf16.mxu0 %v4325
    %5506 = vmatpush1.bf16.msra.mxu0 %v4324
    %5507 = vmatprep.subr.bf16.mxu0 %v4329
    %5508 = vmatpush1.bf16.msra.mxu0 %v4328
    %5509 = vmatprep.subr.bf16.mxu0 %v4333
    %5510 = vmatpush1.bf16.msra.mxu0 %v4332
    %5511 = vmatprep.subr.bf16.mxu0 %v4337
    %5512 = vmatpush1.bf16.msra.mxu0 %v4336
    %5513 = vmatprep.subr.bf16.mxu0 %v4341
    %5514 = vmatpush1.bf16.msra.mxu0 %v4340
    %5515 = vmatprep.subr.bf16.mxu0 %v4345
    %5516 = vmatpush1.bf16.msra.mxu0 %v4344
    %5517 = vmatprep.subr.bf16.mxu0 %v4349
    %5518 = vmatpush1.bf16.msra.mxu0 %v4348
    %5519 = vmatprep.subr.bf16.mxu0 %v4353
    %5520 = vmatpush1.bf16.msra.mxu0 %v4352
    %5521 = vmatprep.subr.bf16.mxu0 %v4357
    %5522 = vmatpush1.bf16.msra.mxu0 %v4356
    %5523 = vmatprep.subr.bf16.mxu0 %v4361
    %5524 = vmatpush1.bf16.msra.mxu0 %v4360
    %5525 = vmatprep.subr.bf16.mxu0 %v4365
    %5526 = vmatpush1.bf16.msra.mxu0 %v4364
    %5527 = vmatprep.subr.bf16.mxu0 %v4369
    %5528 = vmatpush1.bf16.msra.mxu0 %v4368
    %5529 = vmatprep.mubr.bf16.mxu0 %v1786
    %5530 = vmatmul.mubr.bf16.gmra.mrb[0].mxu0 %v1763
    %v5531 = vpop.f32.mrb[0].mxu0
    %v5532 = vadd.f32 %v5491, %v5531
    %v5533 = vpop.f32.mrb[0].mxu0
    %v5534 = vadd.f32 %v5493, %v5533
    %v5535 = vpop.f32.mrb[0].mxu0
    %v5536 = vpop.f32.mrb[0].mxu0
    %5537 = vdwg.mxu0
    %v5538 = vmax.f32 %v5204, 0.0
    %v5539 = vmax.f32 %v5206, 0.0
    %v5540 = vmax.f32 %v5532, 0.0
    %v5541 = vmax.f32 %v5534, 0.0
    %v5542 = vpack.c.bf16 %v5538, %v5538
    %v5543 = vpack.c.bf16 %v5539, %v5539
    %v5544 = vpack.c.bf16 %v5540, %v5540
    %v5545 = vpack.c.bf16 %v5541, %v5541
    %v5546 = vld [vmem:[#allocation12] sm:$0xff]
    %v5547 = vld [vmem:[#allocation12 + $0x8] sm:$0xf]
    %v5548 = vld [vmem:[#allocation12 + $0xc] sm:$0xff]
    %v5549 = vld [vmem:[#allocation12 + $0x14] sm:$0xf]
    %v5550 = vld [vmem:[#allocation12 + $0x18] sm:$0xff]
    %v5551 = vld [vmem:[#allocation12 + $0x20] sm:$0xf]
    %v5552 = vld [vmem:[#allocation12 + $0x24] sm:$0xff]
    %v5553 = vld [vmem:[#allocation12 + $0x2c] sm:$0xf]
    %v5554 = vld [vmem:[#allocation12 + $0x30] sm:$0xff]
    %v5555 = vld [vmem:[#allocation12 + $0x38] sm:$0xf]
    %v5556 = vld [vmem:[#allocation12 + $0x3c] sm:$0xff]
    %v5557 = vld [vmem:[#allocation12 + $0x44] sm:$0xf]
    %v5558 = vld [vmem:[#allocation12 + $0x48] sm:$0xff]
    %v5559 = vld [vmem:[#allocation12 + $0x50] sm:$0xf]
    %v5560 = vld [vmem:[#allocation12 + $0x54] sm:$0xff]
    %v5561 = vld [vmem:[#allocation12 + $0x5c] sm:$0xf]
    %v5562 = vld [vmem:[#allocation12 + $0x60] sm:$0xff]
    %v5563 = vld [vmem:[#allocation12 + $0x68] sm:$0xf]
    %v5564 = vld [vmem:[#allocation12 + $0x6c] sm:$0xff]
    %v5565 = vld [vmem:[#allocation12 + $0x74] sm:$0xf]
    %v5566 = vld [vmem:[#allocation12 + $0x78] sm:$0xff]
    %v5567 = vld [vmem:[#allocation12 + $0x80] sm:$0xf]
    %v5568 = vld [vmem:[#allocation12 + $0x84] sm:$0xff]
    %v5569 = vld [vmem:[#allocation12 + $0x8c] sm:$0xf]
    %v5570 = vld [vmem:[#allocation12 + $0x90] sm:$0xff]
    %v5571 = vld [vmem:[#allocation12 + $0x98] sm:$0xf]
    %v5572 = vld [vmem:[#allocation12 + $0x9c] sm:$0xff]
    %v5573 = vld [vmem:[#allocation12 + $0xa4] sm:$0xf]
    %v5574 = vld [vmem:[#allocation12 + $0xa8] sm:$0xff]
    %v5575 = vld [vmem:[#allocation12 + $0xb0] sm:$0xf]
    %v5576 = vld [vmem:[#allocation12 + $0xb4] sm:$0xff]
    %v5577 = vld [vmem:[#allocation12 + $0xbc] sm:$0xf]
    %v5578 = vld [vmem:[#allocation12 + $0xc0] sm:$0xff]
    %v5579 = vld [vmem:[#allocation12 + $0xc8] sm:$0xf]
    %v5580 = vld [vmem:[#allocation12 + $0xcc] sm:$0xff]
    %v5581 = vld [vmem:[#allocation12 + $0xd4] sm:$0xf]
    %v5582 = vld [vmem:[#allocation12 + $0xd8] sm:$0xff]
    %v5583 = vld [vmem:[#allocation12 + $0xe0] sm:$0xf]
    %v5584 = vld [vmem:[#allocation12 + $0xe4] sm:$0xff]
    %v5585 = vld [vmem:[#allocation12 + $0xec] sm:$0xf]
    %v5586 = vld [vmem:[#allocation12 + $0xf0] sm:$0xff]
    %v5587 = vld [vmem:[#allocation12 + $0xf8] sm:$0xf]
    %v5588 = vld [vmem:[#allocation12 + $0xfc] sm:$0xff]
    %v5589 = vld [vmem:[#allocation12 + $0x104] sm:$0xf]
    %v5590 = vld [vmem:[#allocation12 + $0x108] sm:$0xff]
    %v5591 = vld [vmem:[#allocation12 + $0x110] sm:$0xf]
    %v5592 = vld [vmem:[#allocation12 + $0x114] sm:$0xff]
    %v5593 = vld [vmem:[#allocation12 + $0x11c] sm:$0xf]
    %v5594 = vld [vmem:[#allocation12 + $0x120] sm:$0xff]
    %v5595 = vld [vmem:[#allocation12 + $0x128] sm:$0xf]
    %v5596 = vld [vmem:[#allocation12 + $0x12c] sm:$0xff]
    %v5597 = vld [vmem:[#allocation12 + $0x134] sm:$0xf]
    %v5598 = vld [vmem:[#allocation12 + $0x138] sm:$0xff]
    %v5599 = vld [vmem:[#allocation12 + $0x140] sm:$0xf]
    %v5600 = vld [vmem:[#allocation12 + $0x144] sm:$0xff]
    %v5601 = vld [vmem:[#allocation12 + $0x14c] sm:$0xf]
    %v5602 = vld [vmem:[#allocation12 + $0x150] sm:$0xff]
    %v5603 = vld [vmem:[#allocation12 + $0x158] sm:$0xf]
    %v5604 = vld [vmem:[#allocation12 + $0x15c] sm:$0xff]
    %v5605 = vld [vmem:[#allocation12 + $0x164] sm:$0xf]
    %v5606 = vld [vmem:[#allocation12 + $0x168] sm:$0xff]
    %v5607 = vld [vmem:[#allocation12 + $0x170] sm:$0xf]
    %v5608 = vld [vmem:[#allocation12 + $0x174] sm:$0xff]
    %v5609 = vld [vmem:[#allocation12 + $0x17c] sm:$0xf]
    %v5610 = vld [vmem:[#allocation12 + $0x180] sm:$0xff]
    %v5611 = vld [vmem:[#allocation12 + $0x188] sm:$0xf]
    %v5612 = vld [vmem:[#allocation12 + $0x18c] sm:$0xff]
    %v5613 = vld [vmem:[#allocation12 + $0x194] sm:$0xf]
    %v5614 = vld [vmem:[#allocation12 + $0x198] sm:$0xff]
    %v5615 = vld [vmem:[#allocation12 + $0x1a0] sm:$0xf]
    %v5616 = vld [vmem:[#allocation12 + $0x1a4] sm:$0xff]
    %v5617 = vld [vmem:[#allocation12 + $0x1ac] sm:$0xf]
    %v5618 = vld [vmem:[#allocation12 + $0x1b0] sm:$0xff]
    %v5619 = vld [vmem:[#allocation12 + $0x1b8] sm:$0xf]
    %v5620 = vld [vmem:[#allocation12 + $0x1bc] sm:$0xff]
    %v5621 = vld [vmem:[#allocation12 + $0x1c4] sm:$0xf]
    %v5622 = vld [vmem:[#allocation12 + $0x1c8] sm:$0xff]
    %v5623 = vld [vmem:[#allocation12 + $0x1d0] sm:$0xf]
    %v5624 = vld [vmem:[#allocation12 + $0x1d4] sm:$0xff]
    %v5625 = vld [vmem:[#allocation12 + $0x1dc] sm:$0xf]
    %v5626 = vld [vmem:[#allocation12 + $0x1e0] sm:$0xff]
    %v5627 = vld [vmem:[#allocation12 + $0x1e8] sm:$0xf]
    %v5628 = vld [vmem:[#allocation12 + $0x1ec] sm:$0xff]
    %v5629 = vld [vmem:[#allocation12 + $0x1f4] sm:$0xf]
    %v5630 = vld [vmem:[#allocation12 + $0x1f8] sm:$0xff]
    %v5631 = vld [vmem:[#allocation12 + $0x200] sm:$0xf]
    %v5632 = vld [vmem:[#allocation12 + $0x204] sm:$0xff]
    %v5633 = vld [vmem:[#allocation12 + $0x20c] sm:$0xf]
    %v5634 = vld [vmem:[#allocation12 + $0x210] sm:$0xff]
    %v5635 = vld [vmem:[#allocation12 + $0x218] sm:$0xf]
    %v5636 = vld [vmem:[#allocation12 + $0x21c] sm:$0xff]
    %v5637 = vld [vmem:[#allocation12 + $0x224] sm:$0xf]
    %v5638 = vld [vmem:[#allocation12 + $0x228] sm:$0xff]
    %v5639 = vld [vmem:[#allocation12 + $0x230] sm:$0xf]
    %v5640 = vld [vmem:[#allocation12 + $0x234] sm:$0xff]
    %v5641 = vld [vmem:[#allocation12 + $0x23c] sm:$0xf]
    %v5642 = vld [vmem:[#allocation12 + $0x240] sm:$0xff]
    %v5643 = vld [vmem:[#allocation12 + $0x248] sm:$0xf]
    %v5644 = vld [vmem:[#allocation12 + $0x24c] sm:$0xff]
    %v5645 = vld [vmem:[#allocation12 + $0x254] sm:$0xf]
    %v5646 = vld [vmem:[#allocation12 + $0x258] sm:$0xff]
    %v5647 = vld [vmem:[#allocation12 + $0x260] sm:$0xf]
    %v5648 = vld [vmem:[#allocation12 + $0x264] sm:$0xff]
    %v5649 = vld [vmem:[#allocation12 + $0x26c] sm:$0xf]
    %v5650 = vld [vmem:[#allocation12 + $0x270] sm:$0xff]
    %v5651 = vld [vmem:[#allocation12 + $0x278] sm:$0xf]
    %v5652 = vld [vmem:[#allocation12 + $0x27c] sm:$0xff]
    %v5653 = vld [vmem:[#allocation12 + $0x284] sm:$0xf]
    %v5654 = vld [vmem:[#allocation12 + $0x288] sm:$0xff]
    %v5655 = vld [vmem:[#allocation12 + $0x290] sm:$0xf]
    %v5656 = vld [vmem:[#allocation12 + $0x294] sm:$0xff]
    %v5657 = vld [vmem:[#allocation12 + $0x29c] sm:$0xf]
    %v5658 = vld [vmem:[#allocation12 + $0x2a0] sm:$0xff]
    %v5659 = vld [vmem:[#allocation12 + $0x2a8] sm:$0xf]
    %v5660 = vld [vmem:[#allocation12 + $0x2ac] sm:$0xff]
    %v5661 = vld [vmem:[#allocation12 + $0x2b4] sm:$0xf]
    %v5662 = vld [vmem:[#allocation12 + $0x2b8] sm:$0xff]
    %v5663 = vld [vmem:[#allocation12 + $0x2c0] sm:$0xf]
    %v5664 = vld [vmem:[#allocation12 + $0x2c4] sm:$0xff]
    %v5665 = vld [vmem:[#allocation12 + $0x2cc] sm:$0xf]
    %v5666 = vld [vmem:[#allocation12 + $0x2d0] sm:$0xff]
    %v5667 = vld [vmem:[#allocation12 + $0x2d8] sm:$0xf]
    %v5668 = vld [vmem:[#allocation12 + $0x2dc] sm:$0xff]
    %v5669 = vld [vmem:[#allocation12 + $0x2e4] sm:$0xf]
    %v5670 = vld [vmem:[#allocation12 + $0x2e8] sm:$0xff]
    %v5671 = vld [vmem:[#allocation12 + $0x2f0] sm:$0xf]
    %v5672 = vld [vmem:[#allocation12 + $0x2f4] sm:$0xff]
    %v5673 = vld [vmem:[#allocation12 + $0x2fc] sm:$0xf]
    %v5674 = vld [vmem:[#allocation13] sm:$0x7]
    %v5676 = vlaneseq
    %v5677 = vshrl.u32 %v5676, 7
    %v5678 = vsub.s32 0, %v5677
    %v5679 = vrot.slane %v5674, %v5678
    %v5680 = vlaneseq
    %v5681 = vshrl.u32 %v5680, 7
    %v5682 = vsub.s32 1, %v5681
    %v5683 = vrot.slane %v5674, %v5682
    %v5684 = vlaneseq
    %v5685 = vshrl.u32 %v5684, 7
    %v5686 = vsub.s32 2, %v5685
    %v5687 = vrot.slane %v5674, %v5686
    %v5819 = vunpack.c.l.b16 %v5546
    %v5820 = vunpack.c.h.b16 %v5546
    %v5821 = vunpack.c.l.b16 %v5547
    %v5822 = vunpack.c.l.b16 %v5548
    %v5823 = vunpack.c.h.b16 %v5548
    %v5824 = vunpack.c.l.b16 %v5549
    %v5825 = vunpack.c.l.b16 %v5550
    %v5826 = vunpack.c.h.b16 %v5550
    %v5827 = vunpack.c.l.b16 %v5551
    %v5828 = vunpack.c.l.b16 %v5552
    %v5829 = vunpack.c.h.b16 %v5552
    %v5830 = vunpack.c.l.b16 %v5553
    %v5831 = vunpack.c.l.b16 %v5554
    %v5832 = vunpack.c.h.b16 %v5554
    %v5833 = vunpack.c.l.b16 %v5555
    %v5834 = vunpack.c.l.b16 %v5556
    %v5835 = vunpack.c.h.b16 %v5556
    %v5836 = vunpack.c.l.b16 %v5557
    %v5837 = vunpack.c.l.b16 %v5558
    %v5838 = vunpack.c.h.b16 %v5558
    %v5839 = vunpack.c.l.b16 %v5559
    %v5840 = vunpack.c.l.b16 %v5560
    %v5841 = vunpack.c.h.b16 %v5560
    %v5842 = vunpack.c.l.b16 %v5561
    %v5843 = vunpack.c.l.b16 %v5562
    %v5844 = vunpack.c.h.b16 %v5562
    %v5845 = vunpack.c.l.b16 %v5563
    %v5846 = vunpack.c.l.b16 %v5564
    %v5847 = vunpack.c.h.b16 %v5564
    %v5848 = vunpack.c.l.b16 %v5565
    %v5849 = vunpack.c.l.b16 %v5566
    %v5850 = vunpack.c.h.b16 %v5566
    %v5851 = vunpack.c.l.b16 %v5567
    %v5852 = vunpack.c.l.b16 %v5568
    %v5853 = vunpack.c.h.b16 %v5568
    %v5854 = vunpack.c.l.b16 %v5569
    %v5855 = vunpack.c.l.b16 %v5570
    %v5856 = vunpack.c.h.b16 %v5570
    %v5857 = vunpack.c.l.b16 %v5571
    %v5858 = vunpack.c.l.b16 %v5572
    %v5859 = vunpack.c.h.b16 %v5572
    %v5860 = vunpack.c.l.b16 %v5573
    %v5861 = vunpack.c.l.b16 %v5574
    %v5862 = vunpack.c.h.b16 %v5574
    %v5863 = vunpack.c.l.b16 %v5575
    %v5864 = vunpack.c.l.b16 %v5576
    %v5865 = vunpack.c.h.b16 %v5576
    %v5866 = vunpack.c.l.b16 %v5577
    %v5867 = vunpack.c.l.b16 %v5578
    %v5868 = vunpack.c.h.b16 %v5578
    %v5869 = vunpack.c.l.b16 %v5579
    %v5870 = vunpack.c.l.b16 %v5580
    %v5871 = vunpack.c.h.b16 %v5580
    %v5872 = vunpack.c.l.b16 %v5581
    %v5873 = vunpack.c.l.b16 %v5582
    %v5874 = vunpack.c.h.b16 %v5582
    %v5875 = vunpack.c.l.b16 %v5583
    %v5876 = vunpack.c.l.b16 %v5584
    %v5877 = vunpack.c.h.b16 %v5584
    %v5878 = vunpack.c.l.b16 %v5585
    %v5879 = vunpack.c.l.b16 %v5586
    %v5880 = vunpack.c.h.b16 %v5586
    %v5881 = vunpack.c.l.b16 %v5587
    %v5882 = vunpack.c.l.b16 %v5588
    %v5883 = vunpack.c.h.b16 %v5588
    %v5884 = vunpack.c.l.b16 %v5589
    %v5885 = vunpack.c.l.b16 %v5590
    %v5886 = vunpack.c.h.b16 %v5590
    %v5887 = vunpack.c.l.b16 %v5591
    %v5888 = vunpack.c.l.b16 %v5592
    %v5889 = vunpack.c.h.b16 %v5592
    %v5890 = vunpack.c.l.b16 %v5593
    %v5891 = vunpack.c.l.b16 %v5594
    %v5892 = vunpack.c.h.b16 %v5594
    %v5893 = vunpack.c.l.b16 %v5595
    %v5894 = vunpack.c.l.b16 %v5596
    %v5895 = vunpack.c.h.b16 %v5596
    %v5896 = vunpack.c.l.b16 %v5597
    %v5897 = vunpack.c.l.b16 %v5598
    %v5898 = vunpack.c.h.b16 %v5598
    %v5899 = vunpack.c.l.b16 %v5599
    %v5900 = vunpack.c.l.b16 %v5600
    %v5901 = vunpack.c.h.b16 %v5600
    %v5902 = vunpack.c.l.b16 %v5601
    %v5903 = vunpack.c.l.b16 %v5602
    %v5904 = vunpack.c.h.b16 %v5602
    %v5905 = vunpack.c.l.b16 %v5603
    %v5906 = vunpack.c.l.b16 %v5604
    %v5907 = vunpack.c.h.b16 %v5604
    %v5908 = vunpack.c.l.b16 %v5605
    %v5909 = vunpack.c.l.b16 %v5606
    %v5910 = vunpack.c.h.b16 %v5606
    %v5911 = vunpack.c.l.b16 %v5607
    %v5912 = vunpack.c.l.b16 %v5608
    %v5913 = vunpack.c.h.b16 %v5608
    %v5914 = vunpack.c.l.b16 %v5609
    %v5915 = vunpack.c.l.b16 %v5610
    %v5916 = vunpack.c.h.b16 %v5610
    %v5917 = vunpack.c.l.b16 %v5611
    %v5918 = vunpack.c.l.b16 %v5612
    %v5919 = vunpack.c.h.b16 %v5612
    %v5920 = vunpack.c.l.b16 %v5613
    %v5921 = vunpack.c.l.b16 %v5614
    %v5922 = vunpack.c.h.b16 %v5614
    %v5923 = vunpack.c.l.b16 %v5615
    %v5924 = vunpack.c.l.b16 %v5616
    %v5925 = vunpack.c.h.b16 %v5616
    %v5926 = vunpack.c.l.b16 %v5617
    %v5927 = vunpack.c.l.b16 %v5618
    %v5928 = vunpack.c.h.b16 %v5618
    %v5929 = vunpack.c.l.b16 %v5619
    %v5930 = vunpack.c.l.b16 %v5620
    %v5931 = vunpack.c.h.b16 %v5620
    %v5932 = vunpack.c.l.b16 %v5621
    %v5933 = vunpack.c.l.b16 %v5622
    %v5934 = vunpack.c.h.b16 %v5622
    %v5935 = vunpack.c.l.b16 %v5623
    %v5936 = vunpack.c.l.b16 %v5624
    %v5937 = vunpack.c.h.b16 %v5624
    %v5938 = vunpack.c.l.b16 %v5625
    %v5939 = vunpack.c.l.b16 %v5626
    %v5940 = vunpack.c.h.b16 %v5626
    %v5941 = vunpack.c.l.b16 %v5627
    %v5942 = vunpack.c.l.b16 %v5628
    %v5943 = vunpack.c.h.b16 %v5628
    %v5944 = vunpack.c.l.b16 %v5629
    %v5945 = vunpack.c.l.b16 %v5630
    %v5946 = vunpack.c.h.b16 %v5630
    %v5947 = vunpack.c.l.b16 %v5631
    %v5948 = vunpack.c.l.b16 %v5632
    %v5949 = vunpack.c.h.b16 %v5632
    %v5950 = vunpack.c.l.b16 %v5633
    %v5951 = vunpack.c.l.b16 %v5634
    %v5952 = vunpack.c.h.b16 %v5634
    %v5953 = vunpack.c.l.b16 %v5635
    %v5954 = vunpack.c.l.b16 %v5636
    %v5955 = vunpack.c.h.b16 %v5636
    %v5956 = vunpack.c.l.b16 %v5637
    %v5957 = vunpack.c.l.b16 %v5638
    %v5958 = vunpack.c.h.b16 %v5638
    %v5959 = vunpack.c.l.b16 %v5639
    %v5960 = vunpack.c.l.b16 %v5640
    %v5961 = vunpack.c.h.b16 %v5640
    %v5962 = vunpack.c.l.b16 %v5641
    %v5963 = vunpack.c.l.b16 %v5642
    %v5964 = vunpack.c.h.b16 %v5642
    %v5965 = vunpack.c.l.b16 %v5643
    %v5966 = vunpack.c.l.b16 %v5644
    %v5967 = vunpack.c.h.b16 %v5644
    %v5968 = vunpack.c.l.b16 %v5645
    %v5969 = vunpack.c.l.b16 %v5646
    %v5970 = vunpack.c.h.b16 %v5646
    %v5971 = vunpack.c.l.b16 %v5647
    %v5972 = vunpack.c.l.b16 %v5648
    %v5973 = vunpack.c.h.b16 %v5648
    %v5974 = vunpack.c.l.b16 %v5649
    %v5975 = vunpack.c.l.b16 %v5650
    %v5976 = vunpack.c.h.b16 %v5650
    %v5977 = vunpack.c.l.b16 %v5651
    %v5978 = vunpack.c.l.b16 %v5652
    %v5979 = vunpack.c.h.b16 %v5652
    %v5980 = vunpack.c.l.b16 %v5653
    %v5981 = vunpack.c.l.b16 %v5654
    %v5982 = vunpack.c.h.b16 %v5654
    %v5983 = vunpack.c.l.b16 %v5655
    %v5984 = vunpack.c.l.b16 %v5656
    %v5985 = vunpack.c.h.b16 %v5656
    %v5986 = vunpack.c.l.b16 %v5657
    %v5987 = vunpack.c.l.b16 %v5658
    %v5988 = vunpack.c.h.b16 %v5658
    %v5989 = vunpack.c.l.b16 %v5659
    %v5990 = vunpack.c.l.b16 %v5660
    %v5991 = vunpack.c.h.b16 %v5660
    %v5992 = vunpack.c.l.b16 %v5661
    %v5993 = vunpack.c.l.b16 %v5662
    %v5994 = vunpack.c.h.b16 %v5662
    %v5995 = vunpack.c.l.b16 %v5663
    %v5996 = vunpack.c.l.b16 %v5664
    %v5997 = vunpack.c.h.b16 %v5664
    %v5998 = vunpack.c.l.b16 %v5665
    %v5999 = vunpack.c.l.b16 %v5666
    %v6000 = vunpack.c.h.b16 %v5666
    %v6001 = vunpack.c.l.b16 %v5667
    %v6002 = vunpack.c.l.b16 %v5668
    %v6003 = vunpack.c.h.b16 %v5668
    %v6004 = vunpack.c.l.b16 %v5669
    %v6005 = vunpack.c.l.b16 %v5670
    %v6006 = vunpack.c.h.b16 %v5670
    %v6007 = vunpack.c.l.b16 %v5671
    %v6008 = vunpack.c.l.b16 %v5672
    %v6009 = vunpack.c.h.b16 %v5672
    %v6010 = vunpack.c.l.b16 %v5673
    %v6011 = vpack.c.b16 %v5822, %v5819
    %v6012 = vpack.c.b16 %v5823, %v5820
    %v6013 = vpack.c.b16 %v5824, %v5821
    %v6014 = vpack.c.b16 %v5828, %v5825
    %v6015 = vpack.c.b16 %v5829, %v5826
    %v6016 = vpack.c.b16 %v5830, %v5827
    %v6017 = vpack.c.b16 %v5834, %v5831
    %v6018 = vpack.c.b16 %v5835, %v5832
    %v6019 = vpack.c.b16 %v5836, %v5833
    %v6020 = vpack.c.b16 %v5840, %v5837
    %v6021 = vpack.c.b16 %v5841, %v5838
    %v6022 = vpack.c.b16 %v5842, %v5839
    %v6023 = vpack.c.b16 %v5846, %v5843
    %v6024 = vpack.c.b16 %v5847, %v5844
    %v6025 = vpack.c.b16 %v5848, %v5845
    %v6026 = vpack.c.b16 %v5852, %v5849
    %v6027 = vpack.c.b16 %v5853, %v5850
    %v6028 = vpack.c.b16 %v5854, %v5851
    %v6029 = vpack.c.b16 %v5858, %v5855
    %v6030 = vpack.c.b16 %v5859, %v5856
    %v6031 = vpack.c.b16 %v5860, %v5857
    %v6032 = vpack.c.b16 %v5864, %v5861
    %v6033 = vpack.c.b16 %v5865, %v5862
    %v6034 = vpack.c.b16 %v5866, %v5863
    %v6035 = vpack.c.b16 %v5870, %v5867
    %v6036 = vpack.c.b16 %v5871, %v5868
    %v6037 = vpack.c.b16 %v5872, %v5869
    %v6038 = vpack.c.b16 %v5876, %v5873
    %v6039 = vpack.c.b16 %v5877, %v5874
    %v6040 = vpack.c.b16 %v5878, %v5875
    %v6041 = vpack.c.b16 %v5882, %v5879
    %v6042 = vpack.c.b16 %v5883, %v5880
    %v6043 = vpack.c.b16 %v5884, %v5881
    %v6044 = vpack.c.b16 %v5888, %v5885
    %v6045 = vpack.c.b16 %v5889, %v5886
    %v6046 = vpack.c.b16 %v5890, %v5887
    %v6047 = vpack.c.b16 %v5894, %v5891
    %v6048 = vpack.c.b16 %v5895, %v5892
    %v6049 = vpack.c.b16 %v5896, %v5893
    %v6050 = vpack.c.b16 %v5900, %v5897
    %v6051 = vpack.c.b16 %v5901, %v5898
    %v6052 = vpack.c.b16 %v5902, %v5899
    %v6053 = vpack.c.b16 %v5906, %v5903
    %v6054 = vpack.c.b16 %v5907, %v5904
    %v6055 = vpack.c.b16 %v5908, %v5905
    %v6056 = vpack.c.b16 %v5912, %v5909
    %v6057 = vpack.c.b16 %v5913, %v5910
    %v6058 = vpack.c.b16 %v5914, %v5911
    %v6059 = vpack.c.b16 %v5918, %v5915
    %v6060 = vpack.c.b16 %v5919, %v5916
    %v6061 = vpack.c.b16 %v5920, %v5917
    %v6062 = vpack.c.b16 %v5924, %v5921
    %v6063 = vpack.c.b16 %v5925, %v5922
    %v6064 = vpack.c.b16 %v5926, %v5923
    %v6065 = vpack.c.b16 %v5930, %v5927
    %v6066 = vpack.c.b16 %v5931, %v5928
    %v6067 = vpack.c.b16 %v5932, %v5929
    %v6068 = vpack.c.b16 %v5936, %v5933
    %v6069 = vpack.c.b16 %v5937, %v5934
    %v6070 = vpack.c.b16 %v5938, %v5935
    %v6071 = vpack.c.b16 %v5942, %v5939
    %v6072 = vpack.c.b16 %v5943, %v5940
    %v6073 = vpack.c.b16 %v5944, %v5941
    %v6074 = vpack.c.b16 %v5948, %v5945
    %v6075 = vpack.c.b16 %v5949, %v5946
    %v6076 = vpack.c.b16 %v5950, %v5947
    %v6077 = vpack.c.b16 %v5954, %v5951
    %v6078 = vpack.c.b16 %v5955, %v5952
    %v6079 = vpack.c.b16 %v5956, %v5953
    %v6080 = vpack.c.b16 %v5960, %v5957
    %v6081 = vpack.c.b16 %v5961, %v5958
    %v6082 = vpack.c.b16 %v5962, %v5959
    %v6083 = vpack.c.b16 %v5966, %v5963
    %v6084 = vpack.c.b16 %v5967, %v5964
    %v6085 = vpack.c.b16 %v5968, %v5965
    %v6086 = vpack.c.b16 %v5972, %v5969
    %v6087 = vpack.c.b16 %v5973, %v5970
    %v6088 = vpack.c.b16 %v5974, %v5971
    %v6089 = vpack.c.b16 %v5978, %v5975
    %v6090 = vpack.c.b16 %v5979, %v5976
    %v6091 = vpack.c.b16 %v5980, %v5977
    %v6092 = vpack.c.b16 %v5984, %v5981
    %v6093 = vpack.c.b16 %v5985, %v5982
    %v6094 = vpack.c.b16 %v5986, %v5983
    %v6095 = vpack.c.b16 %v5990, %v5987
    %v6096 = vpack.c.b16 %v5991, %v5988
    %v6097 = vpack.c.b16 %v5992, %v5989
    %v6098 = vpack.c.b16 %v5996, %v5993
    %v6099 = vpack.c.b16 %v5997, %v5994
    %v6100 = vpack.c.b16 %v5998, %v5995
    %v6101 = vpack.c.b16 %v6002, %v5999
    %v6102 = vpack.c.b16 %v6003, %v6000
    %v6103 = vpack.c.b16 %v6004, %v6001
    %v6104 = vpack.c.b16 %v6008, %v6005
    %v6105 = vpack.c.b16 %v6009, %v6006
    %v6106 = vpack.c.b16 %v6010, %v6007
    %6203 = vmatprep.subr.bf16.mxu0 %v6012
    %6204 = vmatpush1.bf16.msra.mxu0 %v6011
    %6205 = vmatprep.subr.bf16.mxu0 %v6015
    %6206 = vmatpush1.bf16.msra.mxu0 %v6014
    %6207 = vmatprep.subr.bf16.mxu0 %v6018
    %6208 = vmatpush1.bf16.msra.mxu0 %v6017
    %6209 = vmatprep.subr.bf16.mxu0 %v6021
    %6210 = vmatpush1.bf16.msra.mxu0 %v6020
    %6211 = vmatprep.subr.bf16.mxu0 %v6024
    %6212 = vmatpush1.bf16.msra.mxu0 %v6023
    %6213 = vmatprep.subr.bf16.mxu0 %v6027
    %6214 = vmatpush1.bf16.msra.mxu0 %v6026
    %6215 = vmatprep.subr.bf16.mxu0 %v6030
    %6216 = vmatpush1.bf16.msra.mxu0 %v6029
    %6217 = vmatprep.subr.bf16.mxu0 %v6033
    %6218 = vmatpush1.bf16.msra.mxu0 %v6032
    %6219 = vmatprep.subr.bf16.mxu0 %v6036
    %6220 = vmatpush1.bf16.msra.mxu0 %v6035
    %6221 = vmatprep.subr.bf16.mxu0 %v6039
    %6222 = vmatpush1.bf16.msra.mxu0 %v6038
    %6223 = vmatprep.subr.bf16.mxu0 %v6042
    %6224 = vmatpush1.bf16.msra.mxu0 %v6041
    %6225 = vmatprep.subr.bf16.mxu0 %v6045
    %6226 = vmatpush1.bf16.msra.mxu0 %v6044
    %6227 = vmatprep.subr.bf16.mxu0 %v6048
    %6228 = vmatpush1.bf16.msra.mxu0 %v6047
    %6229 = vmatprep.subr.bf16.mxu0 %v6051
    %6230 = vmatpush1.bf16.msra.mxu0 %v6050
    %6231 = vmatprep.subr.bf16.mxu0 %v6054
    %6232 = vmatpush1.bf16.msra.mxu0 %v6053
    %6233 = vmatprep.subr.bf16.mxu0 %v6057
    %6234 = vmatpush1.bf16.msra.mxu0 %v6056
    %6235 = vmatprep.mubr.bf16.mxu0 %v5543
    %6236 = vmatmul.mubr.bf16.gmra.mrb[0].mxu0 %v5542
    %v6237 = vpop.f32.mrb[0].mxu0
    %v6238 = vadd.f32 %v5679, %v6237
    %v6239 = vpop.f32.mrb[0].mxu0
    %v6240 = vadd.f32 %v5683, %v6239
    %v6241 = vpop.f32.mrb[0].mxu0
    %v6242 = vpop.f32.mrb[0].mxu0
    %6243 = vdwg.mxu0
    %6244 = vmatprep.subr.bf16.mxu0 %v6060
    %6245 = vmatpush1.bf16.msra.mxu0 %v6059
    %6246 = vmatprep.subr.bf16.mxu0 %v6063
    %6247 = vmatpush1.bf16.msra.mxu0 %v6062
    %6248 = vmatprep.subr.bf16.mxu0 %v6066
    %6249 = vmatpush1.bf16.msra.mxu0 %v6065
    %6250 = vmatprep.subr.bf16.mxu0 %v6069
    %6251 = vmatpush1.bf16.msra.mxu0 %v6068
    %6252 = vmatprep.subr.bf16.mxu0 %v6072
    %6253 = vmatpush1.bf16.msra.mxu0 %v6071
    %6254 = vmatprep.subr.bf16.mxu0 %v6075
    %6255 = vmatpush1.bf16.msra.mxu0 %v6074
    %6256 = vmatprep.subr.bf16.mxu0 %v6078
    %6257 = vmatpush1.bf16.msra.mxu0 %v6077
    %6258 = vmatprep.subr.bf16.mxu0 %v6081
    %6259 = vmatpush1.bf16.msra.mxu0 %v6080
    %6260 = vmatprep.subr.bf16.mxu0 %v6084
    %6261 = vmatpush1.bf16.msra.mxu0 %v6083
    %6262 = vmatprep.subr.bf16.mxu0 %v6087
    %6263 = vmatpush1.bf16.msra.mxu0 %v6086
    %6264 = vmatprep.subr.bf16.mxu0 %v6090
    %6265 = vmatpush1.bf16.msra.mxu0 %v6089
    %6266 = vmatprep.subr.bf16.mxu0 %v6093
    %6267 = vmatpush1.bf16.msra.mxu0 %v6092
    %6268 = vmatprep.subr.bf16.mxu0 %v6096
    %6269 = vmatpush1.bf16.msra.mxu0 %v6095
    %6270 = vmatprep.subr.bf16.mxu0 %v6099
    %6271 = vmatpush1.bf16.msra.mxu0 %v6098
    %6272 = vmatprep.subr.bf16.mxu0 %v6102
    %6273 = vmatpush1.bf16.msra.mxu0 %v6101
    %6274 = vmatprep.subr.bf16.mxu0 %v6105
    %6275 = vmatpush1.bf16.msra.mxu0 %v6104
    %6276 = vmatprep.mubr.bf16.mxu0 %v5545
    %6277 = vmatmul.mubr.bf16.gmra.mrb[0].mxu0 %v5544
    %v6278 = vpop.f32.mrb[0].mxu0
    %v6279 = vadd.f32 %v6238, %v6278
    %v6280 = vpop.f32.mrb[0].mxu0
    %v6281 = vadd.f32 %v6240, %v6280
    %v6282 = vpop.f32.mrb[0].mxu0
    %v6283 = vpop.f32.mrb[0].mxu0
    %6284 = vdwg.mxu0
    %6285 = vmatprep.subr.bf16.mxu0 0
    %6286 = vmatpush1.bf16.msra.mxu0 %v6013
    %6287 = vmatprep.subr.bf16.mxu0 0
    %6288 = vmatpush1.bf16.msra.mxu0 %v6016
    %6289 = vmatprep.subr.bf16.mxu0 0
    %6290 = vmatpush1.bf16.msra.mxu0 %v6019
    %6291 = vmatprep.subr.bf16.mxu0 0
    %6292 = vmatpush1.bf16.msra.mxu0 %v6022
    %6293 = vmatprep.subr.bf16.mxu0 0
    %6294 = vmatpush1.bf16.msra.mxu0 %v6025
    %6295 = vmatprep.subr.bf16.mxu0 0
    %6296 = vmatpush1.bf16.msra.mxu0 %v6028
    %6297 = vmatprep.subr.bf16.mxu0 0
    %6298 = vmatpush1.bf16.msra.mxu0 %v6031
    %6299 = vmatprep.subr.bf16.mxu0 0
    %6300 = vmatpush1.bf16.msra.mxu0 %v6034
    %6301 = vmatprep.subr.bf16.mxu0 0
    %6302 = vmatpush1.bf16.msra.mxu0 %v6037
    %6303 = vmatprep.subr.bf16.mxu0 0
    %6304 = vmatpush1.bf16.msra.mxu0 %v6040
    %6305 = vmatprep.subr.bf16.mxu0 0
    %6306 = vmatpush1.bf16.msra.mxu0 %v6043
    %6307 = vmatprep.subr.bf16.mxu0 0
    %6308 = vmatpush1.bf16.msra.mxu0 %v6046
    %6309 = vmatprep.subr.bf16.mxu0 0
    %6310 = vmatpush1.bf16.msra.mxu0 %v6049
    %6311 = vmatprep.subr.bf16.mxu0 0
    %6312 = vmatpush1.bf16.msra.mxu0 %v6052
    %6313 = vmatprep.subr.bf16.mxu0 0
    %6314 = vmatpush1.bf16.msra.mxu0 %v6055
    %6315 = vmatprep.subr.bf16.mxu0 0
    %6316 = vmatpush1.bf16.msra.mxu0 %v6058
    %6317 = vmatprep.mubr.bf16.mxu0 %v5543
    %6318 = vmatmul.mubr.bf16.gmra.mrb[0].mxu0 %v5542
    %v6319 = vpop.f32.mrb[0].mxu0
    %v6320 = vadd.f32 %v5687, %v6319
    %v6321 = vpop.f32.mrb[0].mxu0
    %v6322 = vpop.f32.mrb[0].mxu0
    %v6323 = vpop.f32.mrb[0].mxu0
    %6324 = vdwg.mxu0
    %6325 = vmatprep.subr.bf16.mxu0 0
    %6326 = vmatpush1.bf16.msra.mxu0 %v6061
    %6327 = vmatprep.subr.bf16.mxu0 0
    %6328 = vmatpush1.bf16.msra.mxu0 %v6064
    %6329 = vmatprep.subr.bf16.mxu0 0
    %6330 = vmatpush1.bf16.msra.mxu0 %v6067
    %6331 = vmatprep.subr.bf16.mxu0 0
    %6332 = vmatpush1.bf16.msra.mxu0 %v6070
    %6333 = vmatprep.subr.bf16.mxu0 0
    %6334 = vmatpush1.bf16.msra.mxu0 %v6073
    %6335 = vmatprep.subr.bf16.mxu0 0
    %6336 = vmatpush1.bf16.msra.mxu0 %v6076
    %6337 = vmatprep.subr.bf16.mxu0 0
    %6338 = vmatpush1.bf16.msra.mxu0 %v6079
    %6339 = vmatprep.subr.bf16.mxu0 0
    %6340 = vmatpush1.bf16.msra.mxu0 %v6082
    %6341 = vmatprep.subr.bf16.mxu0 0
    %6342 = vmatpush1.bf16.msra.mxu0 %v6085
    %6343 = vmatprep.subr.bf16.mxu0 0
    %6344 = vmatpush1.bf16.msra.mxu0 %v6088
    %6345 = vmatprep.subr.bf16.mxu0 0
    %6346 = vmatpush1.bf16.msra.mxu0 %v6091
    %6347 = vmatprep.subr.bf16.mxu0 0
    %6348 = vmatpush1.bf16.msra.mxu0 %v6094
    %6349 = vmatprep.subr.bf16.mxu0 0
    %6350 = vmatpush1.bf16.msra.mxu0 %v6097
    %6351 = vmatprep.subr.bf16.mxu0 0
    %6352 = vmatpush1.bf16.msra.mxu0 %v6100
    %6353 = vmatprep.subr.bf16.mxu0 0
    %6354 = vmatpush1.bf16.msra.mxu0 %v6103
    %6355 = vmatprep.subr.bf16.mxu0 0
    %6356 = vmatpush1.bf16.msra.mxu0 %v6106
    %6357 = vmatprep.mubr.bf16.mxu0 %v5545
    %6358 = vmatmul.mubr.bf16.gmra.mrb[0].mxu0 %v5544
    %v6359 = vpop.f32.mrb[0].mxu0
    %v6360 = vadd.f32 %v6320, %v6359
    %v6361 = vpop.f32.mrb[0].mxu0
    %v6362 = vpop.f32.mrb[0].mxu0
    %v6363 = vpop.f32.mrb[0].mxu0
    %6364 = vdwg.mxu0
    %v6365 = vmax.f32 %v6279, 0.0
    %v6366 = vmax.f32 %v6281, 0.0
    %v6367 = vmax.f32 %v6360, 0.0
    %v6368 = vpack.c.bf16 %v6365, %v6365
    %v6369 = vpack.c.bf16 %v6366, %v6366
    %v6370 = vpack.c.bf16 %v6367, %v6367
    %v6371 = vld [vmem:[#allocation15] sm:$0xff]
    %v6372 = vld [vmem:[#allocation15 + $0x8] sm:$0xff]
    %v6373 = vld [vmem:[#allocation15 + $0x10] sm:$0xff]
    %v6374 = vld [vmem:[#allocation15 + $0x18] sm:$0xff]
    %v6375 = vld [vmem:[#allocation15 + $0x20] sm:$0xff]
    %v6376 = vld [vmem:[#allocation15 + $0x28] sm:$0xff]
    %v6377 = vld [vmem:[#allocation15 + $0x30] sm:$0xff]
    %v6378 = vld [vmem:[#allocation15 + $0x38] sm:$0xff]
    %v6379 = vld [vmem:[#allocation15 + $0x40] sm:$0xff]
    %v6380 = vld [vmem:[#allocation15 + $0x48] sm:$0xff]
    %v6381 = vld [vmem:[#allocation15 + $0x50] sm:$0xff]
    %v6382 = vld [vmem:[#allocation15 + $0x58] sm:$0xff]
    %v6383 = vld [vmem:[#allocation15 + $0x60] sm:$0xff]
    %v6384 = vld [vmem:[#allocation15 + $0x68] sm:$0xff]
    %v6385 = vld [vmem:[#allocation15 + $0x70] sm:$0xff]
    %v6386 = vld [vmem:[#allocation15 + $0x78] sm:$0xff]
    %v6387 = vld [vmem:[#allocation15 + $0x80] sm:$0xff]
    %v6388 = vld [vmem:[#allocation15 + $0x88] sm:$0xff]
    %v6389 = vld [vmem:[#allocation15 + $0x90] sm:$0xff]
    %v6390 = vld [vmem:[#allocation15 + $0x98] sm:$0xff]
    %v6391 = vld [vmem:[#allocation15 + $0xa0] sm:$0xff]
    %v6392 = vld [vmem:[#allocation15 + $0xa8] sm:$0xff]
    %v6393 = vld [vmem:[#allocation15 + $0xb0] sm:$0xff]
    %v6394 = vld [vmem:[#allocation15 + $0xb8] sm:$0xff]
    %v6395 = vld [vmem:[#allocation15 + $0xc0] sm:$0xff]
    %v6396 = vld [vmem:[#allocation15 + $0xc8] sm:$0xff]
    %v6397 = vld [vmem:[#allocation15 + $0xd0] sm:$0xff]
    %v6398 = vld [vmem:[#allocation15 + $0xd8] sm:$0xff]
    %v6399 = vld [vmem:[#allocation15 + $0xe0] sm:$0xff]
    %v6400 = vld [vmem:[#allocation15 + $0xe8] sm:$0xff]
    %v6401 = vld [vmem:[#allocation15 + $0xf0] sm:$0xff]
    %v6402 = vld [vmem:[#allocation15 + $0xf8] sm:$0xff]
    %v6403 = vld [vmem:[#allocation15 + $0x100] sm:$0xff]
    %v6404 = vld [vmem:[#allocation15 + $0x108] sm:$0xff]
    %v6405 = vld [vmem:[#allocation15 + $0x110] sm:$0xff]
    %v6406 = vld [vmem:[#allocation15 + $0x118] sm:$0xff]
    %v6407 = vld [vmem:[#allocation15 + $0x120] sm:$0xff]
    %v6408 = vld [vmem:[#allocation15 + $0x128] sm:$0xff]
    %v6409 = vld [vmem:[#allocation15 + $0x130] sm:$0xff]
    %v6410 = vld [vmem:[#allocation15 + $0x138] sm:$0xff]
    %v6411 = vld [vmem:[#allocation15 + $0x140] sm:$0xff]
    %v6412 = vld [vmem:[#allocation15 + $0x148] sm:$0xff]
    %v6413 = vld [vmem:[#allocation15 + $0x150] sm:$0xff]
    %v6414 = vld [vmem:[#allocation15 + $0x158] sm:$0xff]
    %v6415 = vld [vmem:[#allocation15 + $0x160] sm:$0xff]
    %v6416 = vld [vmem:[#allocation15 + $0x168] sm:$0xff]
    %v6417 = vld [vmem:[#allocation15 + $0x170] sm:$0xff]
    %v6418 = vld [vmem:[#allocation15 + $0x178] sm:$0xff]
    %v6419 = vld [vmem:[#allocation16] sm:$0x3]
    %v6421 = vlaneseq
    %v6422 = vshrl.u32 %v6421, 7
    %v6423 = vsub.s32 0, %v6422
    %v6424 = vrot.slane %v6419, %v6423
    %v6425 = vlaneseq
    %v6426 = vshrl.u32 %v6425, 7
    %v6427 = vsub.s32 1, %v6426
    %v6428 = vrot.slane %v6419, %v6427
    %v6479 = vunpack.c.l.b16 %v6371
    %v6480 = vunpack.c.h.b16 %v6371
    %v6481 = vunpack.c.l.b16 %v6372
    %v6482 = vunpack.c.h.b16 %v6372
    %v6483 = vunpack.c.l.b16 %v6373
    %v6484 = vunpack.c.h.b16 %v6373
    %v6485 = vunpack.c.l.b16 %v6374
    %v6486 = vunpack.c.h.b16 %v6374
    %v6487 = vunpack.c.l.b16 %v6375
    %v6488 = vunpack.c.h.b16 %v6375
    %v6489 = vunpack.c.l.b16 %v6376
    %v6490 = vunpack.c.h.b16 %v6376
    %v6491 = vunpack.c.l.b16 %v6377
    %v6492 = vunpack.c.h.b16 %v6377
    %v6493 = vunpack.c.l.b16 %v6378
    %v6494 = vunpack.c.h.b16 %v6378
    %v6495 = vunpack.c.l.b16 %v6379
    %v6496 = vunpack.c.h.b16 %v6379
    %v6497 = vunpack.c.l.b16 %v6380
    %v6498 = vunpack.c.h.b16 %v6380
    %v6499 = vunpack.c.l.b16 %v6381
    %v6500 = vunpack.c.h.b16 %v6381
    %v6501 = vunpack.c.l.b16 %v6382
    %v6502 = vunpack.c.h.b16 %v6382
    %v6503 = vunpack.c.l.b16 %v6383
    %v6504 = vunpack.c.h.b16 %v6383
    %v6505 = vunpack.c.l.b16 %v6384
    %v6506 = vunpack.c.h.b16 %v6384
    %v6507 = vunpack.c.l.b16 %v6385
    %v6508 = vunpack.c.h.b16 %v6385
    %v6509 = vunpack.c.l.b16 %v6386
    %v6510 = vunpack.c.h.b16 %v6386
    %v6511 = vunpack.c.l.b16 %v6387
    %v6512 = vunpack.c.h.b16 %v6387
    %v6513 = vunpack.c.l.b16 %v6388
    %v6514 = vunpack.c.h.b16 %v6388
    %v6515 = vunpack.c.l.b16 %v6389
    %v6516 = vunpack.c.h.b16 %v6389
    %v6517 = vunpack.c.l.b16 %v6390
    %v6518 = vunpack.c.h.b16 %v6390
    %v6519 = vunpack.c.l.b16 %v6391
    %v6520 = vunpack.c.h.b16 %v6391
    %v6521 = vunpack.c.l.b16 %v6392
    %v6522 = vunpack.c.h.b16 %v6392
    %v6523 = vunpack.c.l.b16 %v6393
    %v6524 = vunpack.c.h.b16 %v6393
    %v6525 = vunpack.c.l.b16 %v6394
    %v6526 = vunpack.c.h.b16 %v6394
    %v6527 = vunpack.c.l.b16 %v6395
    %v6528 = vunpack.c.h.b16 %v6395
    %v6529 = vunpack.c.l.b16 %v6396
    %v6530 = vunpack.c.h.b16 %v6396
    %v6531 = vunpack.c.l.b16 %v6397
    %v6532 = vunpack.c.h.b16 %v6397
    %v6533 = vunpack.c.l.b16 %v6398
    %v6534 = vunpack.c.h.b16 %v6398
    %v6535 = vunpack.c.l.b16 %v6399
    %v6536 = vunpack.c.h.b16 %v6399
    %v6537 = vunpack.c.l.b16 %v6400
    %v6538 = vunpack.c.h.b16 %v6400
    %v6539 = vunpack.c.l.b16 %v6401
    %v6540 = vunpack.c.h.b16 %v6401
    %v6541 = vunpack.c.l.b16 %v6402
    %v6542 = vunpack.c.h.b16 %v6402
    %v6543 = vunpack.c.l.b16 %v6403
    %v6544 = vunpack.c.h.b16 %v6403
    %v6545 = vunpack.c.l.b16 %v6404
    %v6546 = vunpack.c.h.b16 %v6404
    %v6547 = vunpack.c.l.b16 %v6405
    %v6548 = vunpack.c.h.b16 %v6405
    %v6549 = vunpack.c.l.b16 %v6406
    %v6550 = vunpack.c.h.b16 %v6406
    %v6551 = vunpack.c.l.b16 %v6407
    %v6552 = vunpack.c.h.b16 %v6407
    %v6553 = vunpack.c.l.b16 %v6408
    %v6554 = vunpack.c.h.b16 %v6408
    %v6555 = vunpack.c.l.b16 %v6409
    %v6556 = vunpack.c.h.b16 %v6409
    %v6557 = vunpack.c.l.b16 %v6410
    %v6558 = vunpack.c.h.b16 %v6410
    %v6559 = vunpack.c.l.b16 %v6411
    %v6560 = vunpack.c.h.b16 %v6411
    %v6561 = vunpack.c.l.b16 %v6412
    %v6562 = vunpack.c.h.b16 %v6412
    %v6563 = vunpack.c.l.b16 %v6413
    %v6564 = vunpack.c.h.b16 %v6413
    %v6565 = vunpack.c.l.b16 %v6414
    %v6566 = vunpack.c.h.b16 %v6414
    %v6567 = vunpack.c.l.b16 %v6415
    %v6568 = vunpack.c.h.b16 %v6415
    %v6569 = vunpack.c.l.b16 %v6416
    %v6570 = vunpack.c.h.b16 %v6416
    %v6571 = vunpack.c.l.b16 %v6417
    %v6572 = vunpack.c.h.b16 %v6417
    %v6573 = vunpack.c.l.b16 %v6418
    %v6574 = vunpack.c.h.b16 %v6418
    %v6575 = vpack.c.b16 %v6481, %v6479
    %v6576 = vpack.c.b16 %v6482, %v6480
    %v6577 = vpack.c.b16 %v6485, %v6483
    %v6578 = vpack.c.b16 %v6486, %v6484
    %v6579 = vpack.c.b16 %v6489, %v6487
    %v6580 = vpack.c.b16 %v6490, %v6488
    %v6581 = vpack.c.b16 %v6493, %v6491
    %v6582 = vpack.c.b16 %v6494, %v6492
    %v6583 = vpack.c.b16 %v6497, %v6495
    %v6584 = vpack.c.b16 %v6498, %v6496
    %v6585 = vpack.c.b16 %v6501, %v6499
    %v6586 = vpack.c.b16 %v6502, %v6500
    %v6587 = vpack.c.b16 %v6505, %v6503
    %v6588 = vpack.c.b16 %v6506, %v6504
    %v6589 = vpack.c.b16 %v6509, %v6507
    %v6590 = vpack.c.b16 %v6510, %v6508
    %v6591 = vpack.c.b16 %v6513, %v6511
    %v6592 = vpack.c.b16 %v6514, %v6512
    %v6593 = vpack.c.b16 %v6517, %v6515
    %v6594 = vpack.c.b16 %v6518, %v6516
    %v6595 = vpack.c.b16 %v6521, %v6519
    %v6596 = vpack.c.b16 %v6522, %v6520
    %v6597 = vpack.c.b16 %v6525, %v6523
    %v6598 = vpack.c.b16 %v6526, %v6524
    %v6599 = vpack.c.b16 %v6529, %v6527
    %v6600 = vpack.c.b16 %v6530, %v6528
    %v6601 = vpack.c.b16 %v6533, %v6531
    %v6602 = vpack.c.b16 %v6534, %v6532
    %v6603 = vpack.c.b16 %v6537, %v6535
    %v6604 = vpack.c.b16 %v6538, %v6536
    %v6605 = vpack.c.b16 %v6541, %v6539
    %v6606 = vpack.c.b16 %v6542, %v6540
    %v6607 = vpack.c.b16 %v6545, %v6543
    %v6608 = vpack.c.b16 %v6546, %v6544
    %v6609 = vpack.c.b16 %v6549, %v6547
    %v6610 = vpack.c.b16 %v6550, %v6548
    %v6611 = vpack.c.b16 %v6553, %v6551
    %v6612 = vpack.c.b16 %v6554, %v6552
    %v6613 = vpack.c.b16 %v6557, %v6555
    %v6614 = vpack.c.b16 %v6558, %v6556
    %v6615 = vpack.c.b16 %v6561, %v6559
    %v6616 = vpack.c.b16 %v6562, %v6560
    %v6617 = vpack.c.b16 %v6565, %v6563
    %v6618 = vpack.c.b16 %v6566, %v6564
    %v6619 = vpack.c.b16 %v6569, %v6567
    %v6620 = vpack.c.b16 %v6570, %v6568
    %v6621 = vpack.c.b16 %v6573, %v6571
    %v6622 = vpack.c.b16 %v6574, %v6572
    %6671 = vmatprep.subr.bf16.mxu0 %v6576
    %6672 = vmatpush1.bf16.msra.mxu0 %v6575
    %6673 = vmatprep.subr.bf16.mxu0 %v6578
    %6674 = vmatpush1.bf16.msra.mxu0 %v6577
    %6675 = vmatprep.subr.bf16.mxu0 %v6580
    %6676 = vmatpush1.bf16.msra.mxu0 %v6579
    %6677 = vmatprep.subr.bf16.mxu0 %v6582
    %6678 = vmatpush1.bf16.msra.mxu0 %v6581
    %6679 = vmatprep.subr.bf16.mxu0 %v6584
    %6680 = vmatpush1.bf16.msra.mxu0 %v6583
    %6681 = vmatprep.subr.bf16.mxu0 %v6586
    %6682 = vmatpush1.bf16.msra.mxu0 %v6585
    %6683 = vmatprep.subr.bf16.mxu0 %v6588
    %6684 = vmatpush1.bf16.msra.mxu0 %v6587
    %6685 = vmatprep.subr.bf16.mxu0 %v6590
    %6686 = vmatpush1.bf16.msra.mxu0 %v6589
    %6687 = vmatprep.subr.bf16.mxu0 %v6592
    %6688 = vmatpush1.bf16.msra.mxu0 %v6591
    %6689 = vmatprep.subr.bf16.mxu0 %v6594
    %6690 = vmatpush1.bf16.msra.mxu0 %v6593
    %6691 = vmatprep.subr.bf16.mxu0 %v6596
    %6692 = vmatpush1.bf16.msra.mxu0 %v6595
    %6693 = vmatprep.subr.bf16.mxu0 %v6598
    %6694 = vmatpush1.bf16.msra.mxu0 %v6597
    %6695 = vmatprep.subr.bf16.mxu0 %v6600
    %6696 = vmatpush1.bf16.msra.mxu0 %v6599
    %6697 = vmatprep.subr.bf16.mxu0 %v6602
    %6698 = vmatpush1.bf16.msra.mxu0 %v6601
    %6699 = vmatprep.subr.bf16.mxu0 %v6604
    %6700 = vmatpush1.bf16.msra.mxu0 %v6603
    %6701 = vmatprep.subr.bf16.mxu0 %v6606
    %6702 = vmatpush1.bf16.msra.mxu0 %v6605
    %6703 = vmatprep.mubr.bf16.mxu0 %v6369
    %6704 = vmatmul.mubr.bf16.gmra.mrb[0].mxu0 %v6368
    %v6705 = vpop.f32.mrb[0].mxu0
    %v6706 = vadd.f32 %v6424, %v6705
    %v6707 = vpop.f32.mrb[0].mxu0
    %v6708 = vadd.f32 %v6428, %v6707
    %v6709 = vpop.f32.mrb[0].mxu0
    %v6710 = vpop.f32.mrb[0].mxu0
    %6711 = vdwg.mxu0
    %6712 = vmatprep.subr.bf16.mxu0 %v6608
    %6713 = vmatpush1.bf16.msra.mxu0 %v6607
    %6714 = vmatprep.subr.bf16.mxu0 %v6610
    %6715 = vmatpush1.bf16.msra.mxu0 %v6609
    %6716 = vmatprep.subr.bf16.mxu0 %v6612
    %6717 = vmatpush1.bf16.msra.mxu0 %v6611
    %6718 = vmatprep.subr.bf16.mxu0 %v6614
    %6719 = vmatpush1.bf16.msra.mxu0 %v6613
    %6720 = vmatprep.subr.bf16.mxu0 %v6616
    %6721 = vmatpush1.bf16.msra.mxu0 %v6615
    %6722 = vmatprep.subr.bf16.mxu0 %v6618
    %6723 = vmatpush1.bf16.msra.mxu0 %v6617
    %6724 = vmatprep.subr.bf16.mxu0 %v6620
    %6725 = vmatpush1.bf16.msra.mxu0 %v6619
    %6726 = vmatprep.subr.bf16.mxu0 %v6622
    %6727 = vmatpush1.bf16.msra.mxu0 %v6621
    %6728 = vmatprep.subr.bf16.mxu0 0
    %6729 = vmatpush1.bf16.msra.mxu0 0
    %6730 = vmatprep.subr.bf16.mxu0 0
    %6731 = vmatpush1.bf16.msra.mxu0 0
    %6732 = vmatprep.subr.bf16.mxu0 0
    %6733 = vmatpush1.bf16.msra.mxu0 0
    %6734 = vmatprep.subr.bf16.mxu0 0
    %6735 = vmatpush1.bf16.msra.mxu0 0
    %6736 = vmatprep.subr.bf16.mxu0 0
    %6737 = vmatpush1.bf16.msra.mxu0 0
    %6738 = vmatprep.subr.bf16.mxu0 0
    %6739 = vmatpush1.bf16.msra.mxu0 0
    %6740 = vmatprep.subr.bf16.mxu0 0
    %6741 = vmatpush1.bf16.msra.mxu0 0
    %6742 = vmatprep.subr.bf16.mxu0 0
    %6743 = vmatpush1.bf16.msra.mxu0 0
    %6744 = vmatprep.mubr.bf16.mxu0 0
    %6745 = vmatmul.mubr.bf16.gmra.mrb[0].mxu0 %v6370
    %v6746 = vpop.f32.mrb[0].mxu0
    %v6747 = vadd.f32 %v6706, %v6746
    %v6748 = vpop.f32.mrb[0].mxu0
    %v6749 = vadd.f32 %v6708, %v6748
    %v6750 = vpop.f32.mrb[0].mxu0
    %v6751 = vpop.f32.mrb[0].mxu0
    %6752 = vdwg.mxu0
    %6753 = vst [vmem:[%s11] sm:$0xff] %v6747
    %6754 = vst [vmem:[%s11 + $0x8] sm:$0xff] %v6749
    // Predicated region
    $region86: #{cnn_forward.1} parent=1 // pred_check
      _
    $region87: #{cnn_forward.1} parent=1 // pred_check_branch
      %6756 = sbr.rel (0) target = $region89
    $region88: #{cnn_forward.1} parent=1 // pred_region
      _
    $region89: #{cnn_forward.1} parent=1 // pred_fallthru
      _
    // Predicated region
    $region90: #{cnn_forward.1} parent=1 // pred_check
      _
    $region91: #{cnn_forward.1} parent=1 // pred_check_branch
      %6758 = sbr.rel (0) target = $region93
    $region92: #{cnn_forward.1} parent=1 // pred_region
      _
    $region93: #{cnn_forward.1} parent=1 // pred_fallthru
      _
    %6759 = vsyncpa [#allocation3], 1
    %6760 = vsyncpa [#allocation5], 1
    %6761 = vsyncpa [#allocation8], 1
    %6762 = vsyncpa [#allocation11], 1
    %6763 = vsyncpa [#allocation14], 1
    %6764 = vsyncpa [#allocation17], 1

</llo_original>
